<compile_context>
chip_gen: v7x
topology: tpu7x:2x2x1
jax: 0.10.0
libtpu: 0.0.40
codegen_flags: <defaults>
</compile_context>

<pallas_src>
import math
import functools

import jax
import jax.numpy as jnp
from jax.experimental import pallas as pl
from jax.experimental.pallas import tpu as pltpu

# Whole-array-in-VMEM spec (shapes here are tiny, so single-block kernels are fine).
_VMEM = pl.BlockSpec(memory_space=pltpu.MemorySpace.VMEM)
_CPARAMS = pltpu.CompilerParams(vmem_limit_bytes=32 * 1024 * 1024)

_LN_EPS = 1e-5
_NEG_INF = -1e9  # stand-in for float('-inf') in additive attention masks


# -------------------------- in-kernel helper math --------------------------- #

def _layer_norm(z, g, b):
    # biased variance, eps=1e-5 — matches nn.LayerNorm defaults used by nn.Transformer
    mean = jnp.mean(z, axis=-1, keepdims=True)
    var = jnp.mean((z - mean) ** 2, axis=-1, keepdims=True)
    return (z - mean) * jax.lax.rsqrt(var + _LN_EPS) * g + b


def _mm(a, w, bias=None):
    # bf16 MXU matmul with f32 accumulation (weights are stored bf16).
    out = jnp.dot(a.astype(w.dtype), w, preferred_element_type=jnp.float32)
    if bias is not None:
        out = out + bias
    return out


def _heads_softmax_attention(q, k, v, mask, n_head, scale):
    # q: (Sq, E), k/v: (Sk, E) f32; mask: (Sq, Sk) additive f32.
    # Per-head softmax attention; heads concatenated back into a lane-dense (Sq, E).
    E = q.shape[-1]
    dh = E // n_head
    ctx = []
    for h in range(n_head):
        sl = slice(h * dh, (h + 1) * dh)
        s = jnp.einsum('qd,kd->qk',
                       q[:, sl].astype(jnp.bfloat16),
                       k[:, sl].astype(jnp.bfloat16),
                       preferred_element_type=jnp.float32) * scale + mask
        s = s - jnp.max(s, axis=-1, keepdims=True)
        p = jnp.exp(s)
        p = p * pl.reciprocal(jnp.sum(p, axis=-1, keepdims=True), approx=True)
        ctx.append(jnp.einsum('qk,kd->qd',
                              p.astype(jnp.bfloat16),
                              v[:, sl].astype(jnp.bfloat16),
                              preferred_element_type=jnp.float32))
    return jnp.concatenate(ctx, axis=-1)          # (Sq, E) lane-dense


# ----------------------------- Pallas kernels ------------------------------ #

def _self_mha_ln_kernel(x_ref, m_ref, wqkv_ref, bqkv_ref, wo_ref, bo_ref,
                        g_ref, b_ref, o_ref, *, n_head, scale):
    """Fused: QKV (single E x 3E matmul) + MHA + out-proj + residual + LayerNorm."""
    B, Sq, E = x_ref.shape
    wqkv = wqkv_ref[...]
    bqkv = bqkv_ref[...]
    wo = wo_ref[...]
    bo = bo_ref[...]
    g = g_ref[...]
    beta = b_ref[...]
    for bi in range(B):                           # static unroll (toy B)
        x = x_ref[bi]                             # (Sq, E) f32
        qkv = _mm(x, wqkv, bqkv)                  # (Sq, 3E) one fused matmul
        q, k, v = qkv[:, :E], qkv[:, E:2 * E], qkv[:, 2 * E:]
        ctx = _heads_softmax_attention(q, k, v, m_ref[bi], n_head, scale)
        z = x + _mm(ctx, wo, bo)                  # out-proj + residual
        o_ref[bi] = _layer_norm(z, g, beta).astype(o_ref.dtype)


def _cross_mha_ln_kernel(x_ref, kv_ref, m_ref, wq_ref, bq_ref, wkv_ref, bkv_ref,
                         wo_ref, bo_ref, g_ref, b_ref, o_ref, *, n_head, scale):
    """Fused: Q proj + fused KV proj + MHA + out-proj + residual + LayerNorm."""
    B, Sq, E = x_ref.shape
    wq = wq_ref[...]
    bq = bq_ref[...]
    wkv = wkv_ref[...]
    bkv = bkv_ref[...]
    wo = wo_ref[...]
    bo = bo_ref[...]
    g = g_ref[...]
    beta = b_ref[...]
    for bi in range(B):
        x = x_ref[bi]                             # (Sq, E)
        mem = kv_ref[bi]                          # (Sk, E)
        q = _mm(x, wq, bq)
        kvp = _mm(mem, wkv, bkv)                  # (Sk, 2E) fused K/V matmul
        k, v = kvp[:, :E], kvp[:, E:]
        ctx = _heads_softmax_attention(q, k, v, m_ref[bi], n_head, scale)
        z = x + _mm(ctx, wo, bo)
        o_ref[bi] = _layer_norm(z, g, beta).astype(o_ref.dtype)


def _ffn_ln_kernel(x_ref, w1_ref, b1_ref, w2_ref, b2_ref, g_ref, b_ref, o_ref):
    """Fused: linear1 -> ReLU -> linear2 -> residual add -> LayerNorm."""
    x = x_ref[...]                                # (M, E) f32
    h = jnp.maximum(_mm(x, w1_ref[...], b1_ref[...]), 0.0)
    z = x + _mm(h, w2_ref[...], b2_ref[...])
    o_ref[...] = _layer_norm(z, g_ref[...], b_ref[...]).astype(o_ref.dtype)


def _ln_kernel(x_ref, g_ref, b_ref, o_ref):
    o_ref[...] = _layer_norm(x_ref[...], g_ref[...], b_ref[...]).astype(o_ref.dtype)


def _linear_kernel(x_ref, w_ref, b_ref, o_ref):
    o_ref[...] = _mm(x_ref[...], w_ref[...], b_ref[...]).astype(o_ref.dtype)


def _embed_pos_kernel(e_ref, pos_ref, o_ref, *, scale):
    # TokenEmbedding (* sqrt(E)) fused with PositionalEncoding add
    o_ref[...] = (e_ref[...] * scale + pos_ref[...]).astype(o_ref.dtype)


# ----------------------------- Pallas wrappers ----------------------------- #

def pallas_self_mha_ln(x, mask, ap, g, b, n_head):
    B, Sq, E = x.shape
    scale = 1.0 / math.sqrt(E // n_head)
    flops = int(2 * B * Sq * E * 3 * E + 4 * B * Sq * Sq * E + 2 * B * Sq * E * E)
    bytes_acc = int(2 * x.nbytes + mask.nbytes + ap["w_qkv"].nbytes + ap["w_o"].nbytes)
    return pl.pallas_call(
        functools.partial(_self_mha_ln_kernel, n_head=n_head, scale=scale),
        out_shape=jax.ShapeDtypeStruct((B, Sq, E), jnp.float32),
        in_specs=[_VMEM] * 8,
        out_specs=_VMEM,
        compiler_params=_CPARAMS,
        cost_estimate=pl.CostEstimate(flops=flops,
                                      transcendentals=int(B * n_head * Sq * Sq),
                                      bytes_accessed=bytes_acc),
    )(x, mask, ap["w_qkv"], ap["b_qkv"], ap["w_o"], ap["b_o"], g, b)


def pallas_cross_mha_ln(x, memory, mask, ap, g, b, n_head):
    B, Sq, E = x.shape
    Sk = memory.shape[1]
    scale = 1.0 / math.sqrt(E // n_head)
    flops = int(2 * B * Sq * E * E + 2 * B * Sk * E * 2 * E
                + 4 * B * Sq * Sk * E + 2 * B * Sq * E * E)
    bytes_acc = int(2 * x.nbytes + memory.nbytes + mask.nbytes
                    + ap["w_q"].nbytes + ap["w_kv"].nbytes + ap["w_o"].nbytes)
    return pl.pallas_call(
        functools.partial(_cross_mha_ln_kernel, n_head=n_head, scale=scale),
        out_shape=jax.ShapeDtypeStruct((B, Sq, E), jnp.float32),
        in_specs=[_VMEM] * 11,
        out_specs=_VMEM,
        compiler_params=_CPARAMS,
        cost_estimate=pl.CostEstimate(flops=flops,
                                      transcendentals=int(B * n_head * Sq * Sk),
                                      bytes_accessed=bytes_acc),
    )(x, memory, mask, ap["w_q"], ap["b_q"], ap["w_kv"], ap["b_kv"],
      ap["w_o"], ap["b_o"], g, b)


def pallas_ffn_ln(x, w1, b1, w2, b2, g, b):
    B, S, E = x.shape
    M = B * S
    FF = w1.shape[1]
    flops = int(4 * M * E * FF)
    bytes_acc = int(2 * x.nbytes + w1.nbytes + w2.nbytes + b1.nbytes + b2.nbytes)
    out = pl.pallas_call(
        _ffn_ln_kernel,
        out_shape=jax.ShapeDtypeStruct((M, E), jnp.float32),
        in_specs=[_VMEM] * 7,
        out_specs=_VMEM,
        compiler_params=_CPARAMS,
        cost_estimate=pl.CostEstimate(flops=flops, transcendentals=0,
                                      bytes_accessed=bytes_acc),
    )(x.reshape(M, E), w1, b1, w2, b2, g, b)
    return out.reshape(B, S, E)


def pallas_ln(x, g, b):
    B, S, E = x.shape
    out = pl.pallas_call(
        _ln_kernel,
        out_shape=jax.ShapeDtypeStruct((B * S, E), jnp.float32),
        in_specs=[_VMEM] * 3,
        out_specs=_VMEM,
        compiler_params=_CPARAMS,
    )(x.reshape(B * S, E), g, b)
    return out.reshape(B, S, E)


def pallas_linear(x2d, w_kn, b_1n):
    M = x2d.shape[0]
    K, N = w_kn.shape
    flops = int(2 * M * K * N)
    bytes_acc = int(x2d.nbytes + w_kn.nbytes + b_1n.nbytes + M * N * 4)
    return pl.pallas_call(
        _linear_kernel,
        out_shape=jax.ShapeDtypeStruct((M, N), jnp.float32),
        in_specs=[_VMEM] * 3,
        out_specs=_VMEM,
        compiler_params=_CPARAMS,
        cost_estimate=pl.CostEstimate(flops=flops, transcendentals=0,
                                      bytes_accessed=bytes_acc),
    )(x2d, w_kn, b_1n)


def pallas_embed_pos(tok, pos, scale):
    B, S, E = tok.shape
    return pl.pallas_call(
        functools.partial(_embed_pos_kernel, scale=scale),
        out_shape=jax.ShapeDtypeStruct((B, S, E), jnp.float32),
        in_specs=[_VMEM, _VMEM],
        out_specs=_VMEM,
        compiler_params=_CPARAMS,
    )(tok, pos.reshape(1, S, E))


# ------------------------------ model pieces ------------------------------- #

def build_attn_mask(attn_mask, key_padding_mask, B, Sq, Sk):
    """Combine a float additive attn_mask (Sq,Sk) and a bool key_padding_mask (B,Sk)."""
    m = jnp.zeros((B, Sq, Sk), jnp.float32)
    if attn_mask is not None:
        m = m + attn_mask.astype(jnp.float32)[None, :, :]
    if key_padding_mask is not None:
        m = m + jnp.where(key_padding_mask[:, None, :], _NEG_INF, 0.0).astype(jnp.float32)
    return m


def make_forward(n_head):
    def forward(params, inputs, outputs, input_mask, output_mask,
                input_padding_mask, output_padding_mask, memory_key_pad_mask):
        E = params["inp_emb"].shape[1]
        emb_scale = math.sqrt(E)
        B, S_src = inputs.shape
        S_tgt = outputs.shape[1]

        # TokenEmbedding (gather in JAX) + *sqrt(E) + PositionalEncoding (Pallas)
        inp_tok = jnp.take(params["inp_emb"], inputs, axis=0)
        out_tok = jnp.take(params["out_emb"], outputs, axis=0)
        src = pallas_embed_pos(inp_tok, params["pos"][:S_src], emb_scale)
        tgt = pallas_embed_pos(out_tok, params["pos"][:S_tgt], emb_scale)

        src_mask = build_attn_mask(input_mask, input_padding_mask, B, S_src, S_src)
        tgt_mask = build_attn_mask(output_mask, output_padding_mask, B, S_tgt, S_tgt)
        mem_mask = build_attn_mask(None, memory_key_pad_mask, B, S_tgt, S_src)

        # ----- encoder (post-norm layers + final LayerNorm, like nn.Transformer) -----
        x = src
        for lp in params["enc_layers"]:
            x = pallas_self_mha_ln(x, src_mask, lp["self_attn"],
                                   lp["ln1_g"], lp["ln1_b"], n_head)
            x = pallas_ffn_ln(x, lp["lin1_w"], lp["lin1_b"], lp["lin2_w"], lp["lin2_b"],
                              lp["ln2_g"], lp["ln2_b"])
        memory = pallas_ln(x, params["enc_norm_g"], params["enc_norm_b"])

        # ----- decoder -----
        y = tgt
        for lp in params["dec_layers"]:
            y = pallas_self_mha_ln(y, tgt_mask, lp["self_attn"],
                                   lp["ln1_g"], lp["ln1_b"], n_head)
            y = pallas_cross_mha_ln(y, memory, mem_mask, lp["cross_attn"],
                                    lp["ln2_g"], lp["ln2_b"], n_head)
            y = pallas_ffn_ln(y, lp["lin1_w"], lp["lin1_b"], lp["lin2_w"], lp["lin2_b"],
                              lp["ln3_g"], lp["ln3_b"])
        y = pallas_ln(y, params["dec_norm_g"], params["dec_norm_b"])

        # ----- generator (pre-transposed bf16 weight, f32 accumulation) -----
        logits = pallas_linear(y.reshape(B * S_tgt, E), params["gen_w"], params["gen_b"])
        return logits.reshape(B, S_tgt, -1)

    return forward


# ------------------------------ parameter init ----------------------------- #

def make_pos_embedding(max_length, emb_size):
    pos = jnp.arange(max_length, dtype=jnp.float32).reshape(max_length, 1)
    div = jnp.exp(-jnp.arange(0, emb_size, 2, dtype=jnp.float32)
                  * math.log(10000.0) / emb_size)
    pos_val = pos * div            # == exp(log(pos) - arange*log(1e4)/E), incl. pos=0
    pe = jnp.zeros((max_length, emb_size), jnp.float32)
    pe = pe.at[:, 0::2].set(jnp.sin(pos_val))
    pe = pe.at[:, 1::2].set(jnp.cos(pos_val))
    return pe


def init_params(key, num_enc, num_dec, E, in_vocab, out_vocab, FF, max_len=1000):
    """All matmul weights are stored pre-transposed (K, N) and in bf16."""
    keys = iter(jax.random.split(key, 512))

    def wbf(shape, s=0.02):          # bf16 matmul weight, already (K, N)
        return (jax.random.normal(next(keys), shape, jnp.float32) * s).astype(jnp.bfloat16)

    def wf32(shape, s=0.02):         # f32 (biases / embeddings)
        return jax.random.normal(next(keys), shape, jnp.float32) * s

    def ln_pair():
        return jnp.ones((1, E), jnp.float32), jnp.zeros((1, E), jnp.float32)

    def self_attn():
        return dict(w_qkv=wbf((E, 3 * E)), b_qkv=wf32((1, 3 * E)),
                    w_o=wbf((E, E)), b_o=wf32((1, E)))

    def cross_attn():
        return dict(w_q=wbf((E, E)), b_q=wf32((1, E)),
                    w_kv=wbf((E, 2 * E)), b_kv=wf32((1, 2 * E)),
                    w_o=wbf((E, E)), b_o=wf32((1, E)))

    def enc_layer():
        g1, b1 = ln_pair()
        g2, b2 = ln_pair()
        return dict(self_attn=self_attn(),
                    lin1_w=wbf((E, FF)), lin1_b=wf32((1, FF)),
                    lin2_w=wbf((FF, E)), lin2_b=wf32((1, E)),
                    ln1_g=g1, ln1_b=b1, ln2_g=g2, ln2_b=b2)

    def dec_layer():
        d = enc_layer()
        d["cross_attn"] = cross_attn()
        g3, b3 = ln_pair()
        d["ln3_g"], d["ln3_b"] = g3, b3
        return d

    enc_g, enc_b = ln_pair()
    dec_g, dec_b = ln_pair()
    return dict(
        inp_emb=wf32((in_vocab, E), 1.0),
        out_emb=wf32((out_vocab, E), 1.0),
        pos=make_pos_embedding(max_len, E),
        enc_layers=[enc_layer() for _ in range(num_enc)],
        dec_layers=[dec_layer() for _ in range(num_dec)],
        enc_norm_g=enc_g, enc_norm_b=enc_b,
        dec_norm_g=dec_g, dec_norm_b=dec_b,
        gen_w=wbf((E, out_vocab)), gen_b=wf32((1, out_vocab)),
    )


# ---------------------------------- main ----------------------------------- #

if __name__ == "__main__":
    B, S_SRC, S_TGT = 2, 8, 8
    E, H, FF = 32, 4, 64
    IN_VOCAB, OUT_VOCAB = 50, 60
    N_ENC, N_DEC = 2, 2

    key = jax.random.PRNGKey(0)
    k_params, k_in, k_out = jax.random.split(key, 3)
    params = init_params(k_params, N_ENC, N_DEC, E, IN_VOCAB, OUT_VOCAB, FF)

    inputs = jax.random.randint(k_in, (B, S_SRC), 0, IN_VOCAB, dtype=jnp.int32)
    outputs = jax.random.randint(k_out, (B, S_TGT), 0, OUT_VOCAB, dtype=jnp.int32)

    input_mask = jnp.zeros((S_SRC, S_SRC), jnp.float32)                            # src_mask
    output_mask = jnp.triu(jnp.ones((S_TGT, S_TGT), jnp.float32), k=1) * _NEG_INF  # causal
    input_padding_mask = jnp.zeros((B, S_SRC), bool).at[0, -1].set(True)
    output_padding_mask = jnp.zeros((B, S_TGT), bool)
    memory_key_pad_mask = input_padding_mask

    fwd = jax.jit(make_forward(H))
    logits = fwd(params, inputs, outputs, input_mask, output_mask,
                 input_padding_mask, output_padding_mask, memory_key_pad_mask)
    jax.block_until_ready(logits)

    assert logits.shape == (B, S_TGT, OUT_VOCAB), logits.shape
    assert bool(jnp.all(jnp.isfinite(logits)))
    print("KERNEL_OK")
</pallas_src>

<mosaic_0001>
module attributes {stable_mosaic.version = 11 : i64} {
  func.func @_embed_pos_kernel(%arg0: memref<2x8x32xf32, #tpu.memory_space<vmem>>, %arg1: memref<1x8x32xf32, #tpu.memory_space<vmem>>, %arg2: memref<2x8x32xf32, #tpu.memory_space<vmem>>) attributes {dimension_semantics = [], scalar_prefetch = 0 : i64, scratch_operands = 0 : i64, tpu.core_type = #tpu.core_type<tc>} {
    %c0 = arith.constant 0 : index
    %c0_0 = arith.constant 0 : index
    %c0_1 = arith.constant 0 : index
    %0 = vector.load %arg0[%c0, %c0_0, %c0_1] : memref<2x8x32xf32, #tpu.memory_space<vmem>>, vector<2x8x32xf32>
    %cst = arith.constant 5.65685415 : f32
    %1 = vector.broadcast %cst : f32 to vector<2x8x32xf32>
    %2 = arith.mulf %0, %1 : vector<2x8x32xf32>
    %c0_2 = arith.constant 0 : index
    %c0_3 = arith.constant 0 : index
    %c0_4 = arith.constant 0 : index
    %3 = vector.load %arg1[%c0_2, %c0_3, %c0_4] : memref<1x8x32xf32, #tpu.memory_space<vmem>>, vector<1x8x32xf32>
    %4 = vector.broadcast %3 : vector<1x8x32xf32> to vector<2x8x32xf32>
    %5 = arith.addf %2, %4 : vector<2x8x32xf32>
    %c0_5 = arith.constant 0 : index
    %c0_6 = arith.constant 0 : index
    %c0_7 = arith.constant 0 : index
    %6 = vector.load %arg2[%c0_5, %c0_6, %c0_7] : memref<2x8x32xf32, #tpu.memory_space<vmem>>, vector<2x8x32xf32>
    tpu.vector_store %arg2[%c0_5, %c0_6, %c0_7], %5 {strides = array<i32>} : memref<2x8x32xf32, #tpu.memory_space<vmem>>, vector<2x8x32xf32>,
    return
  }
}

module attributes {stable_mosaic.version = 11 : i64} {
  func.func @_ffn_ln_kernel(%arg0: memref<16x32xf32, #tpu.memory_space<vmem>>, %arg1: memref<32x64xbf16, #tpu.memory_space<vmem>>, %arg2: memref<1x64xf32, #tpu.memory_space<vmem>>, %arg3: memref<64x32xbf16, #tpu.memory_space<vmem>>, %arg4: memref<1x32xf32, #tpu.memory_space<vmem>>, %arg5: memref<1x32xf32, #tpu.memory_space<vmem>>, %arg6: memref<1x32xf32, #tpu.memory_space<vmem>>, %arg7: memref<16x32xf32, #tpu.memory_space<vmem>>) attributes {dimension_semantics = [], scalar_prefetch = 0 : i64, scratch_operands = 0 : i64, tpu.core_type = #tpu.core_type<tc>} {
    %c0 = arith.constant 0 : index
    %c0_0 = arith.constant 0 : index
    %0 = vector.load %arg0[%c0, %c0_0] : memref<16x32xf32, #tpu.memory_space<vmem>>, vector<16x32xf32>
    %c0_1 = arith.constant 0 : index
    %c0_2 = arith.constant 0 : index
    %1 = vector.load %arg1[%c0_1, %c0_2] : memref<32x64xbf16, #tpu.memory_space<vmem>>, vector<32x64xbf16>
    %c0_3 = arith.constant 0 : index
    %c0_4 = arith.constant 0 : index
    %2 = vector.load %arg2[%c0_3, %c0_4] : memref<1x64xf32, #tpu.memory_space<vmem>>, vector<1x64xf32>
    %3 = arith.truncf %0 : vector<16x32xf32> to vector<16x32xbf16>
    %cst = arith.constant dense<0.000000e+00> : vector<16x64xf32>
    %4 = tpu.matmul %3, %1, %cst {dimension_numbers = #tpu.dot_dimension_numbers<[1], [0], [0], [1], [0, 0, 1, 1], [], []>} : vector<16x32xbf16>, vector<32x64xbf16>, vector<16x64xf32> -> vector<16x64xf32>
    %5 = vector.broadcast %2 : vector<1x64xf32> to vector<16x64xf32>
    %6 = arith.addf %4, %5 : vector<16x64xf32>
    %cst_5 = arith.constant 0.000000e+00 : f32
    %7 = vector.broadcast %cst_5 : f32 to vector<16x64xf32>
    %8 = arith.maximumf %6, %7 : vector<16x64xf32>
    %c0_6 = arith.constant 0 : index
    %c0_7 = arith.constant 0 : index
    %9 = vector.load %arg3[%c0_6, %c0_7] : memref<64x32xbf16, #tpu.memory_space<vmem>>, vector<64x32xbf16>
    %c0_8 = arith.constant 0 : index
    %c0_9 = arith.constant 0 : index
    %10 = vector.load %arg4[%c0_8, %c0_9] : memref<1x32xf32, #tpu.memory_space<vmem>>, vector<1x32xf32>
    %11 = arith.truncf %8 : vector<16x64xf32> to vector<16x64xbf16>
    %cst_10 = arith.constant dense<0.000000e+00> : vector<16x32xf32>
    %12 = tpu.matmul %11, %9, %cst_10 {dimension_numbers = #tpu.dot_dimension_numbers<[1], [0], [0], [1], [0, 0, 1, 1], [], []>} : vector<16x64xbf16>, vector<64x32xbf16>, vector<16x32xf32> -> vector<16x32xf32>
    %13 = vector.broadcast %10 : vector<1x32xf32> to vector<16x32xf32>
    %14 = arith.addf %12, %13 : vector<16x32xf32>
    %15 = arith.addf %0, %14 : vector<16x32xf32>
    %c0_11 = arith.constant 0 : index
    %c0_12 = arith.constant 0 : index
    %16 = vector.load %arg5[%c0_11, %c0_12] : memref<1x32xf32, #tpu.memory_space<vmem>>, vector<1x32xf32>
    %c0_13 = arith.constant 0 : index
    %c0_14 = arith.constant 0 : index
    %17 = vector.load %arg6[%c0_13, %c0_14] : memref<1x32xf32, #tpu.memory_space<vmem>>, vector<1x32xf32>
    %cst_15 = arith.constant dense<0.000000e+00> : vector<16xf32>
    %18 = vector.multi_reduction <add>, %15, %cst_15 [1] : vector<16x32xf32> to vector<16xf32>
    %19 = vector.shape_cast %18 : vector<16xf32> to vector<16x1xf32>
    %cst_16 = arith.constant 3.200000e+01 : f32
    %20 = vector.broadcast %cst_16 : f32 to vector<16x1xf32>
    %21 = arith.divf %19, %20 : vector<16x1xf32>
    %22 = vector.broadcast %21 : vector<16x1xf32> to vector<16x32xf32>
    %23 = arith.subf %15, %22 : vector<16x32xf32>
    %24 = arith.mulf %23, %23 : vector<16x32xf32>
    %cst_17 = arith.constant dense<0.000000e+00> : vector<16xf32>
    %25 = vector.multi_reduction <add>, %24, %cst_17 [1] : vector<16x32xf32> to vector<16xf32>
    %26 = vector.shape_cast %25 : vector<16xf32> to vector<16x1xf32>
    %cst_18 = arith.constant 3.200000e+01 : f32
    %27 = vector.broadcast %cst_18 : f32 to vector<16x1xf32>
    %28 = arith.divf %26, %27 : vector<16x1xf32>
    %29 = vector.broadcast %21 : vector<16x1xf32> to vector<16x32xf32>
    %30 = arith.subf %15, %29 : vector<16x32xf32>
    %cst_19 = arith.constant 9.99999974E-6 : f32
    %31 = vector.broadcast %cst_19 : f32 to vector<16x1xf32>
    %32 = arith.addf %28, %31 : vector<16x1xf32>
    %33 = math.rsqrt %32 : vector<16x1xf32>
    %34 = vector.broadcast %33 : vector<16x1xf32> to vector<16x32xf32>
    %35 = arith.mulf %30, %34 : vector<16x32xf32>
    %36 = vector.broadcast %16 : vector<1x32xf32> to vector<16x32xf32>
    %37 = arith.mulf %35, %36 : vector<16x32xf32>
    %38 = vector.broadcast %17 : vector<1x32xf32> to vector<16x32xf32>
    %39 = arith.addf %37, %38 : vector<16x32xf32>
    %c0_20 = arith.constant 0 : index
    %c0_21 = arith.constant 0 : index
    %40 = vector.load %arg7[%c0_20, %c0_21] : memref<16x32xf32, #tpu.memory_space<vmem>>, vector<16x32xf32>
    tpu.vector_store %arg7[%c0_20, %c0_21], %39 {strides = array<i32>} : memref<16x32xf32, #tpu.memory_space<vmem>>, vector<16x32xf32>,
    return
  }
}

module attributes {stable_mosaic.version = 11 : i64} {
  func.func @_ln_kernel(%arg0: memref<16x32xf32, #tpu.memory_space<vmem>>, %arg1: memref<1x32xf32, #tpu.memory_space<vmem>>, %arg2: memref<1x32xf32, #tpu.memory_space<vmem>>, %arg3: memref<16x32xf32, #tpu.memory_space<vmem>>) attributes {dimension_semantics = [], scalar_prefetch = 0 : i64, scratch_operands = 0 : i64, tpu.core_type = #tpu.core_type<tc>} {
    %c0 = arith.constant 0 : index
    %c0_0 = arith.constant 0 : index
    %0 = vector.load %arg0[%c0, %c0_0] : memref<16x32xf32, #tpu.memory_space<vmem>>, vector<16x32xf32>
    %c0_1 = arith.constant 0 : index
    %c0_2 = arith.constant 0 : index
    %1 = vector.load %arg1[%c0_1, %c0_2] : memref<1x32xf32, #tpu.memory_space<vmem>>, vector<1x32xf32>
    %c0_3 = arith.constant 0 : index
    %c0_4 = arith.constant 0 : index
    %2 = vector.load %arg2[%c0_3, %c0_4] : memref<1x32xf32, #tpu.memory_space<vmem>>, vector<1x32xf32>
    %cst = arith.constant dense<0.000000e+00> : vector<16xf32>
    %3 = vector.multi_reduction <add>, %0, %cst [1] : vector<16x32xf32> to vector<16xf32>
    %4 = vector.shape_cast %3 : vector<16xf32> to vector<16x1xf32>
    %cst_5 = arith.constant 3.200000e+01 : f32
    %5 = vector.broadcast %cst_5 : f32 to vector<16x1xf32>
    %6 = arith.divf %4, %5 : vector<16x1xf32>
    %7 = vector.broadcast %6 : vector<16x1xf32> to vector<16x32xf32>
    %8 = arith.subf %0, %7 : vector<16x32xf32>
    %9 = arith.mulf %8, %8 : vector<16x32xf32>
    %cst_6 = arith.constant dense<0.000000e+00> : vector<16xf32>
    %10 = vector.multi_reduction <add>, %9, %cst_6 [1] : vector<16x32xf32> to vector<16xf32>
    %11 = vector.shape_cast %10 : vector<16xf32> to vector<16x1xf32>
    %cst_7 = arith.constant 3.200000e+01 : f32
    %12 = vector.broadcast %cst_7 : f32 to vector<16x1xf32>
    %13 = arith.divf %11, %12 : vector<16x1xf32>
    %14 = vector.broadcast %6 : vector<16x1xf32> to vector<16x32xf32>
    %15 = arith.subf %0, %14 : vector<16x32xf32>
    %cst_8 = arith.constant 9.99999974E-6 : f32
    %16 = vector.broadcast %cst_8 : f32 to vector<16x1xf32>
    %17 = arith.addf %13, %16 : vector<16x1xf32>
    %18 = math.rsqrt %17 : vector<16x1xf32>
    %19 = vector.broadcast %18 : vector<16x1xf32> to vector<16x32xf32>
    %20 = arith.mulf %15, %19 : vector<16x32xf32>
    %21 = vector.broadcast %1 : vector<1x32xf32> to vector<16x32xf32>
    %22 = arith.mulf %20, %21 : vector<16x32xf32>
    %23 = vector.broadcast %2 : vector<1x32xf32> to vector<16x32xf32>
    %24 = arith.addf %22, %23 : vector<16x32xf32>
    %c0_9 = arith.constant 0 : index
    %c0_10 = arith.constant 0 : index
    %25 = vector.load %arg3[%c0_9, %c0_10] : memref<16x32xf32, #tpu.memory_space<vmem>>, vector<16x32xf32>
    tpu.vector_store %arg3[%c0_9, %c0_10], %24 {strides = array<i32>} : memref<16x32xf32, #tpu.memory_space<vmem>>, vector<16x32xf32>,
    return
  }
}

module attributes {stable_mosaic.version = 11 : i64} {
  func.func @_self_mha_ln_kernel(%arg0: memref<2x8x32xf32, #tpu.memory_space<vmem>>, %arg1: memref<2x8x8xf32, #tpu.memory_space<vmem>>, %arg2: memref<32x96xbf16, #tpu.memory_space<vmem>>, %arg3: memref<1x96xf32, #tpu.memory_space<vmem>>, %arg4: memref<32x32xbf16, #tpu.memory_space<vmem>>, %arg5: memref<1x32xf32, #tpu.memory_space<vmem>>, %arg6: memref<1x32xf32, #tpu.memory_space<vmem>>, %arg7: memref<1x32xf32, #tpu.memory_space<vmem>>, %arg8: memref<2x8x32xf32, #tpu.memory_space<vmem>>) attributes {dimension_semantics = [], scalar_prefetch = 0 : i64, scratch_operands = 0 : i64, tpu.core_type = #tpu.core_type<tc>} {
    %c0 = arith.constant 0 : index
    %c0_0 = arith.constant 0 : index
    %0 = vector.load %arg2[%c0, %c0_0] : memref<32x96xbf16, #tpu.memory_space<vmem>>, vector<32x96xbf16>
    %c0_1 = arith.constant 0 : index
    %c0_2 = arith.constant 0 : index
    %1 = vector.load %arg3[%c0_1, %c0_2] : memref<1x96xf32, #tpu.memory_space<vmem>>, vector<1x96xf32>
    %c0_3 = arith.constant 0 : index
    %c0_4 = arith.constant 0 : index
    %2 = vector.load %arg4[%c0_3, %c0_4] : memref<32x32xbf16, #tpu.memory_space<vmem>>, vector<32x32xbf16>
    %c0_5 = arith.constant 0 : index
    %c0_6 = arith.constant 0 : index
    %3 = vector.load %arg5[%c0_5, %c0_6] : memref<1x32xf32, #tpu.memory_space<vmem>>, vector<1x32xf32>
    %c0_7 = arith.constant 0 : index
    %c0_8 = arith.constant 0 : index
    %4 = vector.load %arg6[%c0_7, %c0_8] : memref<1x32xf32, #tpu.memory_space<vmem>>, vector<1x32xf32>
    %c0_9 = arith.constant 0 : index
    %c0_10 = arith.constant 0 : index
    %5 = vector.load %arg7[%c0_9, %c0_10] : memref<1x32xf32, #tpu.memory_space<vmem>>, vector<1x32xf32>
    %c0_11 = arith.constant 0 : index
    %c0_12 = arith.constant 0 : index
    %c0_13 = arith.constant 0 : index
    %6 = vector.load %arg0[%c0_11, %c0_12, %c0_13] : memref<2x8x32xf32, #tpu.memory_space<vmem>>, vector<1x8x32xf32>
    %7 = vector.shape_cast %6 : vector<1x8x32xf32> to vector<8x32xf32>
    %8 = arith.truncf %7 : vector<8x32xf32> to vector<8x32xbf16>
    %cst = arith.constant dense<0.000000e+00> : vector<8x96xf32>
    %9 = tpu.matmul %8, %0, %cst {dimension_numbers = #tpu.dot_dimension_numbers<[1], [0], [0], [1], [0, 0, 1, 1], [], []>} : vector<8x32xbf16>, vector<32x96xbf16>, vector<8x96xf32> -> vector<8x96xf32>
    %10 = vector.broadcast %1 : vector<1x96xf32> to vector<8x96xf32>
    %11 = arith.addf %9, %10 : vector<8x96xf32>
    %12 = vector.extract_strided_slice %11 {offsets = [0, 0], sizes = [8, 32], strides = [1, 1]} : vector<8x96xf32> to vector<8x32xf32>
    %13 = vector.extract_strided_slice %11 {offsets = [0, 32], sizes = [8, 32], strides = [1, 1]} : vector<8x96xf32> to vector<8x32xf32>
    %14 = vector.extract_strided_slice %11 {offsets = [0, 64], sizes = [8, 32], strides = [1, 1]} : vector<8x96xf32> to vector<8x32xf32>
    %c0_14 = arith.constant 0 : index
    %c0_15 = arith.constant 0 : index
    %c0_16 = arith.constant 0 : index
    %15 = vector.load %arg1[%c0_14, %c0_15, %c0_16] : memref<2x8x8xf32, #tpu.memory_space<vmem>>, vector<1x8x8xf32>
    %16 = vector.shape_cast %15 : vector<1x8x8xf32> to vector<8x8xf32>
    %17 = vector.extract_strided_slice %12 {offsets = [0, 0], sizes = [8, 8], strides = [1, 1]} : vector<8x32xf32> to vector<8x8xf32>
    %18 = arith.truncf %17 : vector<8x8xf32> to vector<8x8xbf16>
    %19 = vector.extract_strided_slice %13 {offsets = [0, 0], sizes = [8, 8], strides = [1, 1]} : vector<8x32xf32> to vector<8x8xf32>
    %20 = arith.truncf %19 : vector<8x8xf32> to vector<8x8xbf16>
    "tpu.trace_start"() <{level = 10 : i32, message = "qd,kd->qk"}> : () -> ()
    %cst_17 = arith.constant dense<0.000000e+00> : vector<8x8xf32>
    %21 = tpu.matmul %18, %20, %cst_17 {dimension_numbers = #tpu.dot_dimension_numbers<[1], [1], [0], [0], [0, 0, 1, 0], [], []>} : vector<8x8xbf16>, vector<8x8xbf16>, vector<8x8xf32> -> vector<8x8xf32>
    "tpu.trace_stop"() : () -> ()
    %cst_18 = arith.constant 0.353553385 : f32
    %22 = vector.broadcast %cst_18 : f32 to vector<8x8xf32>
    %23 = arith.mulf %21, %22 : vector<8x8xf32>
    %24 = arith.addf %23, %16 : vector<8x8xf32>
    %cst_19 = arith.constant dense<0xFF800000> : vector<8xf32>
    %25 = vector.multi_reduction <maximumf>, %24, %cst_19 [1] : vector<8x8xf32> to vector<8xf32>
    %26 = vector.shape_cast %25 : vector<8xf32> to vector<8x1xf32>
    %27 = vector.broadcast %26 : vector<8x1xf32> to vector<8x8xf32>
    %28 = arith.subf %24, %27 : vector<8x8xf32>
    %29 = math.exp %28 : vector<8x8xf32>
    %cst_20 = arith.constant dense<0.000000e+00> : vector<8xf32>
    %30 = vector.multi_reduction <add>, %29, %cst_20 [1] : vector<8x8xf32> to vector<8xf32>
    %31 = vector.shape_cast %30 : vector<8xf32> to vector<8x1xf32>
    %32 = tpu.reciprocal %31 {approx = true} : vector<8x1xf32> -> vector<8x1xf32>
    %33 = vector.broadcast %32 : vector<8x1xf32> to vector<8x8xf32>
    %34 = arith.mulf %29, %33 : vector<8x8xf32>
    %35 = arith.truncf %34 : vector<8x8xf32> to vector<8x8xbf16>
    %36 = vector.extract_strided_slice %14 {offsets = [0, 0], sizes = [8, 8], strides = [1, 1]} : vector<8x32xf32> to vector<8x8xf32>
    %37 = arith.truncf %36 : vector<8x8xf32> to vector<8x8xbf16>
    "tpu.trace_start"() <{level = 10 : i32, message = "qk,kd->qd"}> : () -> ()
    %cst_21 = arith.constant dense<0.000000e+00> : vector<8x8xf32>
    %38 = tpu.matmul %35, %37, %cst_21 {dimension_numbers = #tpu.dot_dimension_numbers<[1], [0], [0], [1], [0, 0, 1, 1], [], []>} : vector<8x8xbf16>, vector<8x8xbf16>, vector<8x8xf32> -> vector<8x8xf32>
    "tpu.trace_stop"() : () -> ()
    %39 = vector.extract_strided_slice %12 {offsets = [0, 8], sizes = [8, 8], strides = [1, 1]} : vector<8x32xf32> to vector<8x8xf32>
    %40 = arith.truncf %39 : vector<8x8xf32> to vector<8x8xbf16>
    %41 = vector.extract_strided_slice %13 {offsets = [0, 8], sizes = [8, 8], strides = [1, 1]} : vector<8x32xf32> to vector<8x8xf32>
    %42 = arith.truncf %41 : vector<8x8xf32> to vector<8x8xbf16>
    "tpu.trace_start"() <{level = 10 : i32, message = "qd,kd->qk"}> : () -> ()
    %cst_22 = arith.constant dense<0.000000e+00> : vector<8x8xf32>
    %43 = tpu.matmul %40, %42, %cst_22 {dimension_numbers = #tpu.dot_dimension_numbers<[1], [1], [0], [0], [0, 0, 1, 0], [], []>} : vector<8x8xbf16>, vector<8x8xbf16>, vector<8x8xf32> -> vector<8x8xf32>
    "tpu.trace_stop"() : () -> ()
    %cst_23 = arith.constant 0.353553385 : f32
    %44 = vector.broadcast %cst_23 : f32 to vector<8x8xf32>
    %45 = arith.mulf %43, %44 : vector<8x8xf32>
    %46 = arith.addf %45, %16 : vector<8x8xf32>
    %cst_24 = arith.constant dense<0xFF800000> : vector<8xf32>
    %47 = vector.multi_reduction <maximumf>, %46, %cst_24 [1] : vector<8x8xf32> to vector<8xf32>
    %48 = vector.shape_cast %47 : vector<8xf32> to vector<8x1xf32>
    %49 = vector.broadcast %48 : vector<8x1xf32> to vector<8x8xf32>
    %50 = arith.subf %46, %49 : vector<8x8xf32>
    %51 = math.exp %50 : vector<8x8xf32>
    %cst_25 = arith.constant dense<0.000000e+00> : vector<8xf32>
    %52 = vector.multi_reduction <add>, %51, %cst_25 [1] : vector<8x8xf32> to vector<8xf32>
    %53 = vector.shape_cast %52 : vector<8xf32> to vector<8x1xf32>
    %54 = tpu.reciprocal %53 {approx = true} : vector<8x1xf32> -> vector<8x1xf32>
    %55 = vector.broadcast %54 : vector<8x1xf32> to vector<8x8xf32>
    %56 = arith.mulf %51, %55 : vector<8x8xf32>
    %57 = arith.truncf %56 : vector<8x8xf32> to vector<8x8xbf16>
    %58 = vector.extract_strided_slice %14 {offsets = [0, 8], sizes = [8, 8], strides = [1, 1]} : vector<8x32xf32> to vector<8x8xf32>
    %59 = arith.truncf %58 : vector<8x8xf32> to vector<8x8xbf16>
    "tpu.trace_start"() <{level = 10 : i32, message = "qk,kd->qd"}> : () -> ()
    %cst_26 = arith.constant dense<0.000000e+00> : vector<8x8xf32>
    %60 = tpu.matmul %57, %59, %cst_26 {dimension_numbers = #tpu.dot_dimension_numbers<[1], [0], [0], [1], [0, 0, 1, 1], [], []>} : vector<8x8xbf16>, vector<8x8xbf16>, vector<8x8xf32> -> vector<8x8xf32>
    "tpu.trace_stop"() : () -> ()
    %61 = vector.extract_strided_slice %12 {offsets = [0, 16], sizes = [8, 8], strides = [1, 1]} : vector<8x32xf32> to vector<8x8xf32>
    %62 = arith.truncf %61 : vector<8x8xf32> to vector<8x8xbf16>
    %63 = vector.extract_strided_slice %13 {offsets = [0, 16], sizes = [8, 8], strides = [1, 1]} : vector<8x32xf32> to vector<8x8xf32>
    %64 = arith.truncf %63 : vector<8x8xf32> to vector<8x8xbf16>
    "tpu.trace_start"() <{level = 10 : i32, message = "qd,kd->qk"}> : () -> ()
    %cst_27 = arith.constant dense<0.000000e+00> : vector<8x8xf32>
    %65 = tpu.matmul %62, %64, %cst_27 {dimension_numbers = #tpu.dot_dimension_numbers<[1], [1], [0], [0], [0, 0, 1, 0], [], []>} : vector<8x8xbf16>, vector<8x8xbf16>, vector<8x8xf32> -> vector<8x8xf32>
    "tpu.trace_stop"() : () -> ()
    %cst_28 = arith.constant 0.353553385 : f32
    %66 = vector.broadcast %cst_28 : f32 to vector<8x8xf32>
    %67 = arith.mulf %65, %66 : vector<8x8xf32>
    %68 = arith.addf %67, %16 : vector<8x8xf32>
    %cst_29 = arith.constant dense<0xFF800000> : vector<8xf32>
    %69 = vector.multi_reduction <maximumf>, %68, %cst_29 [1] : vector<8x8xf32> to vector<8xf32>
    %70 = vector.shape_cast %69 : vector<8xf32> to vector<8x1xf32>
    %71 = vector.broadcast %70 : vector<8x1xf32> to vector<8x8xf32>
    %72 = arith.subf %68, %71 : vector<8x8xf32>
    %73 = math.exp %72 : vector<8x8xf32>
    %cst_30 = arith.constant dense<0.000000e+00> : vector<8xf32>
    %74 = vector.multi_reduction <add>, %73, %cst_30 [1] : vector<8x8xf32> to vector<8xf32>
    %75 = vector.shape_cast %74 : vector<8xf32> to vector<8x1xf32>
    %76 = tpu.reciprocal %75 {approx = true} : vector<8x1xf32> -> vector<8x1xf32>
    %77 = vector.broadcast %76 : vector<8x1xf32> to vector<8x8xf32>
    %78 = arith.mulf %73, %77 : vector<8x8xf32>
    %79 = arith.truncf %78 : vector<8x8xf32> to vector<8x8xbf16>
    %80 = vector.extract_strided_slice %14 {offsets = [0, 16], sizes = [8, 8], strides = [1, 1]} : vector<8x32xf32> to vector<8x8xf32>
    %81 = arith.truncf %80 : vector<8x8xf32> to vector<8x8xbf16>
    "tpu.trace_start"() <{level = 10 : i32, message = "qk,kd->qd"}> : () -> ()
    %cst_31 = arith.constant dense<0.000000e+00> : vector<8x8xf32>
    %82 = tpu.matmul %79, %81, %cst_31 {dimension_numbers = #tpu.dot_dimension_numbers<[1], [0], [0], [1], [0, 0, 1, 1], [], []>} : vector<8x8xbf16>, vector<8x8xbf16>, vector<8x8xf32> -> vector<8x8xf32>
    "tpu.trace_stop"() : () -> ()
    %83 = vector.extract_strided_slice %12 {offsets = [0, 24], sizes = [8, 8], strides = [1, 1]} : vector<8x32xf32> to vector<8x8xf32>
    %84 = arith.truncf %83 : vector<8x8xf32> to vector<8x8xbf16>
    %85 = vector.extract_strided_slice %13 {offsets = [0, 24], sizes = [8, 8], strides = [1, 1]} : vector<8x32xf32> to vector<8x8xf32>
    %86 = arith.truncf %85 : vector<8x8xf32> to vector<8x8xbf16>
    "tpu.trace_start"() <{level = 10 : i32, message = "qd,kd->qk"}> : () -> ()
    %cst_32 = arith.constant dense<0.000000e+00> : vector<8x8xf32>
    %87 = tpu.matmul %84, %86, %cst_32 {dimension_numbers = #tpu.dot_dimension_numbers<[1], [1], [0], [0], [0, 0, 1, 0], [], []>} : vector<8x8xbf16>, vector<8x8xbf16>, vector<8x8xf32> -> vector<8x8xf32>
    "tpu.trace_stop"() : () -> ()
    %cst_33 = arith.constant 0.353553385 : f32
    %88 = vector.broadcast %cst_33 : f32 to vector<8x8xf32>
    %89 = arith.mulf %87, %88 : vector<8x8xf32>
    %90 = arith.addf %89, %16 : vector<8x8xf32>
    %cst_34 = arith.constant dense<0xFF800000> : vector<8xf32>
    %91 = vector.multi_reduction <maximumf>, %90, %cst_34 [1] : vector<8x8xf32> to vector<8xf32>
    %92 = vector.shape_cast %91 : vector<8xf32> to vector<8x1xf32>
    %93 = vector.broadcast %92 : vector<8x1xf32> to vector<8x8xf32>
    %94 = arith.subf %90, %93 : vector<8x8xf32>
    %95 = math.exp %94 : vector<8x8xf32>
    %cst_35 = arith.constant dense<0.000000e+00> : vector<8xf32>
    %96 = vector.multi_reduction <add>, %95, %cst_35 [1] : vector<8x8xf32> to vector<8xf32>
    %97 = vector.shape_cast %96 : vector<8xf32> to vector<8x1xf32>
    %98 = tpu.reciprocal %97 {approx = true} : vector<8x1xf32> -> vector<8x1xf32>
    %99 = vector.broadcast %98 : vector<8x1xf32> to vector<8x8xf32>
    %100 = arith.mulf %95, %99 : vector<8x8xf32>
    %101 = arith.truncf %100 : vector<8x8xf32> to vector<8x8xbf16>
    %102 = vector.extract_strided_slice %14 {offsets = [0, 24], sizes = [8, 8], strides = [1, 1]} : vector<8x32xf32> to vector<8x8xf32>
    %103 = arith.truncf %102 : vector<8x8xf32> to vector<8x8xbf16>
    "tpu.trace_start"() <{level = 10 : i32, message = "qk,kd->qd"}> : () -> ()
    %cst_36 = arith.constant dense<0.000000e+00> : vector<8x8xf32>
    %104 = tpu.matmul %101, %103, %cst_36 {dimension_numbers = #tpu.dot_dimension_numbers<[1], [0], [0], [1], [0, 0, 1, 1], [], []>} : vector<8x8xbf16>, vector<8x8xbf16>, vector<8x8xf32> -> vector<8x8xf32>
    "tpu.trace_stop"() : () -> ()
    %105 = tpu.concatenate %38, %60, %82, %104 in 1 : vector<8x8xf32>, vector<8x8xf32>, vector<8x8xf32>, vector<8x8xf32> -> vector<8x32xf32>
    %106 = arith.truncf %105 : vector<8x32xf32> to vector<8x32xbf16>
    %cst_37 = arith.constant dense<0.000000e+00> : vector<8x32xf32>
    %107 = tpu.matmul %106, %2, %cst_37 {dimension_numbers = #tpu.dot_dimension_numbers<[1], [0], [0], [1], [0, 0, 1, 1], [], []>} : vector<8x32xbf16>, vector<32x32xbf16>, vector<8x32xf32> -> vector<8x32xf32>
    %108 = vector.broadcast %3 : vector<1x32xf32> to vector<8x32xf32>
    %109 = arith.addf %107, %108 : vector<8x32xf32>
    %110 = arith.addf %7, %109 : vector<8x32xf32>
    %cst_38 = arith.constant dense<0.000000e+00> : vector<8xf32>
    %111 = vector.multi_reduction <add>, %110, %cst_38 [1] : vector<8x32xf32> to vector<8xf32>
    %112 = vector.shape_cast %111 : vector<8xf32> to vector<8x1xf32>
    %cst_39 = arith.constant 3.200000e+01 : f32
    %113 = vector.broadcast %cst_39 : f32 to vector<8x1xf32>
    %114 = arith.divf %112, %113 : vector<8x1xf32>
    %115 = vector.broadcast %114 : vector<8x1xf32> to vector<8x32xf32>
    %116 = arith.subf %110, %115 : vector<8x32xf32>
    %117 = arith.mulf %116, %116 : vector<8x32xf32>
    %cst_40 = arith.constant dense<0.000000e+00> : vector<8xf32>
    %118 = vector.multi_reduction <add>, %117, %cst_40 [1] : vector<8x32xf32> to vector<8xf32>
    %119 = vector.shape_cast %118 : vector<8xf32> to vector<8x1xf32>
    %cst_41 = arith.constant 3.200000e+01 : f32
    %120 = vector.broadcast %cst_41 : f32 to vector<8x1xf32>
    %121 = arith.divf %119, %120 : vector<8x1xf32>
    %122 = vector.broadcast %114 : vector<8x1xf32> to vector<8x32xf32>
    %123 = arith.subf %110, %122 : vector<8x32xf32>
    %cst_42 = arith.constant 9.99999974E-6 : f32
    %124 = vector.broadcast %cst_42 : f32 to vector<8x1xf32>
    %125 = arith.addf %121, %124 : vector<8x1xf32>
    %126 = math.rsqrt %125 : vector<8x1xf32>
    %127 = vector.broadcast %126 : vector<8x1xf32> to vector<8x32xf32>
    %128 = arith.mulf %123, %127 : vector<8x32xf32>
    %129 = vector.broadcast %4 : vector<1x32xf32> to vector<8x32xf32>
    %130 = arith.mulf %128, %129 : vector<8x32xf32>
    %131 = vector.broadcast %5 : vector<1x32xf32> to vector<8x32xf32>
    %132 = arith.addf %130, %131 : vector<8x32xf32>
    %c0_43 = arith.constant 0 : index
    %c0_44 = arith.constant 0 : index
    %c0_45 = arith.constant 0 : index
    %133 = vector.load %arg8[%c0_43, %c0_44, %c0_45] : memref<2x8x32xf32, #tpu.memory_space<vmem>>, vector<1x8x32xf32>
    %134 = vector.shape_cast %133 : vector<1x8x32xf32> to vector<8x32xf32>
    %135 = vector.shape_cast %132 : vector<8x32xf32> to vector<1x8x32xf32>
    tpu.vector_store %arg8[%c0_43, %c0_44, %c0_45], %135 {strides = array<i32>} : memref<2x8x32xf32, #tpu.memory_space<vmem>>, vector<1x8x32xf32>,
    %c1 = arith.constant 1 : index
    %c0_46 = arith.constant 0 : index
    %c0_47 = arith.constant 0 : index
    %136 = vector.load %arg0[%c1, %c0_46, %c0_47] : memref<2x8x32xf32, #tpu.memory_space<vmem>>, vector<1x8x32xf32>
    %137 = vector.shape_cast %136 : vector<1x8x32xf32> to vector<8x32xf32>
    %138 = arith.truncf %137 : vector<8x32xf32> to vector<8x32xbf16>
    %cst_48 = arith.constant dense<0.000000e+00> : vector<8x96xf32>
    %139 = tpu.matmul %138, %0, %cst_48 {dimension_numbers = #tpu.dot_dimension_numbers<[1], [0], [0], [1], [0, 0, 1, 1], [], []>} : vector<8x32xbf16>, vector<32x96xbf16>, vector<8x96xf32> -> vector<8x96xf32>
    %140 = vector.broadcast %1 : vector<1x96xf32> to vector<8x96xf32>
    %141 = arith.addf %139, %140 : vector<8x96xf32>
    %142 = vector.extract_strided_slice %141 {offsets = [0, 0], sizes = [8, 32], strides = [1, 1]} : vector<8x96xf32> to vector<8x32xf32>
    %143 = vector.extract_strided_slice %141 {offsets = [0, 32], sizes = [8, 32], strides = [1, 1]} : vector<8x96xf32> to vector<8x32xf32>
    %144 = vector.extract_strided_slice %141 {offsets = [0, 64], sizes = [8, 32], strides = [1, 1]} : vector<8x96xf32> to vector<8x32xf32>
    %c1_49 = arith.constant 1 : index
    %c0_50 = arith.constant 0 : index
    %c0_51 = arith.constant 0 : index
    %145 = vector.load %arg1[%c1_49, %c0_50, %c0_51] : memref<2x8x8xf32, #tpu.memory_space<vmem>>, vector<1x8x8xf32>
    %146 = vector.shape_cast %145 : vector<1x8x8xf32> to vector<8x8xf32>
    %147 = vector.extract_strided_slice %142 {offsets = [0, 0], sizes = [8, 8], strides = [1, 1]} : vector<8x32xf32> to vector<8x8xf32>
    %148 = arith.truncf %147 : vector<8x8xf32> to vector<8x8xbf16>
    %149 = vector.extract_strided_slice %143 {offsets = [0, 0], sizes = [8, 8], strides = [1, 1]} : vector<8x32xf32> to vector<8x8xf32>
    %150 = arith.truncf %149 : vector<8x8xf32> to vector<8x8xbf16>
    "tpu.trace_start"() <{level = 10 : i32, message = "qd,kd->qk"}> : () -> ()
    %cst_52 = arith.constant dense<0.000000e+00> : vector<8x8xf32>
    %151 = tpu.matmul %148, %150, %cst_52 {dimension_numbers = #tpu.dot_dimension_numbers<[1], [1], [0], [0], [0, 0, 1, 0], [], []>} : vector<8x8xbf16>, vector<8x8xbf16>, vector<8x8xf32> -> vector<8x8xf32>
    "tpu.trace_stop"() : () -> ()
    %cst_53 = arith.constant 0.353553385 : f32
    %152 = vector.broadcast %cst_53 : f32 to vector<8x8xf32>
    %153 = arith.mulf %151, %152 : vector<8x8xf32>
    %154 = arith.addf %153, %146 : vector<8x8xf32>
    %cst_54 = arith.constant dense<0xFF800000> : vector<8xf32>
    %155 = vector.multi_reduction <maximumf>, %154, %cst_54 [1] : vector<8x8xf32> to vector<8xf32>
    %156 = vector.shape_cast %155 : vector<8xf32> to vector<8x1xf32>
    %157 = vector.broadcast %156 : vector<8x1xf32> to vector<8x8xf32>
    %158 = arith.subf %154, %157 : vector<8x8xf32>
    %159 = math.exp %158 : vector<8x8xf32>
    %cst_55 = arith.constant dense<0.000000e+00> : vector<8xf32>
    %160 = vector.multi_reduction <add>, %159, %cst_55 [1] : vector<8x8xf32> to vector<8xf32>
    %161 = vector.shape_cast %160 : vector<8xf32> to vector<8x1xf32>
    %162 = tpu.reciprocal %161 {approx = true} : vector<8x1xf32> -> vector<8x1xf32>
    %163 = vector.broadcast %162 : vector<8x1xf32> to vector<8x8xf32>
    %164 = arith.mulf %159, %163 : vector<8x8xf32>
    %165 = arith.truncf %164 : vector<8x8xf32> to vector<8x8xbf16>
    %166 = vector.extract_strided_slice %144 {offsets = [0, 0], sizes = [8, 8], strides = [1, 1]} : vector<8x32xf32> to vector<8x8xf32>
    %167 = arith.truncf %166 : vector<8x8xf32> to vector<8x8xbf16>
    "tpu.trace_start"() <{level = 10 : i32, message = "qk,kd->qd"}> : () -> ()
    %cst_56 = arith.constant dense<0.000000e+00> : vector<8x8xf32>
    %168 = tpu.matmul %165, %167, %cst_56 {dimension_numbers = #tpu.dot_dimension_numbers<[1], [0], [0], [1], [0, 0, 1, 1], [], []>} : vector<8x8xbf16>, vector<8x8xbf16>, vector<8x8xf32> -> vector<8x8xf32>
    "tpu.trace_stop"() : () -> ()
    %169 = vector.extract_strided_slice %142 {offsets = [0, 8], sizes = [8, 8], strides = [1, 1]} : vector<8x32xf32> to vector<8x8xf32>
    %170 = arith.truncf %169 : vector<8x8xf32> to vector<8x8xbf16>
    %171 = vector.extract_strided_slice %143 {offsets = [0, 8], sizes = [8, 8], strides = [1, 1]} : vector<8x32xf32> to vector<8x8xf32>
    %172 = arith.truncf %171 : vector<8x8xf32> to vector<8x8xbf16>
    "tpu.trace_start"() <{level = 10 : i32, message = "qd,kd->qk"}> : () -> ()
    %cst_57 = arith.constant dense<0.000000e+00> : vector<8x8xf32>
    %173 = tpu.matmul %170, %172, %cst_57 {dimension_numbers = #tpu.dot_dimension_numbers<[1], [1], [0], [0], [0, 0, 1, 0], [], []>} : vector<8x8xbf16>, vector<8x8xbf16>, vector<8x8xf32> -> vector<8x8xf32>
    "tpu.trace_stop"() : () -> ()
    %cst_58 = arith.constant 0.353553385 : f32
    %174 = vector.broadcast %cst_58 : f32 to vector<8x8xf32>
    %175 = arith.mulf %173, %174 : vector<8x8xf32>
    %176 = arith.addf %175, %146 : vector<8x8xf32>
    %cst_59 = arith.constant dense<0xFF800000> : vector<8xf32>
    %177 = vector.multi_reduction <maximumf>, %176, %cst_59 [1] : vector<8x8xf32> to vector<8xf32>
    %178 = vector.shape_cast %177 : vector<8xf32> to vector<8x1xf32>
    %179 = vector.broadcast %178 : vector<8x1xf32> to vector<8x8xf32>
    %180 = arith.subf %176, %179 : vector<8x8xf32>
    %181 = math.exp %180 : vector<8x8xf32>
    %cst_60 = arith.constant dense<0.000000e+00> : vector<8xf32>
    %182 = vector.multi_reduction <add>, %181, %cst_60 [1] : vector<8x8xf32> to vector<8xf32>
    %183 = vector.shape_cast %182 : vector<8xf32> to vector<8x1xf32>
    %184 = tpu.reciprocal %183 {approx = true} : vector<8x1xf32> -> vector<8x1xf32>
    %185 = vector.broadcast %184 : vector<8x1xf32> to vector<8x8xf32>
    %186 = arith.mulf %181, %185 : vector<8x8xf32>
    %187 = arith.truncf %186 : vector<8x8xf32> to vector<8x8xbf16>
    %188 = vector.extract_strided_slice %144 {offsets = [0, 8], sizes = [8, 8], strides = [1, 1]} : vector<8x32xf32> to vector<8x8xf32>
    %189 = arith.truncf %188 : vector<8x8xf32> to vector<8x8xbf16>
    "tpu.trace_start"() <{level = 10 : i32, message = "qk,kd->qd"}> : () -> ()
    %cst_61 = arith.constant dense<0.000000e+00> : vector<8x8xf32>
    %190 = tpu.matmul %187, %189, %cst_61 {dimension_numbers = #tpu.dot_dimension_numbers<[1], [0], [0], [1], [0, 0, 1, 1], [], []>} : vector<8x8xbf16>, vector<8x8xbf16>, vector<8x8xf32> -> vector<8x8xf32>
    "tpu.trace_stop"() : () -> ()
    %191 = vector.extract_strided_slice %142 {offsets = [0, 16], sizes = [8, 8], strides = [1, 1]} : vector<8x32xf32> to vector<8x8xf32>
    %192 = arith.truncf %191 : vector<8x8xf32> to vector<8x8xbf16>
    %193 = vector.extract_strided_slice %143 {offsets = [0, 16], sizes = [8, 8], strides = [1, 1]} : vector<8x32xf32> to vector<8x8xf32>
    %194 = arith.truncf %193 : vector<8x8xf32> to vector<8x8xbf16>
    "tpu.trace_start"() <{level = 10 : i32, message = "qd,kd->qk"}> : () -> ()
    %cst_62 = arith.constant dense<0.000000e+00> : vector<8x8xf32>
    %195 = tpu.matmul %192, %194, %cst_62 {dimension_numbers = #tpu.dot_dimension_numbers<[1], [1], [0], [0], [0, 0, 1, 0], [], []>} : vector<8x8xbf16>, vector<8x8xbf16>, vector<8x8xf32> -> vector<8x8xf32>
    "tpu.trace_stop"() : () -> ()
    %cst_63 = arith.constant 0.353553385 : f32
    %196 = vector.broadcast %cst_63 : f32 to vector<8x8xf32>
    %197 = arith.mulf %195, %196 : vector<8x8xf32>
    %198 = arith.addf %197, %146 : vector<8x8xf32>
    %cst_64 = arith.constant dense<0xFF800000> : vector<8xf32>
    %199 = vector.multi_reduction <maximumf>, %198, %cst_64 [1] : vector<8x8xf32> to vector<8xf32>
    %200 = vector.shape_cast %199 : vector<8xf32> to vector<8x1xf32>
    %201 = vector.broadcast %200 : vector<8x1xf32> to vector<8x8xf32>
    %202 = arith.subf %198, %201 : vector<8x8xf32>
    %203 = math.exp %202 : vector<8x8xf32>
    %cst_65 = arith.constant dense<0.000000e+00> : vector<8xf32>
    %204 = vector.multi_reduction <add>, %203, %cst_65 [1] : vector<8x8xf32> to vector<8xf32>
    %205 = vector.shape_cast %204 : vector<8xf32> to vector<8x1xf32>
    %206 = tpu.reciprocal %205 {approx = true} : vector<8x1xf32> -> vector<8x1xf32>
    %207 = vector.broadcast %206 : vector<8x1xf32> to vector<8x8xf32>
    %208 = arith.mulf %203, %207 : vector<8x8xf32>
    %209 = arith.truncf %208 : vector<8x8xf32> to vector<8x8xbf16>
    %210 = vector.extract_strided_slice %144 {offsets = [0, 16], sizes = [8, 8], strides = [1, 1]} : vector<8x32xf32> to vector<8x8xf32>
    %211 = arith.truncf %210 : vector<8x8xf32> to vector<8x8xbf16>
    "tpu.trace_start"() <{level = 10 : i32, message = "qk,kd->qd"}> : () -> ()
    %cst_66 = arith.constant dense<0.000000e+00> : vector<8x8xf32>
    %212 = tpu.matmul %209, %211, %cst_66 {dimension_numbers = #tpu.dot_dimension_numbers<[1], [0], [0], [1], [0, 0, 1, 1], [], []>} : vector<8x8xbf16>, vector<8x8xbf16>, vector<8x8xf32> -> vector<8x8xf32>
    "tpu.trace_stop"() : () -> ()
    %213 = vector.extract_strided_slice %142 {offsets = [0, 24], sizes = [8, 8], strides = [1, 1]} : vector<8x32xf32> to vector<8x8xf32>
    %214 = arith.truncf %213 : vector<8x8xf32> to vector<8x8xbf16>
    %215 = vector.extract_strided_slice %143 {offsets = [0, 24], sizes = [8, 8], strides = [1, 1]} : vector<8x32xf32> to vector<8x8xf32>
    %216 = arith.truncf %215 : vector<8x8xf32> to vector<8x8xbf16>
    "tpu.trace_start"() <{level = 10 : i32, message = "qd,kd->qk"}> : () -> ()
    %cst_67 = arith.constant dense<0.000000e+00> : vector<8x8xf32>
    %217 = tpu.matmul %214, %216, %cst_67 {dimension_numbers = #tpu.dot_dimension_numbers<[1], [1], [0], [0], [0, 0, 1, 0], [], []>} : vector<8x8xbf16>, vector<8x8xbf16>, vector<8x8xf32> -> vector<8x8xf32>
    "tpu.trace_stop"() : () -> ()
    %cst_68 = arith.constant 0.353553385 : f32
    %218 = vector.broadcast %cst_68 : f32 to vector<8x8xf32>
    %219 = arith.mulf %217, %218 : vector<8x8xf32>
    %220 = arith.addf %219, %146 : vector<8x8xf32>
    %cst_69 = arith.constant dense<0xFF800000> : vector<8xf32>
    %221 = vector.multi_reduction <maximumf>, %220, %cst_69 [1] : vector<8x8xf32> to vector<8xf32>
    %222 = vector.shape_cast %221 : vector<8xf32> to vector<8x1xf32>
    %223 = vector.broadcast %222 : vector<8x1xf32> to vector<8x8xf32>
    %224 = arith.subf %220, %223 : vector<8x8xf32>
    %225 = math.exp %224 : vector<8x8xf32>
    %cst_70 = arith.constant dense<0.000000e+00> : vector<8xf32>
    %226 = vector.multi_reduction <add>, %225, %cst_70 [1] : vector<8x8xf32> to vector<8xf32>
    %227 = vector.shape_cast %226 : vector<8xf32> to vector<8x1xf32>
    %228 = tpu.reciprocal %227 {approx = true} : vector<8x1xf32> -> vector<8x1xf32>
    %229 = vector.broadcast %228 : vector<8x1xf32> to vector<8x8xf32>
    %230 = arith.mulf %225, %229 : vector<8x8xf32>
    %231 = arith.truncf %230 : vector<8x8xf32> to vector<8x8xbf16>
    %232 = vector.extract_strided_slice %144 {offsets = [0, 24], sizes = [8, 8], strides = [1, 1]} : vector<8x32xf32> to vector<8x8xf32>
    %233 = arith.truncf %232 : vector<8x8xf32> to vector<8x8xbf16>
    "tpu.trace_start"() <{level = 10 : i32, message = "qk,kd->qd"}> : () -> ()
    %cst_71 = arith.constant dense<0.000000e+00> : vector<8x8xf32>
    %234 = tpu.matmul %231, %233, %cst_71 {dimension_numbers = #tpu.dot_dimension_numbers<[1], [0], [0], [1], [0, 0, 1, 1], [], []>} : vector<8x8xbf16>, vector<8x8xbf16>, vector<8x8xf32> -> vector<8x8xf32>
    "tpu.trace_stop"() : () -> ()
    %235 = tpu.concatenate %168, %190, %212, %234 in 1 : vector<8x8xf32>, vector<8x8xf32>, vector<8x8xf32>, vector<8x8xf32> -> vector<8x32xf32>
    %236 = arith.truncf %235 : vector<8x32xf32> to vector<8x32xbf16>
    %cst_72 = arith.constant dense<0.000000e+00> : vector<8x32xf32>
    %237 = tpu.matmul %236, %2, %cst_72 {dimension_numbers = #tpu.dot_dimension_numbers<[1], [0], [0], [1], [0, 0, 1, 1], [], []>} : vector<8x32xbf16>, vector<32x32xbf16>, vector<8x32xf32> -> vector<8x32xf32>
    %238 = vector.broadcast %3 : vector<1x32xf32> to vector<8x32xf32>
    %239 = arith.addf %237, %238 : vector<8x32xf32>
    %240 = arith.addf %137, %239 : vector<8x32xf32>
    %cst_73 = arith.constant dense<0.000000e+00> : vector<8xf32>
    %241 = vector.multi_reduction <add>, %240, %cst_73 [1] : vector<8x32xf32> to vector<8xf32>
    %242 = vector.shape_cast %241 : vector<8xf32> to vector<8x1xf32>
    %cst_74 = arith.constant 3.200000e+01 : f32
    %243 = vector.broadcast %cst_74 : f32 to vector<8x1xf32>
    %244 = arith.divf %242, %243 : vector<8x1xf32>
    %245 = vector.broadcast %244 : vector<8x1xf32> to vector<8x32xf32>
    %246 = arith.subf %240, %245 : vector<8x32xf32>
    %247 = arith.mulf %246, %246 : vector<8x32xf32>
    %cst_75 = arith.constant dense<0.000000e+00> : vector<8xf32>
    %248 = vector.multi_reduction <add>, %247, %cst_75 [1] : vector<8x32xf32> to vector<8xf32>
    %249 = vector.shape_cast %248 : vector<8xf32> to vector<8x1xf32>
    %cst_76 = arith.constant 3.200000e+01 : f32
    %250 = vector.broadcast %cst_76 : f32 to vector<8x1xf32>
    %251 = arith.divf %249, %250 : vector<8x1xf32>
    %252 = vector.broadcast %244 : vector<8x1xf32> to vector<8x32xf32>
    %253 = arith.subf %240, %252 : vector<8x32xf32>
    %cst_77 = arith.constant 9.99999974E-6 : f32
    %254 = vector.broadcast %cst_77 : f32 to vector<8x1xf32>
    %255 = arith.addf %251, %254 : vector<8x1xf32>
    %256 = math.rsqrt %255 : vector<8x1xf32>
    %257 = vector.broadcast %256 : vector<8x1xf32> to vector<8x32xf32>
    %258 = arith.mulf %253, %257 : vector<8x32xf32>
    %259 = vector.broadcast %4 : vector<1x32xf32> to vector<8x32xf32>
    %260 = arith.mulf %258, %259 : vector<8x32xf32>
    %261 = vector.broadcast %5 : vector<1x32xf32> to vector<8x32xf32>
    %262 = arith.addf %260, %261 : vector<8x32xf32>
    %c1_78 = arith.constant 1 : index
    %c0_79 = arith.constant 0 : index
    %c0_80 = arith.constant 0 : index
    %263 = vector.load %arg8[%c1_78, %c0_79, %c0_80] : memref<2x8x32xf32, #tpu.memory_space<vmem>>, vector<1x8x32xf32>
    %264 = vector.shape_cast %263 : vector<1x8x32xf32> to vector<8x32xf32>
    %265 = vector.shape_cast %262 : vector<8x32xf32> to vector<1x8x32xf32>
    tpu.vector_store %arg8[%c1_78, %c0_79, %c0_80], %265 {strides = array<i32>} : memref<2x8x32xf32, #tpu.memory_space<vmem>>, vector<1x8x32xf32>,
    return
  }
}

module attributes {stable_mosaic.version = 11 : i64} {
  func.func @_linear_kernel(%arg0: memref<16x32xf32, #tpu.memory_space<vmem>>, %arg1: memref<32x60xbf16, #tpu.memory_space<vmem>>, %arg2: memref<1x60xf32, #tpu.memory_space<vmem>>, %arg3: memref<16x60xf32, #tpu.memory_space<vmem>>) attributes {dimension_semantics = [], scalar_prefetch = 0 : i64, scratch_operands = 0 : i64, tpu.core_type = #tpu.core_type<tc>} {
    %c0 = arith.constant 0 : index
    %c0_0 = arith.constant 0 : index
    %0 = vector.load %arg0[%c0, %c0_0] : memref<16x32xf32, #tpu.memory_space<vmem>>, vector<16x32xf32>
    %c0_1 = arith.constant 0 : index
    %c0_2 = arith.constant 0 : index
    %1 = vector.load %arg1[%c0_1, %c0_2] : memref<32x60xbf16, #tpu.memory_space<vmem>>, vector<32x60xbf16>
    %c0_3 = arith.constant 0 : index
    %c0_4 = arith.constant 0 : index
    %2 = vector.load %arg2[%c0_3, %c0_4] : memref<1x60xf32, #tpu.memory_space<vmem>>, vector<1x60xf32>
    %3 = arith.truncf %0 : vector<16x32xf32> to vector<16x32xbf16>
    %cst = arith.constant dense<0.000000e+00> : vector<16x60xf32>
    %4 = tpu.matmul %3, %1, %cst {dimension_numbers = #tpu.dot_dimension_numbers<[1], [0], [0], [1], [0, 0, 1, 1], [], []>} : vector<16x32xbf16>, vector<32x60xbf16>, vector<16x60xf32> -> vector<16x60xf32>
    %5 = vector.broadcast %2 : vector<1x60xf32> to vector<16x60xf32>
    %6 = arith.addf %4, %5 : vector<16x60xf32>
    %c0_5 = arith.constant 0 : index
    %c0_6 = arith.constant 0 : index
    %7 = vector.load %arg3[%c0_5, %c0_6] : memref<16x60xf32, #tpu.memory_space<vmem>>, vector<16x60xf32>
    tpu.vector_store %arg3[%c0_5, %c0_6], %6 {strides = array<i32>} : memref<16x60xf32, #tpu.memory_space<vmem>>, vector<16x60xf32>,
    return
  }
}

module attributes {stable_mosaic.version = 11 : i64} {
  func.func @_cross_mha_ln_kernel(%arg0: memref<2x8x32xf32, #tpu.memory_space<vmem>>, %arg1: memref<2x8x32xf32, #tpu.memory_space<vmem>>, %arg2: memref<2x8x8xf32, #tpu.memory_space<vmem>>, %arg3: memref<32x32xbf16, #tpu.memory_space<vmem>>, %arg4: memref<1x32xf32, #tpu.memory_space<vmem>>, %arg5: memref<32x64xbf16, #tpu.memory_space<vmem>>, %arg6: memref<1x64xf32, #tpu.memory_space<vmem>>, %arg7: memref<32x32xbf16, #tpu.memory_space<vmem>>, %arg8: memref<1x32xf32, #tpu.memory_space<vmem>>, %arg9: memref<1x32xf32, #tpu.memory_space<vmem>>, %arg10: memref<1x32xf32, #tpu.memory_space<vmem>>, %arg11: memref<2x8x32xf32, #tpu.memory_space<vmem>>) attributes {dimension_semantics = [], scalar_prefetch = 0 : i64, scratch_operands = 0 : i64, tpu.core_type = #tpu.core_type<tc>} {
    %c0 = arith.constant 0 : index
    %c0_0 = arith.constant 0 : index
    %0 = vector.load %arg3[%c0, %c0_0] : memref<32x32xbf16, #tpu.memory_space<vmem>>, vector<32x32xbf16>
    %c0_1 = arith.constant 0 : index
    %c0_2 = arith.constant 0 : index
    %1 = vector.load %arg4[%c0_1, %c0_2] : memref<1x32xf32, #tpu.memory_space<vmem>>, vector<1x32xf32>
    %c0_3 = arith.constant 0 : index
    %c0_4 = arith.constant 0 : index
    %2 = vector.load %arg5[%c0_3, %c0_4] : memref<32x64xbf16, #tpu.memory_space<vmem>>, vector<32x64xbf16>
    %c0_5 = arith.constant 0 : index
    %c0_6 = arith.constant 0 : index
    %3 = vector.load %arg6[%c0_5, %c0_6] : memref<1x64xf32, #tpu.memory_space<vmem>>, vector<1x64xf32>
    %c0_7 = arith.constant 0 : index
    %c0_8 = arith.constant 0 : index
    %4 = vector.load %arg7[%c0_7, %c0_8] : memref<32x32xbf16, #tpu.memory_space<vmem>>, vector<32x32xbf16>
    %c0_9 = arith.constant 0 : index
    %c0_10 = arith.constant 0 : index
    %5 = vector.load %arg8[%c0_9, %c0_10] : memref<1x32xf32, #tpu.memory_space<vmem>>, vector<1x32xf32>
    %c0_11 = arith.constant 0 : index
    %c0_12 = arith.constant 0 : index
    %6 = vector.load %arg9[%c0_11, %c0_12] : memref<1x32xf32, #tpu.memory_space<vmem>>, vector<1x32xf32>
    %c0_13 = arith.constant 0 : index
    %c0_14 = arith.constant 0 : index
    %7 = vector.load %arg10[%c0_13, %c0_14] : memref<1x32xf32, #tpu.memory_space<vmem>>, vector<1x32xf32>
    %c0_15 = arith.constant 0 : index
    %c0_16 = arith.constant 0 : index
    %c0_17 = arith.constant 0 : index
    %8 = vector.load %arg0[%c0_15, %c0_16, %c0_17] : memref<2x8x32xf32, #tpu.memory_space<vmem>>, vector<1x8x32xf32>
    %9 = vector.shape_cast %8 : vector<1x8x32xf32> to vector<8x32xf32>
    %c0_18 = arith.constant 0 : index
    %c0_19 = arith.constant 0 : index
    %c0_20 = arith.constant 0 : index
    %10 = vector.load %arg1[%c0_18, %c0_19, %c0_20] : memref<2x8x32xf32, #tpu.memory_space<vmem>>, vector<1x8x32xf32>
    %11 = vector.shape_cast %10 : vector<1x8x32xf32> to vector<8x32xf32>
    %12 = arith.truncf %9 : vector<8x32xf32> to vector<8x32xbf16>
    %cst = arith.constant dense<0.000000e+00> : vector<8x32xf32>
    %13 = tpu.matmul %12, %0, %cst {dimension_numbers = #tpu.dot_dimension_numbers<[1], [0], [0], [1], [0, 0, 1, 1], [], []>} : vector<8x32xbf16>, vector<32x32xbf16>, vector<8x32xf32> -> vector<8x32xf32>
    %14 = vector.broadcast %1 : vector<1x32xf32> to vector<8x32xf32>
    %15 = arith.addf %13, %14 : vector<8x32xf32>
    %16 = arith.truncf %11 : vector<8x32xf32> to vector<8x32xbf16>
    %cst_21 = arith.constant dense<0.000000e+00> : vector<8x64xf32>
    %17 = tpu.matmul %16, %2, %cst_21 {dimension_numbers = #tpu.dot_dimension_numbers<[1], [0], [0], [1], [0, 0, 1, 1], [], []>} : vector<8x32xbf16>, vector<32x64xbf16>, vector<8x64xf32> -> vector<8x64xf32>
    %18 = vector.broadcast %3 : vector<1x64xf32> to vector<8x64xf32>
    %19 = arith.addf %17, %18 : vector<8x64xf32>
    %20 = vector.extract_strided_slice %19 {offsets = [0, 0], sizes = [8, 32], strides = [1, 1]} : vector<8x64xf32> to vector<8x32xf32>
    %21 = vector.extract_strided_slice %19 {offsets = [0, 32], sizes = [8, 32], strides = [1, 1]} : vector<8x64xf32> to vector<8x32xf32>
    %c0_22 = arith.constant 0 : index
    %c0_23 = arith.constant 0 : index
    %c0_24 = arith.constant 0 : index
    %22 = vector.load %arg2[%c0_22, %c0_23, %c0_24] : memref<2x8x8xf32, #tpu.memory_space<vmem>>, vector<1x8x8xf32>
    %23 = vector.shape_cast %22 : vector<1x8x8xf32> to vector<8x8xf32>
    %24 = vector.extract_strided_slice %15 {offsets = [0, 0], sizes = [8, 8], strides = [1, 1]} : vector<8x32xf32> to vector<8x8xf32>
    %25 = arith.truncf %24 : vector<8x8xf32> to vector<8x8xbf16>
    %26 = vector.extract_strided_slice %20 {offsets = [0, 0], sizes = [8, 8], strides = [1, 1]} : vector<8x32xf32> to vector<8x8xf32>
    %27 = arith.truncf %26 : vector<8x8xf32> to vector<8x8xbf16>
    "tpu.trace_start"() <{level = 10 : i32, message = "qd,kd->qk"}> : () -> ()
    %cst_25 = arith.constant dense<0.000000e+00> : vector<8x8xf32>
    %28 = tpu.matmul %25, %27, %cst_25 {dimension_numbers = #tpu.dot_dimension_numbers<[1], [1], [0], [0], [0, 0, 1, 0], [], []>} : vector<8x8xbf16>, vector<8x8xbf16>, vector<8x8xf32> -> vector<8x8xf32>
    "tpu.trace_stop"() : () -> ()
    %cst_26 = arith.constant 0.353553385 : f32
    %29 = vector.broadcast %cst_26 : f32 to vector<8x8xf32>
    %30 = arith.mulf %28, %29 : vector<8x8xf32>
    %31 = arith.addf %30, %23 : vector<8x8xf32>
    %cst_27 = arith.constant dense<0xFF800000> : vector<8xf32>
    %32 = vector.multi_reduction <maximumf>, %31, %cst_27 [1] : vector<8x8xf32> to vector<8xf32>
    %33 = vector.shape_cast %32 : vector<8xf32> to vector<8x1xf32>
    %34 = vector.broadcast %33 : vector<8x1xf32> to vector<8x8xf32>
    %35 = arith.subf %31, %34 : vector<8x8xf32>
    %36 = math.exp %35 : vector<8x8xf32>
    %cst_28 = arith.constant dense<0.000000e+00> : vector<8xf32>
    %37 = vector.multi_reduction <add>, %36, %cst_28 [1] : vector<8x8xf32> to vector<8xf32>
    %38 = vector.shape_cast %37 : vector<8xf32> to vector<8x1xf32>
    %39 = tpu.reciprocal %38 {approx = true} : vector<8x1xf32> -> vector<8x1xf32>
    %40 = vector.broadcast %39 : vector<8x1xf32> to vector<8x8xf32>
    %41 = arith.mulf %36, %40 : vector<8x8xf32>
    %42 = arith.truncf %41 : vector<8x8xf32> to vector<8x8xbf16>
    %43 = vector.extract_strided_slice %21 {offsets = [0, 0], sizes = [8, 8], strides = [1, 1]} : vector<8x32xf32> to vector<8x8xf32>
    %44 = arith.truncf %43 : vector<8x8xf32> to vector<8x8xbf16>
    "tpu.trace_start"() <{level = 10 : i32, message = "qk,kd->qd"}> : () -> ()
    %cst_29 = arith.constant dense<0.000000e+00> : vector<8x8xf32>
    %45 = tpu.matmul %42, %44, %cst_29 {dimension_numbers = #tpu.dot_dimension_numbers<[1], [0], [0], [1], [0, 0, 1, 1], [], []>} : vector<8x8xbf16>, vector<8x8xbf16>, vector<8x8xf32> -> vector<8x8xf32>
    "tpu.trace_stop"() : () -> ()
    %46 = vector.extract_strided_slice %15 {offsets = [0, 8], sizes = [8, 8], strides = [1, 1]} : vector<8x32xf32> to vector<8x8xf32>
    %47 = arith.truncf %46 : vector<8x8xf32> to vector<8x8xbf16>
    %48 = vector.extract_strided_slice %20 {offsets = [0, 8], sizes = [8, 8], strides = [1, 1]} : vector<8x32xf32> to vector<8x8xf32>
    %49 = arith.truncf %48 : vector<8x8xf32> to vector<8x8xbf16>
    "tpu.trace_start"() <{level = 10 : i32, message = "qd,kd->qk"}> : () -> ()
    %cst_30 = arith.constant dense<0.000000e+00> : vector<8x8xf32>
    %50 = tpu.matmul %47, %49, %cst_30 {dimension_numbers = #tpu.dot_dimension_numbers<[1], [1], [0], [0], [0, 0, 1, 0], [], []>} : vector<8x8xbf16>, vector<8x8xbf16>, vector<8x8xf32> -> vector<8x8xf32>
    "tpu.trace_stop"() : () -> ()
    %cst_31 = arith.constant 0.353553385 : f32
    %51 = vector.broadcast %cst_31 : f32 to vector<8x8xf32>
    %52 = arith.mulf %50, %51 : vector<8x8xf32>
    %53 = arith.addf %52, %23 : vector<8x8xf32>
    %cst_32 = arith.constant dense<0xFF800000> : vector<8xf32>
    %54 = vector.multi_reduction <maximumf>, %53, %cst_32 [1] : vector<8x8xf32> to vector<8xf32>
    %55 = vector.shape_cast %54 : vector<8xf32> to vector<8x1xf32>
    %56 = vector.broadcast %55 : vector<8x1xf32> to vector<8x8xf32>
    %57 = arith.subf %53, %56 : vector<8x8xf32>
    %58 = math.exp %57 : vector<8x8xf32>
    %cst_33 = arith.constant dense<0.000000e+00> : vector<8xf32>
    %59 = vector.multi_reduction <add>, %58, %cst_33 [1] : vector<8x8xf32> to vector<8xf32>
    %60 = vector.shape_cast %59 : vector<8xf32> to vector<8x1xf32>
    %61 = tpu.reciprocal %60 {approx = true} : vector<8x1xf32> -> vector<8x1xf32>
    %62 = vector.broadcast %61 : vector<8x1xf32> to vector<8x8xf32>
    %63 = arith.mulf %58, %62 : vector<8x8xf32>
    %64 = arith.truncf %63 : vector<8x8xf32> to vector<8x8xbf16>
    %65 = vector.extract_strided_slice %21 {offsets = [0, 8], sizes = [8, 8], strides = [1, 1]} : vector<8x32xf32> to vector<8x8xf32>
    %66 = arith.truncf %65 : vector<8x8xf32> to vector<8x8xbf16>
    "tpu.trace_start"() <{level = 10 : i32, message = "qk,kd->qd"}> : () -> ()
    %cst_34 = arith.constant dense<0.000000e+00> : vector<8x8xf32>
    %67 = tpu.matmul %64, %66, %cst_34 {dimension_numbers = #tpu.dot_dimension_numbers<[1], [0], [0], [1], [0, 0, 1, 1], [], []>} : vector<8x8xbf16>, vector<8x8xbf16>, vector<8x8xf32> -> vector<8x8xf32>
    "tpu.trace_stop"() : () -> ()
    %68 = vector.extract_strided_slice %15 {offsets = [0, 16], sizes = [8, 8], strides = [1, 1]} : vector<8x32xf32> to vector<8x8xf32>
    %69 = arith.truncf %68 : vector<8x8xf32> to vector<8x8xbf16>
    %70 = vector.extract_strided_slice %20 {offsets = [0, 16], sizes = [8, 8], strides = [1, 1]} : vector<8x32xf32> to vector<8x8xf32>
    %71 = arith.truncf %70 : vector<8x8xf32> to vector<8x8xbf16>
    "tpu.trace_start"() <{level = 10 : i32, message = "qd,kd->qk"}> : () -> ()
    %cst_35 = arith.constant dense<0.000000e+00> : vector<8x8xf32>
    %72 = tpu.matmul %69, %71, %cst_35 {dimension_numbers = #tpu.dot_dimension_numbers<[1], [1], [0], [0], [0, 0, 1, 0], [], []>} : vector<8x8xbf16>, vector<8x8xbf16>, vector<8x8xf32> -> vector<8x8xf32>
    "tpu.trace_stop"() : () -> ()
    %cst_36 = arith.constant 0.353553385 : f32
    %73 = vector.broadcast %cst_36 : f32 to vector<8x8xf32>
    %74 = arith.mulf %72, %73 : vector<8x8xf32>
    %75 = arith.addf %74, %23 : vector<8x8xf32>
    %cst_37 = arith.constant dense<0xFF800000> : vector<8xf32>
    %76 = vector.multi_reduction <maximumf>, %75, %cst_37 [1] : vector<8x8xf32> to vector<8xf32>
    %77 = vector.shape_cast %76 : vector<8xf32> to vector<8x1xf32>
    %78 = vector.broadcast %77 : vector<8x1xf32> to vector<8x8xf32>
    %79 = arith.subf %75, %78 : vector<8x8xf32>
    %80 = math.exp %79 : vector<8x8xf32>
    %cst_38 = arith.constant dense<0.000000e+00> : vector<8xf32>
    %81 = vector.multi_reduction <add>, %80, %cst_38 [1] : vector<8x8xf32> to vector<8xf32>
    %82 = vector.shape_cast %81 : vector<8xf32> to vector<8x1xf32>
    %83 = tpu.reciprocal %82 {approx = true} : vector<8x1xf32> -> vector<8x1xf32>
    %84 = vector.broadcast %83 : vector<8x1xf32> to vector<8x8xf32>
    %85 = arith.mulf %80, %84 : vector<8x8xf32>
    %86 = arith.truncf %85 : vector<8x8xf32> to vector<8x8xbf16>
    %87 = vector.extract_strided_slice %21 {offsets = [0, 16], sizes = [8, 8], strides = [1, 1]} : vector<8x32xf32> to vector<8x8xf32>
    %88 = arith.truncf %87 : vector<8x8xf32> to vector<8x8xbf16>
    "tpu.trace_start"() <{level = 10 : i32, message = "qk,kd->qd"}> : () -> ()
    %cst_39 = arith.constant dense<0.000000e+00> : vector<8x8xf32>
    %89 = tpu.matmul %86, %88, %cst_39 {dimension_numbers = #tpu.dot_dimension_numbers<[1], [0], [0], [1], [0, 0, 1, 1], [], []>} : vector<8x8xbf16>, vector<8x8xbf16>, vector<8x8xf32> -> vector<8x8xf32>
    "tpu.trace_stop"() : () -> ()
    %90 = vector.extract_strided_slice %15 {offsets = [0, 24], sizes = [8, 8], strides = [1, 1]} : vector<8x32xf32> to vector<8x8xf32>
    %91 = arith.truncf %90 : vector<8x8xf32> to vector<8x8xbf16>
    %92 = vector.extract_strided_slice %20 {offsets = [0, 24], sizes = [8, 8], strides = [1, 1]} : vector<8x32xf32> to vector<8x8xf32>
    %93 = arith.truncf %92 : vector<8x8xf32> to vector<8x8xbf16>
    "tpu.trace_start"() <{level = 10 : i32, message = "qd,kd->qk"}> : () -> ()
    %cst_40 = arith.constant dense<0.000000e+00> : vector<8x8xf32>
    %94 = tpu.matmul %91, %93, %cst_40 {dimension_numbers = #tpu.dot_dimension_numbers<[1], [1], [0], [0], [0, 0, 1, 0], [], []>} : vector<8x8xbf16>, vector<8x8xbf16>, vector<8x8xf32> -> vector<8x8xf32>
    "tpu.trace_stop"() : () -> ()
    %cst_41 = arith.constant 0.353553385 : f32
    %95 = vector.broadcast %cst_41 : f32 to vector<8x8xf32>
    %96 = arith.mulf %94, %95 : vector<8x8xf32>
    %97 = arith.addf %96, %23 : vector<8x8xf32>
    %cst_42 = arith.constant dense<0xFF800000> : vector<8xf32>
    %98 = vector.multi_reduction <maximumf>, %97, %cst_42 [1] : vector<8x8xf32> to vector<8xf32>
    %99 = vector.shape_cast %98 : vector<8xf32> to vector<8x1xf32>
    %100 = vector.broadcast %99 : vector<8x1xf32> to vector<8x8xf32>
    %101 = arith.subf %97, %100 : vector<8x8xf32>
    %102 = math.exp %101 : vector<8x8xf32>
    %cst_43 = arith.constant dense<0.000000e+00> : vector<8xf32>
    %103 = vector.multi_reduction <add>, %102, %cst_43 [1] : vector<8x8xf32> to vector<8xf32>
    %104 = vector.shape_cast %103 : vector<8xf32> to vector<8x1xf32>
    %105 = tpu.reciprocal %104 {approx = true} : vector<8x1xf32> -> vector<8x1xf32>
    %106 = vector.broadcast %105 : vector<8x1xf32> to vector<8x8xf32>
    %107 = arith.mulf %102, %106 : vector<8x8xf32>
    %108 = arith.truncf %107 : vector<8x8xf32> to vector<8x8xbf16>
    %109 = vector.extract_strided_slice %21 {offsets = [0, 24], sizes = [8, 8], strides = [1, 1]} : vector<8x32xf32> to vector<8x8xf32>
    %110 = arith.truncf %109 : vector<8x8xf32> to vector<8x8xbf16>
    "tpu.trace_start"() <{level = 10 : i32, message = "qk,kd->qd"}> : () -> ()
    %cst_44 = arith.constant dense<0.000000e+00> : vector<8x8xf32>
    %111 = tpu.matmul %108, %110, %cst_44 {dimension_numbers = #tpu.dot_dimension_numbers<[1], [0], [0], [1], [0, 0, 1, 1], [], []>} : vector<8x8xbf16>, vector<8x8xbf16>, vector<8x8xf32> -> vector<8x8xf32>
    "tpu.trace_stop"() : () -> ()
    %112 = tpu.concatenate %45, %67, %89, %111 in 1 : vector<8x8xf32>, vector<8x8xf32>, vector<8x8xf32>, vector<8x8xf32> -> vector<8x32xf32>
    %113 = arith.truncf %112 : vector<8x32xf32> to vector<8x32xbf16>
    %cst_45 = arith.constant dense<0.000000e+00> : vector<8x32xf32>
    %114 = tpu.matmul %113, %4, %cst_45 {dimension_numbers = #tpu.dot_dimension_numbers<[1], [0], [0], [1], [0, 0, 1, 1], [], []>} : vector<8x32xbf16>, vector<32x32xbf16>, vector<8x32xf32> -> vector<8x32xf32>
    %115 = vector.broadcast %5 : vector<1x32xf32> to vector<8x32xf32>
    %116 = arith.addf %114, %115 : vector<8x32xf32>
    %117 = arith.addf %9, %116 : vector<8x32xf32>
    %cst_46 = arith.constant dense<0.000000e+00> : vector<8xf32>
    %118 = vector.multi_reduction <add>, %117, %cst_46 [1] : vector<8x32xf32> to vector<8xf32>
    %119 = vector.shape_cast %118 : vector<8xf32> to vector<8x1xf32>
    %cst_47 = arith.constant 3.200000e+01 : f32
    %120 = vector.broadcast %cst_47 : f32 to vector<8x1xf32>
    %121 = arith.divf %119, %120 : vector<8x1xf32>
    %122 = vector.broadcast %121 : vector<8x1xf32> to vector<8x32xf32>
    %123 = arith.subf %117, %122 : vector<8x32xf32>
    %124 = arith.mulf %123, %123 : vector<8x32xf32>
    %cst_48 = arith.constant dense<0.000000e+00> : vector<8xf32>
    %125 = vector.multi_reduction <add>, %124, %cst_48 [1] : vector<8x32xf32> to vector<8xf32>
    %126 = vector.shape_cast %125 : vector<8xf32> to vector<8x1xf32>
    %cst_49 = arith.constant 3.200000e+01 : f32
    %127 = vector.broadcast %cst_49 : f32 to vector<8x1xf32>
    %128 = arith.divf %126, %127 : vector<8x1xf32>
    %129 = vector.broadcast %121 : vector<8x1xf32> to vector<8x32xf32>
    %130 = arith.subf %117, %129 : vector<8x32xf32>
    %cst_50 = arith.constant 9.99999974E-6 : f32
    %131 = vector.broadcast %cst_50 : f32 to vector<8x1xf32>
    %132 = arith.addf %128, %131 : vector<8x1xf32>
    %133 = math.rsqrt %132 : vector<8x1xf32>
    %134 = vector.broadcast %133 : vector<8x1xf32> to vector<8x32xf32>
    %135 = arith.mulf %130, %134 : vector<8x32xf32>
    %136 = vector.broadcast %6 : vector<1x32xf32> to vector<8x32xf32>
    %137 = arith.mulf %135, %136 : vector<8x32xf32>
    %138 = vector.broadcast %7 : vector<1x32xf32> to vector<8x32xf32>
    %139 = arith.addf %137, %138 : vector<8x32xf32>
    %c0_51 = arith.constant 0 : index
    %c0_52 = arith.constant 0 : index
    %c0_53 = arith.constant 0 : index
    %140 = vector.load %arg11[%c0_51, %c0_52, %c0_53] : memref<2x8x32xf32, #tpu.memory_space<vmem>>, vector<1x8x32xf32>
    %141 = vector.shape_cast %140 : vector<1x8x32xf32> to vector<8x32xf32>
    %142 = vector.shape_cast %139 : vector<8x32xf32> to vector<1x8x32xf32>
    tpu.vector_store %arg11[%c0_51, %c0_52, %c0_53], %142 {strides = array<i32>} : memref<2x8x32xf32, #tpu.memory_space<vmem>>, vector<1x8x32xf32>,
    %c1 = arith.constant 1 : index
    %c0_54 = arith.constant 0 : index
    %c0_55 = arith.constant 0 : index
    %143 = vector.load %arg0[%c1, %c0_54, %c0_55] : memref<2x8x32xf32, #tpu.memory_space<vmem>>, vector<1x8x32xf32>
    %144 = vector.shape_cast %143 : vector<1x8x32xf32> to vector<8x32xf32>
    %c1_56 = arith.constant 1 : index
    %c0_57 = arith.constant 0 : index
    %c0_58 = arith.constant 0 : index
    %145 = vector.load %arg1[%c1_56, %c0_57, %c0_58] : memref<2x8x32xf32, #tpu.memory_space<vmem>>, vector<1x8x32xf32>
    %146 = vector.shape_cast %145 : vector<1x8x32xf32> to vector<8x32xf32>
    %147 = arith.truncf %144 : vector<8x32xf32> to vector<8x32xbf16>
    %cst_59 = arith.constant dense<0.000000e+00> : vector<8x32xf32>
    %148 = tpu.matmul %147, %0, %cst_59 {dimension_numbers = #tpu.dot_dimension_numbers<[1], [0], [0], [1], [0, 0, 1, 1], [], []>} : vector<8x32xbf16>, vector<32x32xbf16>, vector<8x32xf32> -> vector<8x32xf32>
    %149 = vector.broadcast %1 : vector<1x32xf32> to vector<8x32xf32>
    %150 = arith.addf %148, %149 : vector<8x32xf32>
    %151 = arith.truncf %146 : vector<8x32xf32> to vector<8x32xbf16>
    %cst_60 = arith.constant dense<0.000000e+00> : vector<8x64xf32>
    %152 = tpu.matmul %151, %2, %cst_60 {dimension_numbers = #tpu.dot_dimension_numbers<[1], [0], [0], [1], [0, 0, 1, 1], [], []>} : vector<8x32xbf16>, vector<32x64xbf16>, vector<8x64xf32> -> vector<8x64xf32>
    %153 = vector.broadcast %3 : vector<1x64xf32> to vector<8x64xf32>
    %154 = arith.addf %152, %153 : vector<8x64xf32>
    %155 = vector.extract_strided_slice %154 {offsets = [0, 0], sizes = [8, 32], strides = [1, 1]} : vector<8x64xf32> to vector<8x32xf32>
    %156 = vector.extract_strided_slice %154 {offsets = [0, 32], sizes = [8, 32], strides = [1, 1]} : vector<8x64xf32> to vector<8x32xf32>
    %c1_61 = arith.constant 1 : index
    %c0_62 = arith.constant 0 : index
    %c0_63 = arith.constant 0 : index
    %157 = vector.load %arg2[%c1_61, %c0_62, %c0_63] : memref<2x8x8xf32, #tpu.memory_space<vmem>>, vector<1x8x8xf32>
    %158 = vector.shape_cast %157 : vector<1x8x8xf32> to vector<8x8xf32>
    %159 = vector.extract_strided_slice %150 {offsets = [0, 0], sizes = [8, 8], strides = [1, 1]} : vector<8x32xf32> to vector<8x8xf32>
    %160 = arith.truncf %159 : vector<8x8xf32> to vector<8x8xbf16>
    %161 = vector.extract_strided_slice %155 {offsets = [0, 0], sizes = [8, 8], strides = [1, 1]} : vector<8x32xf32> to vector<8x8xf32>
    %162 = arith.truncf %161 : vector<8x8xf32> to vector<8x8xbf16>
    "tpu.trace_start"() <{level = 10 : i32, message = "qd,kd->qk"}> : () -> ()
    %cst_64 = arith.constant dense<0.000000e+00> : vector<8x8xf32>
    %163 = tpu.matmul %160, %162, %cst_64 {dimension_numbers = #tpu.dot_dimension_numbers<[1], [1], [0], [0], [0, 0, 1, 0], [], []>} : vector<8x8xbf16>, vector<8x8xbf16>, vector<8x8xf32> -> vector<8x8xf32>
    "tpu.trace_stop"() : () -> ()
    %cst_65 = arith.constant 0.353553385 : f32
    %164 = vector.broadcast %cst_65 : f32 to vector<8x8xf32>
    %165 = arith.mulf %163, %164 : vector<8x8xf32>
    %166 = arith.addf %165, %158 : vector<8x8xf32>
    %cst_66 = arith.constant dense<0xFF800000> : vector<8xf32>
    %167 = vector.multi_reduction <maximumf>, %166, %cst_66 [1] : vector<8x8xf32> to vector<8xf32>
    %168 = vector.shape_cast %167 : vector<8xf32> to vector<8x1xf32>
    %169 = vector.broadcast %168 : vector<8x1xf32> to vector<8x8xf32>
    %170 = arith.subf %166, %169 : vector<8x8xf32>
    %171 = math.exp %170 : vector<8x8xf32>
    %cst_67 = arith.constant dense<0.000000e+00> : vector<8xf32>
    %172 = vector.multi_reduction <add>, %171, %cst_67 [1] : vector<8x8xf32> to vector<8xf32>
    %173 = vector.shape_cast %172 : vector<8xf32> to vector<8x1xf32>
    %174 = tpu.reciprocal %173 {approx = true} : vector<8x1xf32> -> vector<8x1xf32>
    %175 = vector.broadcast %174 : vector<8x1xf32> to vector<8x8xf32>
    %176 = arith.mulf %171, %175 : vector<8x8xf32>
    %177 = arith.truncf %176 : vector<8x8xf32> to vector<8x8xbf16>
    %178 = vector.extract_strided_slice %156 {offsets = [0, 0], sizes = [8, 8], strides = [1, 1]} : vector<8x32xf32> to vector<8x8xf32>
    %179 = arith.truncf %178 : vector<8x8xf32> to vector<8x8xbf16>
    "tpu.trace_start"() <{level = 10 : i32, message = "qk,kd->qd"}> : () -> ()
    %cst_68 = arith.constant dense<0.000000e+00> : vector<8x8xf32>
    %180 = tpu.matmul %177, %179, %cst_68 {dimension_numbers = #tpu.dot_dimension_numbers<[1], [0], [0], [1], [0, 0, 1, 1], [], []>} : vector<8x8xbf16>, vector<8x8xbf16>, vector<8x8xf32> -> vector<8x8xf32>
    "tpu.trace_stop"() : () -> ()
    %181 = vector.extract_strided_slice %150 {offsets = [0, 8], sizes = [8, 8], strides = [1, 1]} : vector<8x32xf32> to vector<8x8xf32>
    %182 = arith.truncf %181 : vector<8x8xf32> to vector<8x8xbf16>
    %183 = vector.extract_strided_slice %155 {offsets = [0, 8], sizes = [8, 8], strides = [1, 1]} : vector<8x32xf32> to vector<8x8xf32>
    %184 = arith.truncf %183 : vector<8x8xf32> to vector<8x8xbf16>
    "tpu.trace_start"() <{level = 10 : i32, message = "qd,kd->qk"}> : () -> ()
    %cst_69 = arith.constant dense<0.000000e+00> : vector<8x8xf32>
    %185 = tpu.matmul %182, %184, %cst_69 {dimension_numbers = #tpu.dot_dimension_numbers<[1], [1], [0], [0], [0, 0, 1, 0], [], []>} : vector<8x8xbf16>, vector<8x8xbf16>, vector<8x8xf32> -> vector<8x8xf32>
    "tpu.trace_stop"() : () -> ()
    %cst_70 = arith.constant 0.353553385 : f32
    %186 = vector.broadcast %cst_70 : f32 to vector<8x8xf32>
    %187 = arith.mulf %185, %186 : vector<8x8xf32>
    %188 = arith.addf %187, %158 : vector<8x8xf32>
    %cst_71 = arith.constant dense<0xFF800000> : vector<8xf32>
    %189 = vector.multi_reduction <maximumf>, %188, %cst_71 [1] : vector<8x8xf32> to vector<8xf32>
    %190 = vector.shape_cast %189 : vector<8xf32> to vector<8x1xf32>
    %191 = vector.broadcast %190 : vector<8x1xf32> to vector<8x8xf32>
    %192 = arith.subf %188, %191 : vector<8x8xf32>
    %193 = math.exp %192 : vector<8x8xf32>
    %cst_72 = arith.constant dense<0.000000e+00> : vector<8xf32>
    %194 = vector.multi_reduction <add>, %193, %cst_72 [1] : vector<8x8xf32> to vector<8xf32>
    %195 = vector.shape_cast %194 : vector<8xf32> to vector<8x1xf32>
    %196 = tpu.reciprocal %195 {approx = true} : vector<8x1xf32> -> vector<8x1xf32>
    %197 = vector.broadcast %196 : vector<8x1xf32> to vector<8x8xf32>
    %198 = arith.mulf %193, %197 : vector<8x8xf32>
    %199 = arith.truncf %198 : vector<8x8xf32> to vector<8x8xbf16>
    %200 = vector.extract_strided_slice %156 {offsets = [0, 8], sizes = [8, 8], strides = [1, 1]} : vector<8x32xf32> to vector<8x8xf32>
    %201 = arith.truncf %200 : vector<8x8xf32> to vector<8x8xbf16>
    "tpu.trace_start"() <{level = 10 : i32, message = "qk,kd->qd"}> : () -> ()
    %cst_73 = arith.constant dense<0.000000e+00> : vector<8x8xf32>
    %202 = tpu.matmul %199, %201, %cst_73 {dimension_numbers = #tpu.dot_dimension_numbers<[1], [0], [0], [1], [0, 0, 1, 1], [], []>} : vector<8x8xbf16>, vector<8x8xbf16>, vector<8x8xf32> -> vector<8x8xf32>
    "tpu.trace_stop"() : () -> ()
    %203 = vector.extract_strided_slice %150 {offsets = [0, 16], sizes = [8, 8], strides = [1, 1]} : vector<8x32xf32> to vector<8x8xf32>
    %204 = arith.truncf %203 : vector<8x8xf32> to vector<8x8xbf16>
    %205 = vector.extract_strided_slice %155 {offsets = [0, 16], sizes = [8, 8], strides = [1, 1]} : vector<8x32xf32> to vector<8x8xf32>
    %206 = arith.truncf %205 : vector<8x8xf32> to vector<8x8xbf16>
    "tpu.trace_start"() <{level = 10 : i32, message = "qd,kd->qk"}> : () -> ()
    %cst_74 = arith.constant dense<0.000000e+00> : vector<8x8xf32>
    %207 = tpu.matmul %204, %206, %cst_74 {dimension_numbers = #tpu.dot_dimension_numbers<[1], [1], [0], [0], [0, 0, 1, 0], [], []>} : vector<8x8xbf16>, vector<8x8xbf16>, vector<8x8xf32> -> vector<8x8xf32>
    "tpu.trace_stop"() : () -> ()
    %cst_75 = arith.constant 0.353553385 : f32
    %208 = vector.broadcast %cst_75 : f32 to vector<8x8xf32>
    %209 = arith.mulf %207, %208 : vector<8x8xf32>
    %210 = arith.addf %209, %158 : vector<8x8xf32>
    %cst_76 = arith.constant dense<0xFF800000> : vector<8xf32>
    %211 = vector.multi_reduction <maximumf>, %210, %cst_76 [1] : vector<8x8xf32> to vector<8xf32>
    %212 = vector.shape_cast %211 : vector<8xf32> to vector<8x1xf32>
    %213 = vector.broadcast %212 : vector<8x1xf32> to vector<8x8xf32>
    %214 = arith.subf %210, %213 : vector<8x8xf32>
    %215 = math.exp %214 : vector<8x8xf32>
    %cst_77 = arith.constant dense<0.000000e+00> : vector<8xf32>
    %216 = vector.multi_reduction <add>, %215, %cst_77 [1] : vector<8x8xf32> to vector<8xf32>
    %217 = vector.shape_cast %216 : vector<8xf32> to vector<8x1xf32>
    %218 = tpu.reciprocal %217 {approx = true} : vector<8x1xf32> -> vector<8x1xf32>
    %219 = vector.broadcast %218 : vector<8x1xf32> to vector<8x8xf32>
    %220 = arith.mulf %215, %219 : vector<8x8xf32>
    %221 = arith.truncf %220 : vector<8x8xf32> to vector<8x8xbf16>
    %222 = vector.extract_strided_slice %156 {offsets = [0, 16], sizes = [8, 8], strides = [1, 1]} : vector<8x32xf32> to vector<8x8xf32>
    %223 = arith.truncf %222 : vector<8x8xf32> to vector<8x8xbf16>
    "tpu.trace_start"() <{level = 10 : i32, message = "qk,kd->qd"}> : () -> ()
    %cst_78 = arith.constant dense<0.000000e+00> : vector<8x8xf32>
    %224 = tpu.matmul %221, %223, %cst_78 {dimension_numbers = #tpu.dot_dimension_numbers<[1], [0], [0], [1], [0, 0, 1, 1], [], []>} : vector<8x8xbf16>, vector<8x8xbf16>, vector<8x8xf32> -> vector<8x8xf32>
    "tpu.trace_stop"() : () -> ()
    %225 = vector.extract_strided_slice %150 {offsets = [0, 24], sizes = [8, 8], strides = [1, 1]} : vector<8x32xf32> to vector<8x8xf32>
    %226 = arith.truncf %225 : vector<8x8xf32> to vector<8x8xbf16>
    %227 = vector.extract_strided_slice %155 {offsets = [0, 24], sizes = [8, 8], strides = [1, 1]} : vector<8x32xf32> to vector<8x8xf32>
    %228 = arith.truncf %227 : vector<8x8xf32> to vector<8x8xbf16>
    "tpu.trace_start"() <{level = 10 : i32, message = "qd,kd->qk"}> : () -> ()
    %cst_79 = arith.constant dense<0.000000e+00> : vector<8x8xf32>
    %229 = tpu.matmul %226, %228, %cst_79 {dimension_numbers = #tpu.dot_dimension_numbers<[1], [1], [0], [0], [0, 0, 1, 0], [], []>} : vector<8x8xbf16>, vector<8x8xbf16>, vector<8x8xf32> -> vector<8x8xf32>
    "tpu.trace_stop"() : () -> ()
    %cst_80 = arith.constant 0.353553385 : f32
    %230 = vector.broadcast %cst_80 : f32 to vector<8x8xf32>
    %231 = arith.mulf %229, %230 : vector<8x8xf32>
    %232 = arith.addf %231, %158 : vector<8x8xf32>
    %cst_81 = arith.constant dense<0xFF800000> : vector<8xf32>
    %233 = vector.multi_reduction <maximumf>, %232, %cst_81 [1] : vector<8x8xf32> to vector<8xf32>
    %234 = vector.shape_cast %233 : vector<8xf32> to vector<8x1xf32>
    %235 = vector.broadcast %234 : vector<8x1xf32> to vector<8x8xf32>
    %236 = arith.subf %232, %235 : vector<8x8xf32>
    %237 = math.exp %236 : vector<8x8xf32>
    %cst_82 = arith.constant dense<0.000000e+00> : vector<8xf32>
    %238 = vector.multi_reduction <add>, %237, %cst_82 [1] : vector<8x8xf32> to vector<8xf32>
    %239 = vector.shape_cast %238 : vector<8xf32> to vector<8x1xf32>
    %240 = tpu.reciprocal %239 {approx = true} : vector<8x1xf32> -> vector<8x1xf32>
    %241 = vector.broadcast %240 : vector<8x1xf32> to vector<8x8xf32>
    %242 = arith.mulf %237, %241 : vector<8x8xf32>
    %243 = arith.truncf %242 : vector<8x8xf32> to vector<8x8xbf16>
    %244 = vector.extract_strided_slice %156 {offsets = [0, 24], sizes = [8, 8], strides = [1, 1]} : vector<8x32xf32> to vector<8x8xf32>
    %245 = arith.truncf %244 : vector<8x8xf32> to vector<8x8xbf16>
    "tpu.trace_start"() <{level = 10 : i32, message = "qk,kd->qd"}> : () -> ()
    %cst_83 = arith.constant dense<0.000000e+00> : vector<8x8xf32>
    %246 = tpu.matmul %243, %245, %cst_83 {dimension_numbers = #tpu.dot_dimension_numbers<[1], [0], [0], [1], [0, 0, 1, 1], [], []>} : vector<8x8xbf16>, vector<8x8xbf16>, vector<8x8xf32> -> vector<8x8xf32>
    "tpu.trace_stop"() : () -> ()
    %247 = tpu.concatenate %180, %202, %224, %246 in 1 : vector<8x8xf32>, vector<8x8xf32>, vector<8x8xf32>, vector<8x8xf32> -> vector<8x32xf32>
    %248 = arith.truncf %247 : vector<8x32xf32> to vector<8x32xbf16>
    %cst_84 = arith.constant dense<0.000000e+00> : vector<8x32xf32>
    %249 = tpu.matmul %248, %4, %cst_84 {dimension_numbers = #tpu.dot_dimension_numbers<[1], [0], [0], [1], [0, 0, 1, 1], [], []>} : vector<8x32xbf16>, vector<32x32xbf16>, vector<8x32xf32> -> vector<8x32xf32>
    %250 = vector.broadcast %5 : vector<1x32xf32> to vector<8x32xf32>
    %251 = arith.addf %249, %250 : vector<8x32xf32>
    %252 = arith.addf %144, %251 : vector<8x32xf32>
    %cst_85 = arith.constant dense<0.000000e+00> : vector<8xf32>
    %253 = vector.multi_reduction <add>, %252, %cst_85 [1] : vector<8x32xf32> to vector<8xf32>
    %254 = vector.shape_cast %253 : vector<8xf32> to vector<8x1xf32>
    %cst_86 = arith.constant 3.200000e+01 : f32
    %255 = vector.broadcast %cst_86 : f32 to vector<8x1xf32>
    %256 = arith.divf %254, %255 : vector<8x1xf32>
    %257 = vector.broadcast %256 : vector<8x1xf32> to vector<8x32xf32>
    %258 = arith.subf %252, %257 : vector<8x32xf32>
    %259 = arith.mulf %258, %258 : vector<8x32xf32>
    %cst_87 = arith.constant dense<0.000000e+00> : vector<8xf32>
    %260 = vector.multi_reduction <add>, %259, %cst_87 [1] : vector<8x32xf32> to vector<8xf32>
    %261 = vector.shape_cast %260 : vector<8xf32> to vector<8x1xf32>
    %cst_88 = arith.constant 3.200000e+01 : f32
    %262 = vector.broadcast %cst_88 : f32 to vector<8x1xf32>
    %263 = arith.divf %261, %262 : vector<8x1xf32>
    %264 = vector.broadcast %256 : vector<8x1xf32> to vector<8x32xf32>
    %265 = arith.subf %252, %264 : vector<8x32xf32>
    %cst_89 = arith.constant 9.99999974E-6 : f32
    %266 = vector.broadcast %cst_89 : f32 to vector<8x1xf32>
    %267 = arith.addf %263, %266 : vector<8x1xf32>
    %268 = math.rsqrt %267 : vector<8x1xf32>
    %269 = vector.broadcast %268 : vector<8x1xf32> to vector<8x32xf32>
    %270 = arith.mulf %265, %269 : vector<8x32xf32>
    %271 = vector.broadcast %6 : vector<1x32xf32> to vector<8x32xf32>
    %272 = arith.mulf %270, %271 : vector<8x32xf32>
    %273 = vector.broadcast %7 : vector<1x32xf32> to vector<8x32xf32>
    %274 = arith.addf %272, %273 : vector<8x32xf32>
    %c1_90 = arith.constant 1 : index
    %c0_91 = arith.constant 0 : index
    %c0_92 = arith.constant 0 : index
    %275 = vector.load %arg11[%c1_90, %c0_91, %c0_92] : memref<2x8x32xf32, #tpu.memory_space<vmem>>, vector<1x8x32xf32>
    %276 = vector.shape_cast %275 : vector<1x8x32xf32> to vector<8x32xf32>
    %277 = vector.shape_cast %274 : vector<8x32xf32> to vector<1x8x32xf32>
    tpu.vector_store %arg11[%c1_90, %c0_91, %c0_92], %277 {strides = array<i32>} : memref<2x8x32xf32, #tpu.memory_space<vmem>>, vector<1x8x32xf32>,
    return
  }
}

</mosaic_0001>

<llo_original>
// kernel: forward.15
$region0: #{forward.15}
  #allocation0 [shape = 'u32[]', space=smem, size = 0x4, offset = 0x4, fixed_abs, tag = 'smem constant byte address 0x4 - core index']
  #allocation1 [shape = 'u32[144,128]{1,0:T(1,128)}', space=vmem, size = 0x12000, scoped, tag = 'internal scratch']
  %s0 = inlined_call_operand.vmem [shape: f32[2,8,32], index: 0, kind: input, shape index: {}]
  %s1 = inlined_call_operand.vmem [shape: f32[1,8,32], index: 1, kind: input, shape index: {}]
  %s2 = inlined_call_operand.vmem [shape: f32[2,8,32], index: 2, kind: output, shape index: {}]
  %s3 = sld [smem:[#allocation0]]
  $region18: #{forward.15} parent=0
    _
  %s5 = ssub.s32 1, %s3
  %s6 = scalar_select 0, %s5, %s3
  // Predicated region
  $region2: #{forward.15} parent=0 // pred_check
    _
  $region3: #{forward.15} parent=0 // pred_check_branch
    %8 = sbr.rel (0) target = $region5
  $region4: #{forward.15} parent=0 // pred_region
    _
  $region5: #{forward.15} parent=0 // pred_fallthru
    _
  // Predicated region
  $region6: #{forward.15} parent=0 // pred_check
    _
  $region7: #{forward.15} parent=0 // pred_check_branch
    %10 = sbr.rel (0) target = $region9
  $region8: #{forward.15} parent=0 // pred_region
    _
  $region9: #{forward.15} parent=0 // pred_fallthru
    _
  %v11 = vld [vmem:[%s0] sm:$0xff]
  %v12 = vld [vmem:[%s0 + $0x8] sm:$0xff]
  %v13 = vmul.f32 %v11, 5.656854
  %v14 = vmul.f32 %v12, 5.656854
  %v15 = vld [vmem:[%s1] sm:$0xff]
  %v16 = vadd.f32 %v13, %v15
  %v17 = vadd.f32 %v14, %v15
  %vm18 = vcmask 261120
  %19 = vst.msk [vmem:[%s2] sm:$0xff] %vm18, %v16
  %20 = vst.msk [vmem:[%s2 + $0x8] sm:$0xff] %vm18, %v17
  // Predicated region
  $region10: #{forward.15} parent=0 // pred_check
    _
  $region11: #{forward.15} parent=0 // pred_check_branch
    %22 = sbr.rel (0) target = $region13
  $region12: #{forward.15} parent=0 // pred_region
    _
  $region13: #{forward.15} parent=0 // pred_fallthru
    _
  // Predicated region
  $region14: #{forward.15} parent=0 // pred_check
    _
  $region15: #{forward.15} parent=0 // pred_check_branch
    %24 = sbr.rel (0) target = $region17
  $region16: #{forward.15} parent=0 // pred_region
    _
  $region17: #{forward.15} parent=0 // pred_fallthru
    _

// kernel: forward.21
$region0: #{forward.21}
  #allocation0 [shape = 'u32[]', space=smem, size = 0x4, offset = 0x4, fixed_abs, tag = 'smem constant byte address 0x4 - core index']
  #allocation1 [shape = 'u32[144,128]{1,0:T(1,128)}', space=vmem, size = 0x12000, scoped, tag = 'internal scratch']
  %s0 = inlined_call_operand.vmem [shape: f32[16,32], index: 0, kind: input, shape index: {}]
  %s1 = inlined_call_operand.vmem [shape: f32[1,32], index: 1, kind: input, shape index: {}]
  %s2 = inlined_call_operand.vmem [shape: f32[1,32], index: 2, kind: input, shape index: {}]
  %s3 = inlined_call_operand.vmem [shape: f32[16,32], index: 3, kind: output, shape index: {}]
  %s4 = sld [smem:[#allocation0]]
  $region22: #{forward.21} parent=0
    _
  %s6 = ssub.s32 1, %s4
  %s7 = scalar_select 0, %s6, %s4
  // Predicated region
  $region2: #{forward.21} parent=0 // pred_check
    _
  $region3: #{forward.21} parent=0 // pred_check_branch
    %9 = sbr.rel (0) target = $region5
  $region4: #{forward.21} parent=0 // pred_region
    _
  $region5: #{forward.21} parent=0 // pred_fallthru
    _
  // Predicated region
  $region6: #{forward.21} parent=0 // pred_check
    _
  $region7: #{forward.21} parent=0 // pred_check_branch
    %11 = sbr.rel (0) target = $region9
  $region8: #{forward.21} parent=0 // pred_region
    _
  $region9: #{forward.21} parent=0 // pred_fallthru
    _
  // Predicated region
  $region10: #{forward.21} parent=0 // pred_check
    _
  $region11: #{forward.21} parent=0 // pred_check_branch
    %13 = sbr.rel (0) target = $region13
  $region12: #{forward.21} parent=0 // pred_region
    _
  $region13: #{forward.21} parent=0 // pred_fallthru
    _
  %v14 = vld [vmem:[%s0] sm:$0xff]
  %v15 = vld [vmem:[%s0 + $0x8] sm:$0xff]
  %v16 = vld [vmem:[%s1] sm:$0x1]
  %v17 = vld [vmem:[%s2] sm:$0x1]
  %vm18 = vcmask 261120
  %v19 = vsel %vm18, %v14, 0.0
  %20 = vadd.xlane.f32.xlu0 %v19
  %v21 = vpop.xlane.xlu0 %20
  %v22 = vsel %vm18, %v15, 0.0
  %23 = vadd.xlane.f32.xlu0 %v22
  %v24 = vpop.xlane.xlu0 %23
  %v25 = vrcp.pop 32.0
  %v26 = vmul.f32 %v21, %v25
  %v27 = vmul.f32 %v24, %v25
  %v28 = vsub.f32 %v14, %v26
  %v29 = vsub.f32 %v15, %v27
  %v30 = vmul.f32 %v28, %v28
  %v31 = vmul.f32 %v29, %v29
  %v32 = vsel %vm18, %v30, 0.0
  %33 = vadd.xlane.f32.xlu0 %v32
  %v34 = vpop.xlane.xlu0 %33
  %v35 = vsel %vm18, %v31, 0.0
  %36 = vadd.xlane.f32.xlu0 %v35
  %v37 = vpop.xlane.xlu0 %36
  %v38 = vmul.f32 %v34, %v25
  %v39 = vmul.f32 %v37, %v25
  %v40 = vadd.f32 %v38, 1e-05
  %v41 = vadd.f32 %v39, 1e-05
  %v42 = vrsqrt.pop %v40
  %v43 = vrsqrt.pop %v41
  %v44 = vmul.f32 %v28, %v42
  %v45 = vmul.f32 %v29, %v43
  %v47 = vlaneseq
  %v48 = vshrl.u32 %v47, 7
  %v49 = vsub.s32 0, %v48
  %v50 = vrot.slane %v16, %v49
  %v52 = vmul.f32 %v44, %v50
  %v53 = vmul.f32 %v45, %v50
  %v55 = vlaneseq
  %v56 = vshrl.u32 %v55, 7
  %v57 = vsub.s32 0, %v56
  %v58 = vrot.slane %v17, %v57
  %v60 = vadd.f32 %v52, %v58
  %v61 = vadd.f32 %v53, %v58
  %62 = vst.msk [vmem:[%s3] sm:$0xff] %vm18, %v60
  %63 = vst.msk [vmem:[%s3 + $0x8] sm:$0xff] %vm18, %v61
  // Predicated region
  $region14: #{forward.21} parent=0 // pred_check
    _
  $region15: #{forward.21} parent=0 // pred_check_branch
    %65 = sbr.rel (0) target = $region17
  $region16: #{forward.21} parent=0 // pred_region
    _
  $region17: #{forward.21} parent=0 // pred_fallthru
    _
  // Predicated region
  $region18: #{forward.21} parent=0 // pred_check
    _
  $region19: #{forward.21} parent=0 // pred_check_branch
    %67 = sbr.rel (0) target = $region21
  $region20: #{forward.21} parent=0 // pred_region
    _
  $region21: #{forward.21} parent=0 // pred_fallthru
    _

// kernel: forward.18
$region0: #{forward.18}
  #allocation0 [shape = 'u32[]', space=smem, size = 0x4, offset = 0x4, fixed_abs, tag = 'smem constant byte address 0x4 - core index']
  #allocation1 [shape = 'u32[144,128]{1,0:T(1,128)}', space=vmem, size = 0x12000, scoped, tag = 'internal scratch']
  %s0 = inlined_call_operand.vmem [shape: f32[16,32], index: 0, kind: input, shape index: {}]
  %s1 = inlined_call_operand.vmem [shape: bf16[32,64], index: 1, kind: input, shape index: {}]
  %s2 = inlined_call_operand.vmem [shape: f32[1,64], index: 2, kind: input, shape index: {}]
  %s3 = inlined_call_operand.vmem [shape: bf16[64,32], index: 3, kind: input, shape index: {}]
  %s4 = inlined_call_operand.vmem [shape: f32[1,32], index: 4, kind: input, shape index: {}]
  %s5 = inlined_call_operand.vmem [shape: f32[1,32], index: 5, kind: input, shape index: {}]
  %s6 = inlined_call_operand.vmem [shape: f32[1,32], index: 6, kind: input, shape index: {}]
  %s7 = inlined_call_operand.vmem [shape: f32[16,32], index: 7, kind: output, shape index: {}]
  %s8 = sld [smem:[#allocation0]]
  $region38: #{forward.18} parent=0
    _
  %s10 = ssub.s32 1, %s8
  %s11 = scalar_select 0, %s10, %s8
  // Predicated region
  $region2: #{forward.18} parent=0 // pred_check
    _
  $region3: #{forward.18} parent=0 // pred_check_branch
    %13 = sbr.rel (0) target = $region5
  $region4: #{forward.18} parent=0 // pred_region
    _
  $region5: #{forward.18} parent=0 // pred_fallthru
    _
  // Predicated region
  $region6: #{forward.18} parent=0 // pred_check
    _
  $region7: #{forward.18} parent=0 // pred_check_branch
    %15 = sbr.rel (0) target = $region9
  $region8: #{forward.18} parent=0 // pred_region
    _
  $region9: #{forward.18} parent=0 // pred_fallthru
    _
  // Predicated region
  $region10: #{forward.18} parent=0 // pred_check
    _
  $region11: #{forward.18} parent=0 // pred_check_branch
    %17 = sbr.rel (0) target = $region13
  $region12: #{forward.18} parent=0 // pred_region
    _
  $region13: #{forward.18} parent=0 // pred_fallthru
    _
  // Predicated region
  $region14: #{forward.18} parent=0 // pred_check
    _
  $region15: #{forward.18} parent=0 // pred_check_branch
    %19 = sbr.rel (0) target = $region17
  $region16: #{forward.18} parent=0 // pred_region
    _
  $region17: #{forward.18} parent=0 // pred_fallthru
    _
  // Predicated region
  $region18: #{forward.18} parent=0 // pred_check
    _
  $region19: #{forward.18} parent=0 // pred_check_branch
    %21 = sbr.rel (0) target = $region21
  $region20: #{forward.18} parent=0 // pred_region
    _
  $region21: #{forward.18} parent=0 // pred_fallthru
    _
  // Predicated region
  $region22: #{forward.18} parent=0 // pred_check
    _
  $region23: #{forward.18} parent=0 // pred_check_branch
    %23 = sbr.rel (0) target = $region25
  $region24: #{forward.18} parent=0 // pred_region
    _
  $region25: #{forward.18} parent=0 // pred_fallthru
    _
  // Predicated region
  $region26: #{forward.18} parent=0 // pred_check
    _
  $region27: #{forward.18} parent=0 // pred_check_branch
    %25 = sbr.rel (0) target = $region29
  $region28: #{forward.18} parent=0 // pred_region
    _
  $region29: #{forward.18} parent=0 // pred_fallthru
    _
  %v27 = vld [vmem:[%s0] sm:$0xff]
  %v28 = vld [vmem:[%s0 + $0x8] sm:$0xff]
  %v29 = vld [vmem:[%s1] sm:$0xf]
  %v30 = vld [vmem:[%s1 + $0x4] sm:$0xf]
  %v31 = vld [vmem:[%s1 + $0x8] sm:$0xf]
  %v32 = vld [vmem:[%s1 + $0xc] sm:$0xf]
  %v33 = vld [vmem:[%s2] sm:$0x1]
  %v34 = vpack.c.bf16 %v28, %v27
  %v36 = vlaneseq
  %v37 = vshrl.u32 %v36, 7
  %v38 = vsub.s32 0, %v37
  %v39 = vrot.slane %v33, %v38
  %v45 = vunpack.c.l.b16 %v29
  %v46 = vunpack.c.l.b16 %v30
  %v47 = vunpack.c.l.b16 %v31
  %v48 = vunpack.c.l.b16 %v32
  %v49 = vpack.c.b16 %v46, %v45
  %v50 = vpack.c.b16 %v48, %v47
  %vm53 = vcmask 261120
  %v55 = vsel %vm53, %v34, 0
  %57 = vmatprep.subr.bf16.mxu0 0
  %58 = vmatpush1.bf16.msra.mxu0 %v49
  %59 = vmatprep.subr.bf16.mxu0 0
  %60 = vmatpush1.bf16.msra.mxu0 %v50
  %61 = vmatprep.subr.bf16.mxu0 0
  %62 = vmatpush1.bf16.msra.mxu0 0
  %63 = vmatprep.subr.bf16.mxu0 0
  %64 = vmatpush1.bf16.msra.mxu0 0
  %65 = vmatprep.subr.bf16.mxu0 0
  %66 = vmatpush1.bf16.msra.mxu0 0
  %67 = vmatprep.subr.bf16.mxu0 0
  %68 = vmatpush1.bf16.msra.mxu0 0
  %69 = vmatprep.subr.bf16.mxu0 0
  %70 = vmatpush1.bf16.msra.mxu0 0
  %71 = vmatprep.subr.bf16.mxu0 0
  %72 = vmatpush1.bf16.msra.mxu0 0
  %73 = vmatprep.subr.bf16.mxu0 0
  %74 = vmatpush1.bf16.msra.mxu0 0
  %75 = vmatprep.subr.bf16.mxu0 0
  %76 = vmatpush1.bf16.msra.mxu0 0
  %77 = vmatprep.subr.bf16.mxu0 0
  %78 = vmatpush1.bf16.msra.mxu0 0
  %79 = vmatprep.subr.bf16.mxu0 0
  %80 = vmatpush1.bf16.msra.mxu0 0
  %81 = vmatprep.subr.bf16.mxu0 0
  %82 = vmatpush1.bf16.msra.mxu0 0
  %83 = vmatprep.subr.bf16.mxu0 0
  %84 = vmatpush1.bf16.msra.mxu0 0
  %85 = vmatprep.subr.bf16.mxu0 0
  %86 = vmatpush1.bf16.msra.mxu0 0
  %87 = vmatprep.subr.bf16.mxu0 0
  %88 = vmatpush1.bf16.msra.mxu0 0
  %89 = vmatprep.mubr.bf16.mxu0 0
  %90 = vmatmul.mubr.bf16.gmra.mrb[0].mxu0 %v55
  %v91 = vpop.f32.mrb[0].mxu0
  %v92 = vadd.f32 %v39, %v91
  %v93 = vpop.f32.mrb[0].mxu0
  %v94 = vpop.f32.mrb[0].mxu0
  %v95 = vadd.f32 %v39, %v94
  %v96 = vpop.f32.mrb[0].mxu0
  %97 = vdwg.mxu0
  %v98 = vmax.f32 %v92, 0.0
  %v99 = vmax.f32 %v95, 0.0
  %v100 = vld [vmem:[%s3] sm:$0xf]
  %v101 = vld [vmem:[%s3 + $0x4] sm:$0xf]
  %v102 = vld [vmem:[%s3 + $0x8] sm:$0xf]
  %v103 = vld [vmem:[%s3 + $0xc] sm:$0xf]
  %v104 = vld [vmem:[%s3 + $0x10] sm:$0xf]
  %v105 = vld [vmem:[%s3 + $0x14] sm:$0xf]
  %v106 = vld [vmem:[%s3 + $0x18] sm:$0xf]
  %v107 = vld [vmem:[%s3 + $0x1c] sm:$0xf]
  %v108 = vld [vmem:[%s4] sm:$0x1]
  %v109 = vpack.c.bf16 %v99, %v98
  %v111 = vlaneseq
  %v112 = vshrl.u32 %v111, 7
  %v113 = vsub.s32 0, %v112
  %v114 = vrot.slane %v108, %v113
  %v124 = vunpack.c.l.b16 %v100
  %v125 = vunpack.c.l.b16 %v101
  %v126 = vunpack.c.l.b16 %v102
  %v127 = vunpack.c.l.b16 %v103
  %v128 = vunpack.c.l.b16 %v104
  %v129 = vunpack.c.l.b16 %v105
  %v130 = vunpack.c.l.b16 %v106
  %v131 = vunpack.c.l.b16 %v107
  %v132 = vpack.c.b16 %v125, %v124
  %v133 = vpack.c.b16 %v127, %v126
  %v134 = vpack.c.b16 %v129, %v128
  %v135 = vpack.c.b16 %v131, %v130
  %vm140 = vcmask 523264
  %v142 = vsel %vm140, %v109, 0
  %144 = vmatprep.subr.bf16.mxu0 0
  %145 = vmatpush1.bf16.msra.mxu0 %v132
  %146 = vmatprep.subr.bf16.mxu0 0
  %147 = vmatpush1.bf16.msra.mxu0 %v133
  %148 = vmatprep.subr.bf16.mxu0 0
  %149 = vmatpush1.bf16.msra.mxu0 %v134
  %150 = vmatprep.subr.bf16.mxu0 0
  %151 = vmatpush1.bf16.msra.mxu0 %v135
  %152 = vmatprep.subr.bf16.mxu0 0
  %153 = vmatpush1.bf16.msra.mxu0 0
  %154 = vmatprep.subr.bf16.mxu0 0
  %155 = vmatpush1.bf16.msra.mxu0 0
  %156 = vmatprep.subr.bf16.mxu0 0
  %157 = vmatpush1.bf16.msra.mxu0 0
  %158 = vmatprep.subr.bf16.mxu0 0
  %159 = vmatpush1.bf16.msra.mxu0 0
  %160 = vmatprep.subr.bf16.mxu0 0
  %161 = vmatpush1.bf16.msra.mxu0 0
  %162 = vmatprep.subr.bf16.mxu0 0
  %163 = vmatpush1.bf16.msra.mxu0 0
  %164 = vmatprep.subr.bf16.mxu0 0
  %165 = vmatpush1.bf16.msra.mxu0 0
  %166 = vmatprep.subr.bf16.mxu0 0
  %167 = vmatpush1.bf16.msra.mxu0 0
  %168 = vmatprep.subr.bf16.mxu0 0
  %169 = vmatpush1.bf16.msra.mxu0 0
  %170 = vmatprep.subr.bf16.mxu0 0
  %171 = vmatpush1.bf16.msra.mxu0 0
  %172 = vmatprep.subr.bf16.mxu0 0
  %173 = vmatpush1.bf16.msra.mxu0 0
  %174 = vmatprep.subr.bf16.mxu0 0
  %175 = vmatpush1.bf16.msra.mxu0 0
  %176 = vmatprep.mubr.bf16.mxu0 0
  %177 = vmatmul.mubr.bf16.gmra.mrb[0].mxu0 %v142
  %v178 = vpop.f32.mrb[0].mxu0
  %v179 = vadd.f32 %v114, %v178
  %v180 = vpop.f32.mrb[0].mxu0
  %v181 = vpop.f32.mrb[0].mxu0
  %v182 = vadd.f32 %v114, %v181
  %v183 = vpop.f32.mrb[0].mxu0
  %184 = vdwg.mxu0
  %v185 = vadd.f32 %v27, %v179
  %v186 = vadd.f32 %v28, %v182
  %v187 = vld [vmem:[%s5] sm:$0x1]
  %v188 = vld [vmem:[%s6] sm:$0x1]
  %v189 = vsel %vm53, %v185, 0.0
  %190 = vadd.xlane.f32.xlu0 %v189
  %v191 = vpop.xlane.xlu0 %190
  %v192 = vsel %vm53, %v186, 0.0
  %193 = vadd.xlane.f32.xlu0 %v192
  %v194 = vpop.xlane.xlu0 %193
  %v195 = vrcp.pop 32.0
  %v196 = vmul.f32 %v191, %v195
  %v197 = vmul.f32 %v194, %v195
  %v198 = vsub.f32 %v185, %v196
  %v199 = vsub.f32 %v186, %v197
  %v200 = vmul.f32 %v198, %v198
  %v201 = vmul.f32 %v199, %v199
  %v202 = vsel %vm53, %v200, 0.0
  %203 = vadd.xlane.f32.xlu0 %v202
  %v204 = vpop.xlane.xlu0 %203
  %v205 = vsel %vm53, %v201, 0.0
  %206 = vadd.xlane.f32.xlu0 %v205
  %v207 = vpop.xlane.xlu0 %206
  %v208 = vmul.f32 %v204, %v195
  %v209 = vmul.f32 %v207, %v195
  %v210 = vadd.f32 %v208, 1e-05
  %v211 = vadd.f32 %v209, 1e-05
  %v212 = vrsqrt.pop %v210
  %v213 = vrsqrt.pop %v211
  %v214 = vmul.f32 %v198, %v212
  %v215 = vmul.f32 %v199, %v213
  %v217 = vlaneseq
  %v218 = vshrl.u32 %v217, 7
  %v219 = vsub.s32 0, %v218
  %v220 = vrot.slane %v187, %v219
  %v222 = vmul.f32 %v214, %v220
  %v223 = vmul.f32 %v215, %v220
  %v225 = vlaneseq
  %v226 = vshrl.u32 %v225, 7
  %v227 = vsub.s32 0, %v226
  %v228 = vrot.slane %v188, %v227
  %v230 = vadd.f32 %v222, %v228
  %v231 = vadd.f32 %v223, %v228
  %232 = vst.msk [vmem:[%s7] sm:$0xff] %vm53, %v230
  %233 = vst.msk [vmem:[%s7 + $0x8] sm:$0xff] %vm53, %v231
  // Predicated region
  $region30: #{forward.18} parent=0 // pred_check
    _
  $region31: #{forward.18} parent=0 // pred_check_branch
    %235 = sbr.rel (0) target = $region33
  $region32: #{forward.18} parent=0 // pred_region
    _
  $region33: #{forward.18} parent=0 // pred_fallthru
    _
  // Predicated region
  $region34: #{forward.18} parent=0 // pred_check
    _
  $region35: #{forward.18} parent=0 // pred_check_branch
    %237 = sbr.rel (0) target = $region37
  $region36: #{forward.18} parent=0 // pred_region
    _
  $region37: #{forward.18} parent=0 // pred_fallthru
    _

// kernel: forward.17
$region0: #{forward.17}
  #allocation0 [shape = 'u32[]', space=smem, size = 0x4, offset = 0x4, fixed_abs, tag = 'smem constant byte address 0x4 - core index']
  #allocation1 [shape = 'u32[144,128]{1,0:T(1,128)}', space=vmem, size = 0x12000, scoped, tag = 'internal scratch']
  %s0 = inlined_call_operand.vmem [shape: f32[2,8,32], index: 0, kind: input, shape index: {}]
  %s1 = inlined_call_operand.vmem [shape: f32[2,8,8], index: 1, kind: input, shape index: {}]
  %s2 = inlined_call_operand.vmem [shape: bf16[32,96], index: 2, kind: input, shape index: {}]
  %s3 = inlined_call_operand.vmem [shape: f32[1,96], index: 3, kind: input, shape index: {}]
  %s4 = inlined_call_operand.vmem [shape: bf16[32,32], index: 4, kind: input, shape index: {}]
  %s5 = inlined_call_operand.vmem [shape: f32[1,32], index: 5, kind: input, shape index: {}]
  %s6 = inlined_call_operand.vmem [shape: f32[1,32], index: 6, kind: input, shape index: {}]
  %s7 = inlined_call_operand.vmem [shape: f32[1,32], index: 7, kind: input, shape index: {}]
  %s8 = inlined_call_operand.vmem [shape: f32[2,8,32], index: 8, kind: output, shape index: {}]
  %s9 = sld [smem:[#allocation0]]
  $region42: #{forward.17} parent=0
    _
  %s11 = ssub.s32 1, %s9
  %s12 = scalar_select 0, %s11, %s9
  // Predicated region
  $region2: #{forward.17} parent=0 // pred_check
    _
  $region3: #{forward.17} parent=0 // pred_check_branch
    %14 = sbr.rel (0) target = $region5
  $region4: #{forward.17} parent=0 // pred_region
    _
  $region5: #{forward.17} parent=0 // pred_fallthru
    _
  // Predicated region
  $region6: #{forward.17} parent=0 // pred_check
    _
  $region7: #{forward.17} parent=0 // pred_check_branch
    %16 = sbr.rel (0) target = $region9
  $region8: #{forward.17} parent=0 // pred_region
    _
  $region9: #{forward.17} parent=0 // pred_fallthru
    _
  // Predicated region
  $region10: #{forward.17} parent=0 // pred_check
    _
  $region11: #{forward.17} parent=0 // pred_check_branch
    %18 = sbr.rel (0) target = $region13
  $region12: #{forward.17} parent=0 // pred_region
    _
  $region13: #{forward.17} parent=0 // pred_fallthru
    _
  // Predicated region
  $region14: #{forward.17} parent=0 // pred_check
    _
  $region15: #{forward.17} parent=0 // pred_check_branch
    %20 = sbr.rel (0) target = $region17
  $region16: #{forward.17} parent=0 // pred_region
    _
  $region17: #{forward.17} parent=0 // pred_fallthru
    _
  // Predicated region
  $region18: #{forward.17} parent=0 // pred_check
    _
  $region19: #{forward.17} parent=0 // pred_check_branch
    %22 = sbr.rel (0) target = $region21
  $region20: #{forward.17} parent=0 // pred_region
    _
  $region21: #{forward.17} parent=0 // pred_fallthru
    _
  // Predicated region
  $region22: #{forward.17} parent=0 // pred_check
    _
  $region23: #{forward.17} parent=0 // pred_check_branch
    %24 = sbr.rel (0) target = $region25
  $region24: #{forward.17} parent=0 // pred_region
    _
  $region25: #{forward.17} parent=0 // pred_fallthru
    _
  // Predicated region
  $region26: #{forward.17} parent=0 // pred_check
    _
  $region27: #{forward.17} parent=0 // pred_check_branch
    %26 = sbr.rel (0) target = $region29
  $region28: #{forward.17} parent=0 // pred_region
    _
  $region29: #{forward.17} parent=0 // pred_fallthru
    _
  // Predicated region
  $region30: #{forward.17} parent=0 // pred_check
    _
  $region31: #{forward.17} parent=0 // pred_check_branch
    %28 = sbr.rel (0) target = $region33
  $region32: #{forward.17} parent=0 // pred_region
    _
  $region33: #{forward.17} parent=0 // pred_fallthru
    _
  %v30 = vld [vmem:[%s2] sm:$0xf]
  %v31 = vld [vmem:[%s2 + $0x4] sm:$0xf]
  %v32 = vld [vmem:[%s2 + $0x8] sm:$0xf]
  %v33 = vld [vmem:[%s2 + $0xc] sm:$0xf]
  %v34 = vld [vmem:[%s3] sm:$0x1]
  %v35 = vld [vmem:[%s4] sm:$0xf]
  %v36 = vld [vmem:[%s4 + $0x4] sm:$0xf]
  %v37 = vld [vmem:[%s4 + $0x8] sm:$0xf]
  %v38 = vld [vmem:[%s4 + $0xc] sm:$0xf]
  %v39 = vld [vmem:[%s5] sm:$0x1]
  %v40 = vld [vmem:[%s6] sm:$0x1]
  %v41 = vld [vmem:[%s7] sm:$0x1]
  %v42 = vld [vmem:[%s0] sm:$0xff]
  %v43 = vpack.c.bf16 %v42, %v42
  %v45 = vlaneseq
  %v46 = vshrl.u32 %v45, 7
  %v47 = vsub.s32 0, %v46
  %v48 = vrot.slane %v34, %v47
  %v54 = vunpack.c.l.b16 %v30
  %v55 = vunpack.c.l.b16 %v31
  %v56 = vunpack.c.l.b16 %v32
  %v57 = vunpack.c.l.b16 %v33
  %v58 = vpack.c.b16 %v55, %v54
  %v59 = vpack.c.b16 %v57, %v56
  %vm62 = vcmask 261120
  %v64 = vsel %vm62, %v43, 0
  %66 = vmatprep.subr.bf16.mxu0 0
  %67 = vmatpush1.bf16.msra.mxu0 %v58
  %68 = vmatprep.subr.bf16.mxu0 0
  %69 = vmatpush1.bf16.msra.mxu0 %v59
  %70 = vmatprep.subr.bf16.mxu0 0
  %71 = vmatpush1.bf16.msra.mxu0 0
  %72 = vmatprep.subr.bf16.mxu0 0
  %73 = vmatpush1.bf16.msra.mxu0 0
  %74 = vmatprep.subr.bf16.mxu0 0
  %75 = vmatpush1.bf16.msra.mxu0 0
  %76 = vmatprep.subr.bf16.mxu0 0
  %77 = vmatpush1.bf16.msra.mxu0 0
  %78 = vmatprep.subr.bf16.mxu0 0
  %79 = vmatpush1.bf16.msra.mxu0 0
  %80 = vmatprep.subr.bf16.mxu0 0
  %81 = vmatpush1.bf16.msra.mxu0 0
  %82 = vmatprep.subr.bf16.mxu0 0
  %83 = vmatpush1.bf16.msra.mxu0 0
  %84 = vmatprep.subr.bf16.mxu0 0
  %85 = vmatpush1.bf16.msra.mxu0 0
  %86 = vmatprep.subr.bf16.mxu0 0
  %87 = vmatpush1.bf16.msra.mxu0 0
  %88 = vmatprep.subr.bf16.mxu0 0
  %89 = vmatpush1.bf16.msra.mxu0 0
  %90 = vmatprep.subr.bf16.mxu0 0
  %91 = vmatpush1.bf16.msra.mxu0 0
  %92 = vmatprep.subr.bf16.mxu0 0
  %93 = vmatpush1.bf16.msra.mxu0 0
  %94 = vmatprep.subr.bf16.mxu0 0
  %95 = vmatpush1.bf16.msra.mxu0 0
  %96 = vmatprep.subr.bf16.mxu0 0
  %97 = vmatpush1.bf16.msra.mxu0 0
  %98 = vmatprep.mubr.bf16.mxu0 0
  %99 = vmatmul.mubr.bf16.gmra.mrb[0].mxu0 %v64
  %v100 = vpop.f32.mrb[0].mxu0
  %v101 = vadd.f32 %v48, %v100
  %v102 = vpop.f32.mrb[0].mxu0
  %v103 = vpop.f32.mrb[0].mxu0
  %v104 = vpop.f32.mrb[0].mxu0
  %105 = vdwg.mxu0
  %v106 = vld [vmem:[%s1] sm:$0xff]
  %v107 = vpack.c.bf16 %v101, %v101
  %109 = vrot.lane.b32.xlu0 %v107, 96
  %v110 = vpop.permute.xlu0 %109
  %vm111 = vcmask 64512
  %v113 = vsel %vm111, %v107, 0
  %v116 = vsel %vm111, %v110, 0
  %118 = vmatprep.subr.bf16.mxu0 0
  %119 = vmatpush1.bf16.xpose.msra.mxu0 %v116
  %120 = vmatprep.subr.bf16.mxu0 0
  %121 = vmatpush1.bf16.xpose.msra.mxu0 0
  %122 = vmatprep.subr.bf16.mxu0 0
  %123 = vmatpush1.bf16.xpose.msra.mxu0 0
  %124 = vmatprep.subr.bf16.mxu0 0
  %125 = vmatpush1.bf16.xpose.msra.mxu0 0
  %126 = vmatprep.subr.bf16.mxu0 0
  %127 = vmatpush1.bf16.xpose.msra.mxu0 0
  %128 = vmatprep.subr.bf16.mxu0 0
  %129 = vmatpush1.bf16.xpose.msra.mxu0 0
  %130 = vmatprep.subr.bf16.mxu0 0
  %131 = vmatpush1.bf16.xpose.msra.mxu0 0
  %132 = vmatprep.subr.bf16.mxu0 0
  %133 = vmatpush1.bf16.xpose.msra.mxu0 0
  %134 = vmatprep.subr.bf16.mxu0 0
  %135 = vmatpush1.bf16.xpose.msra.mxu0 0
  %136 = vmatprep.subr.bf16.mxu0 0
  %137 = vmatpush1.bf16.xpose.msra.mxu0 0
  %138 = vmatprep.subr.bf16.mxu0 0
  %139 = vmatpush1.bf16.xpose.msra.mxu0 0
  %140 = vmatprep.subr.bf16.mxu0 0
  %141 = vmatpush1.bf16.xpose.msra.mxu0 0
  %142 = vmatprep.subr.bf16.mxu0 0
  %143 = vmatpush1.bf16.xpose.msra.mxu0 0
  %144 = vmatprep.subr.bf16.mxu0 0
  %145 = vmatpush1.bf16.xpose.msra.mxu0 0
  %146 = vmatprep.subr.bf16.mxu0 0
  %147 = vmatpush1.bf16.xpose.msra.mxu0 0
  %148 = vmatprep.subr.bf16.mxu0 0
  %149 = vmatpush1.bf16.xpose.msra.mxu0 0
  %150 = vmatprep.mubr.bf16.mxu0 0
  %151 = vmatmul.mubr.bf16.gmra.mrb[0].mxu0 %v113
  %v152 = vpop.f32.mrb[0].mxu0
  %v153 = vadd.f32 0.0, %v152
  %v154 = vpop.f32.mrb[0].mxu0
  %v155 = vpop.f32.mrb[0].mxu0
  %v156 = vpop.f32.mrb[0].mxu0
  %157 = vdwg.mxu0
  %v158 = vmul.f32 %v153, 0.35355338
  %v159 = vadd.f32 %v158, %v106
  %v160 = vsel %vm111, %v159, -inf
  %161 = vmax.xlane.f32.xlu0 %v160
  %v162 = vpop.xlane.xlu0 %161
  %v163 = vsub.f32 %v159, %v162
  %v164 = vmul.f32 %v163, 1.442695
  %v165 = vpow.pop %v164
  %v166 = vsel %vm111, %v165, 0.0
  %167 = vadd.xlane.f32.xlu0 %v166
  %v168 = vpop.xlane.xlu0 %167
  %v169 = vrcp.pop %v168
  %v170 = vmul.f32 %v165, %v169
  %v171 = vpack.c.bf16 %v170, %v170
  %172 = vrot.lane.b32.xlu0 %v107, 64
  %v173 = vpop.permute.xlu0 %172
  %v175 = vsel %vm111, %v171, 0
  %vm177 = vcmask 1043456
  %v179 = vsel %vm177, %v173, 0
  %181 = vmatprep.subr.bf16.mxu0 0
  %182 = vmatpush1.bf16.msra.mxu0 %v179
  %183 = vmatprep.subr.bf16.mxu0 0
  %184 = vmatpush1.bf16.msra.mxu0 0
  %185 = vmatprep.subr.bf16.mxu0 0
  %186 = vmatpush1.bf16.msra.mxu0 0
  %187 = vmatprep.subr.bf16.mxu0 0
  %188 = vmatpush1.bf16.msra.mxu0 0
  %189 = vmatprep.subr.bf16.mxu0 0
  %190 = vmatpush1.bf16.msra.mxu0 0
  %191 = vmatprep.subr.bf16.mxu0 0
  %192 = vmatpush1.bf16.msra.mxu0 0
  %193 = vmatprep.subr.bf16.mxu0 0
  %194 = vmatpush1.bf16.msra.mxu0 0
  %195 = vmatprep.subr.bf16.mxu0 0
  %196 = vmatpush1.bf16.msra.mxu0 0
  %197 = vmatprep.subr.bf16.mxu0 0
  %198 = vmatpush1.bf16.msra.mxu0 0
  %199 = vmatprep.subr.bf16.mxu0 0
  %200 = vmatpush1.bf16.msra.mxu0 0
  %201 = vmatprep.subr.bf16.mxu0 0
  %202 = vmatpush1.bf16.msra.mxu0 0
  %203 = vmatprep.subr.bf16.mxu0 0
  %204 = vmatpush1.bf16.msra.mxu0 0
  %205 = vmatprep.subr.bf16.mxu0 0
  %206 = vmatpush1.bf16.msra.mxu0 0
  %207 = vmatprep.subr.bf16.mxu0 0
  %208 = vmatpush1.bf16.msra.mxu0 0
  %209 = vmatprep.subr.bf16.mxu0 0
  %210 = vmatpush1.bf16.msra.mxu0 0
  %211 = vmatprep.subr.bf16.mxu0 0
  %212 = vmatpush1.bf16.msra.mxu0 0
  %213 = vmatprep.mubr.bf16.mxu0 0
  %214 = vmatmul.mubr.bf16.gmra.mrb[0].mxu0 %v175
  %v215 = vpop.f32.mrb[0].mxu0
  %v216 = vadd.f32 0.0, %v215
  %v217 = vpop.f32.mrb[0].mxu0
  %v218 = vpop.f32.mrb[0].mxu0
  %v219 = vpop.f32.mrb[0].mxu0
  %220 = vdwg.mxu0
  %221 = vrot.lane.b32.xlu0 %v107, 120
  %v222 = vpop.permute.xlu0 %221
  %223 = vrot.lane.b32.xlu0 %v107, 88
  %v224 = vpop.permute.xlu0 %223
  %v226 = vsel %vm111, %v222, 0
  %v229 = vsel %vm111, %v224, 0
  %231 = vmatprep.subr.bf16.mxu0 0
  %232 = vmatpush1.bf16.xpose.msra.mxu0 %v229
  %233 = vmatprep.subr.bf16.mxu0 0
  %234 = vmatpush1.bf16.xpose.msra.mxu0 0
  %235 = vmatprep.subr.bf16.mxu0 0
  %236 = vmatpush1.bf16.xpose.msra.mxu0 0
  %237 = vmatprep.subr.bf16.mxu0 0
  %238 = vmatpush1.bf16.xpose.msra.mxu0 0
  %239 = vmatprep.subr.bf16.mxu0 0
  %240 = vmatpush1.bf16.xpose.msra.mxu0 0
  %241 = vmatprep.subr.bf16.mxu0 0
  %242 = vmatpush1.bf16.xpose.msra.mxu0 0
  %243 = vmatprep.subr.bf16.mxu0 0
  %244 = vmatpush1.bf16.xpose.msra.mxu0 0
  %245 = vmatprep.subr.bf16.mxu0 0
  %246 = vmatpush1.bf16.xpose.msra.mxu0 0
  %247 = vmatprep.subr.bf16.mxu0 0
  %248 = vmatpush1.bf16.xpose.msra.mxu0 0
  %249 = vmatprep.subr.bf16.mxu0 0
  %250 = vmatpush1.bf16.xpose.msra.mxu0 0
  %251 = vmatprep.subr.bf16.mxu0 0
  %252 = vmatpush1.bf16.xpose.msra.mxu0 0
  %253 = vmatprep.subr.bf16.mxu0 0
  %254 = vmatpush1.bf16.xpose.msra.mxu0 0
  %255 = vmatprep.subr.bf16.mxu0 0
  %256 = vmatpush1.bf16.xpose.msra.mxu0 0
  %257 = vmatprep.subr.bf16.mxu0 0
  %258 = vmatpush1.bf16.xpose.msra.mxu0 0
  %259 = vmatprep.subr.bf16.mxu0 0
  %260 = vmatpush1.bf16.xpose.msra.mxu0 0
  %261 = vmatprep.subr.bf16.mxu0 0
  %262 = vmatpush1.bf16.xpose.msra.mxu0 0
  %263 = vmatprep.mubr.bf16.mxu0 0
  %264 = vmatmul.mubr.bf16.gmra.mrb[0].mxu0 %v226
  %v265 = vpop.f32.mrb[0].mxu0
  %v266 = vadd.f32 0.0, %v265
  %v267 = vpop.f32.mrb[0].mxu0
  %v268 = vpop.f32.mrb[0].mxu0
  %v269 = vpop.f32.mrb[0].mxu0
  %270 = vdwg.mxu0
  %v271 = vmul.f32 %v266, 0.35355338
  %v272 = vadd.f32 %v271, %v106
  %v273 = vsel %vm111, %v272, -inf
  %274 = vmax.xlane.f32.xlu0 %v273
  %v275 = vpop.xlane.xlu0 %274
  %v276 = vsub.f32 %v272, %v275
  %v277 = vmul.f32 %v276, 1.442695
  %v278 = vpow.pop %v277
  %v279 = vsel %vm111, %v278, 0.0
  %280 = vadd.xlane.f32.xlu0 %v279
  %v281 = vpop.xlane.xlu0 %280
  %v282 = vrcp.pop %v281
  %v283 = vmul.f32 %v278, %v282
  %v284 = vpack.c.bf16 %v283, %v283
  %285 = vrot.lane.b32.xlu0 %v107, 56
  %v286 = vpop.permute.xlu0 %285
  %v288 = vsel %vm111, %v284, 0
  %v291 = vsel %vm177, %v286, 0
  %293 = vmatprep.subr.bf16.mxu0 0
  %294 = vmatpush1.bf16.msra.mxu0 %v291
  %295 = vmatprep.subr.bf16.mxu0 0
  %296 = vmatpush1.bf16.msra.mxu0 0
  %297 = vmatprep.subr.bf16.mxu0 0
  %298 = vmatpush1.bf16.msra.mxu0 0
  %299 = vmatprep.subr.bf16.mxu0 0
  %300 = vmatpush1.bf16.msra.mxu0 0
  %301 = vmatprep.subr.bf16.mxu0 0
  %302 = vmatpush1.bf16.msra.mxu0 0
  %303 = vmatprep.subr.bf16.mxu0 0
  %304 = vmatpush1.bf16.msra.mxu0 0
  %305 = vmatprep.subr.bf16.mxu0 0
  %306 = vmatpush1.bf16.msra.mxu0 0
  %307 = vmatprep.subr.bf16.mxu0 0
  %308 = vmatpush1.bf16.msra.mxu0 0
  %309 = vmatprep.subr.bf16.mxu0 0
  %310 = vmatpush1.bf16.msra.mxu0 0
  %311 = vmatprep.subr.bf16.mxu0 0
  %312 = vmatpush1.bf16.msra.mxu0 0
  %313 = vmatprep.subr.bf16.mxu0 0
  %314 = vmatpush1.bf16.msra.mxu0 0
  %315 = vmatprep.subr.bf16.mxu0 0
  %316 = vmatpush1.bf16.msra.mxu0 0
  %317 = vmatprep.subr.bf16.mxu0 0
  %318 = vmatpush1.bf16.msra.mxu0 0
  %319 = vmatprep.subr.bf16.mxu0 0
  %320 = vmatpush1.bf16.msra.mxu0 0
  %321 = vmatprep.subr.bf16.mxu0 0
  %322 = vmatpush1.bf16.msra.mxu0 0
  %323 = vmatprep.subr.bf16.mxu0 0
  %324 = vmatpush1.bf16.msra.mxu0 0
  %325 = vmatprep.mubr.bf16.mxu0 0
  %326 = vmatmul.mubr.bf16.gmra.mrb[0].mxu0 %v288
  %v327 = vpop.f32.mrb[0].mxu0
  %v328 = vadd.f32 0.0, %v327
  %v329 = vpop.f32.mrb[0].mxu0
  %v330 = vpop.f32.mrb[0].mxu0
  %v331 = vpop.f32.mrb[0].mxu0
  %332 = vdwg.mxu0
  %333 = vrot.lane.b32.xlu0 %v107, 112
  %v334 = vpop.permute.xlu0 %333
  %335 = vrot.lane.b32.xlu0 %v107, 80
  %v336 = vpop.permute.xlu0 %335
  %v338 = vsel %vm111, %v334, 0
  %v341 = vsel %vm111, %v336, 0
  %343 = vmatprep.subr.bf16.mxu0 0
  %344 = vmatpush1.bf16.xpose.msra.mxu0 %v341
  %345 = vmatprep.subr.bf16.mxu0 0
  %346 = vmatpush1.bf16.xpose.msra.mxu0 0
  %347 = vmatprep.subr.bf16.mxu0 0
  %348 = vmatpush1.bf16.xpose.msra.mxu0 0
  %349 = vmatprep.subr.bf16.mxu0 0
  %350 = vmatpush1.bf16.xpose.msra.mxu0 0
  %351 = vmatprep.subr.bf16.mxu0 0
  %352 = vmatpush1.bf16.xpose.msra.mxu0 0
  %353 = vmatprep.subr.bf16.mxu0 0
  %354 = vmatpush1.bf16.xpose.msra.mxu0 0
  %355 = vmatprep.subr.bf16.mxu0 0
  %356 = vmatpush1.bf16.xpose.msra.mxu0 0
  %357 = vmatprep.subr.bf16.mxu0 0
  %358 = vmatpush1.bf16.xpose.msra.mxu0 0
  %359 = vmatprep.subr.bf16.mxu0 0
  %360 = vmatpush1.bf16.xpose.msra.mxu0 0
  %361 = vmatprep.subr.bf16.mxu0 0
  %362 = vmatpush1.bf16.xpose.msra.mxu0 0
  %363 = vmatprep.subr.bf16.mxu0 0
  %364 = vmatpush1.bf16.xpose.msra.mxu0 0
  %365 = vmatprep.subr.bf16.mxu0 0
  %366 = vmatpush1.bf16.xpose.msra.mxu0 0
  %367 = vmatprep.subr.bf16.mxu0 0
  %368 = vmatpush1.bf16.xpose.msra.mxu0 0
  %369 = vmatprep.subr.bf16.mxu0 0
  %370 = vmatpush1.bf16.xpose.msra.mxu0 0
  %371 = vmatprep.subr.bf16.mxu0 0
  %372 = vmatpush1.bf16.xpose.msra.mxu0 0
  %373 = vmatprep.subr.bf16.mxu0 0
  %374 = vmatpush1.bf16.xpose.msra.mxu0 0
  %375 = vmatprep.mubr.bf16.mxu0 0
  %376 = vmatmul.mubr.bf16.gmra.mrb[0].mxu0 %v338
  %v377 = vpop.f32.mrb[0].mxu0
  %v378 = vadd.f32 0.0, %v377
  %v379 = vpop.f32.mrb[0].mxu0
  %v380 = vpop.f32.mrb[0].mxu0
  %v381 = vpop.f32.mrb[0].mxu0
  %382 = vdwg.mxu0
  %v383 = vmul.f32 %v378, 0.35355338
  %v384 = vadd.f32 %v383, %v106
  %v385 = vsel %vm111, %v384, -inf
  %386 = vmax.xlane.f32.xlu0 %v385
  %v387 = vpop.xlane.xlu0 %386
  %v388 = vsub.f32 %v384, %v387
  %v389 = vmul.f32 %v388, 1.442695
  %v390 = vpow.pop %v389
  %v391 = vsel %vm111, %v390, 0.0
  %392 = vadd.xlane.f32.xlu0 %v391
  %v393 = vpop.xlane.xlu0 %392
  %v394 = vrcp.pop %v393
  %v395 = vmul.f32 %v390, %v394
  %v396 = vpack.c.bf16 %v395, %v395
  %397 = vrot.lane.b32.xlu0 %v107, 48
  %v398 = vpop.permute.xlu0 %397
  %v400 = vsel %vm111, %v396, 0
  %v403 = vsel %vm177, %v398, 0
  %405 = vmatprep.subr.bf16.mxu0 0
  %406 = vmatpush1.bf16.msra.mxu0 %v403
  %407 = vmatprep.subr.bf16.mxu0 0
  %408 = vmatpush1.bf16.msra.mxu0 0
  %409 = vmatprep.subr.bf16.mxu0 0
  %410 = vmatpush1.bf16.msra.mxu0 0
  %411 = vmatprep.subr.bf16.mxu0 0
  %412 = vmatpush1.bf16.msra.mxu0 0
  %413 = vmatprep.subr.bf16.mxu0 0
  %414 = vmatpush1.bf16.msra.mxu0 0
  %415 = vmatprep.subr.bf16.mxu0 0
  %416 = vmatpush1.bf16.msra.mxu0 0
  %417 = vmatprep.subr.bf16.mxu0 0
  %418 = vmatpush1.bf16.msra.mxu0 0
  %419 = vmatprep.subr.bf16.mxu0 0
  %420 = vmatpush1.bf16.msra.mxu0 0
  %421 = vmatprep.subr.bf16.mxu0 0
  %422 = vmatpush1.bf16.msra.mxu0 0
  %423 = vmatprep.subr.bf16.mxu0 0
  %424 = vmatpush1.bf16.msra.mxu0 0
  %425 = vmatprep.subr.bf16.mxu0 0
  %426 = vmatpush1.bf16.msra.mxu0 0
  %427 = vmatprep.subr.bf16.mxu0 0
  %428 = vmatpush1.bf16.msra.mxu0 0
  %429 = vmatprep.subr.bf16.mxu0 0
  %430 = vmatpush1.bf16.msra.mxu0 0
  %431 = vmatprep.subr.bf16.mxu0 0
  %432 = vmatpush1.bf16.msra.mxu0 0
  %433 = vmatprep.subr.bf16.mxu0 0
  %434 = vmatpush1.bf16.msra.mxu0 0
  %435 = vmatprep.subr.bf16.mxu0 0
  %436 = vmatpush1.bf16.msra.mxu0 0
  %437 = vmatprep.mubr.bf16.mxu0 0
  %438 = vmatmul.mubr.bf16.gmra.mrb[0].mxu0 %v400
  %v439 = vpop.f32.mrb[0].mxu0
  %v440 = vadd.f32 0.0, %v439
  %v441 = vpop.f32.mrb[0].mxu0
  %v442 = vpop.f32.mrb[0].mxu0
  %v443 = vpop.f32.mrb[0].mxu0
  %444 = vdwg.mxu0
  %445 = vrot.lane.b32.xlu0 %v107, 104
  %v446 = vpop.permute.xlu0 %445
  %447 = vrot.lane.b32.xlu0 %v107, 72
  %v448 = vpop.permute.xlu0 %447
  %v450 = vsel %vm111, %v446, 0
  %v453 = vsel %vm111, %v448, 0
  %455 = vmatprep.subr.bf16.mxu0 0
  %456 = vmatpush1.bf16.xpose.msra.mxu0 %v453
  %457 = vmatprep.subr.bf16.mxu0 0
  %458 = vmatpush1.bf16.xpose.msra.mxu0 0
  %459 = vmatprep.subr.bf16.mxu0 0
  %460 = vmatpush1.bf16.xpose.msra.mxu0 0
  %461 = vmatprep.subr.bf16.mxu0 0
  %462 = vmatpush1.bf16.xpose.msra.mxu0 0
  %463 = vmatprep.subr.bf16.mxu0 0
  %464 = vmatpush1.bf16.xpose.msra.mxu0 0
  %465 = vmatprep.subr.bf16.mxu0 0
  %466 = vmatpush1.bf16.xpose.msra.mxu0 0
  %467 = vmatprep.subr.bf16.mxu0 0
  %468 = vmatpush1.bf16.xpose.msra.mxu0 0
  %469 = vmatprep.subr.bf16.mxu0 0
  %470 = vmatpush1.bf16.xpose.msra.mxu0 0
  %471 = vmatprep.subr.bf16.mxu0 0
  %472 = vmatpush1.bf16.xpose.msra.mxu0 0
  %473 = vmatprep.subr.bf16.mxu0 0
  %474 = vmatpush1.bf16.xpose.msra.mxu0 0
  %475 = vmatprep.subr.bf16.mxu0 0
  %476 = vmatpush1.bf16.xpose.msra.mxu0 0
  %477 = vmatprep.subr.bf16.mxu0 0
  %478 = vmatpush1.bf16.xpose.msra.mxu0 0
  %479 = vmatprep.subr.bf16.mxu0 0
  %480 = vmatpush1.bf16.xpose.msra.mxu0 0
  %481 = vmatprep.subr.bf16.mxu0 0
  %482 = vmatpush1.bf16.xpose.msra.mxu0 0
  %483 = vmatprep.subr.bf16.mxu0 0
  %484 = vmatpush1.bf16.xpose.msra.mxu0 0
  %485 = vmatprep.subr.bf16.mxu0 0
  %486 = vmatpush1.bf16.xpose.msra.mxu0 0
  %487 = vmatprep.mubr.bf16.mxu0 0
  %488 = vmatmul.mubr.bf16.gmra.mrb[0].mxu0 %v450
  %v489 = vpop.f32.mrb[0].mxu0
  %v490 = vadd.f32 0.0, %v489
  %v491 = vpop.f32.mrb[0].mxu0
  %v492 = vpop.f32.mrb[0].mxu0
  %v493 = vpop.f32.mrb[0].mxu0
  %494 = vdwg.mxu0
  %v495 = vmul.f32 %v490, 0.35355338
  %v496 = vadd.f32 %v495, %v106
  %v497 = vsel %vm111, %v496, -inf
  %498 = vmax.xlane.f32.xlu0 %v497
  %v499 = vpop.xlane.xlu0 %498
  %v500 = vsub.f32 %v496, %v499
  %v501 = vmul.f32 %v500, 1.442695
  %v502 = vpow.pop %v501
  %v503 = vsel %vm111, %v502, 0.0
  %504 = vadd.xlane.f32.xlu0 %v503
  %v505 = vpop.xlane.xlu0 %504
  %v506 = vrcp.pop %v505
  %v507 = vmul.f32 %v502, %v506
  %v508 = vpack.c.bf16 %v507, %v507
  %509 = vrot.lane.b32.xlu0 %v107, 40
  %v510 = vpop.permute.xlu0 %509
  %v512 = vsel %vm111, %v508, 0
  %v515 = vsel %vm177, %v510, 0
  %517 = vmatprep.subr.bf16.mxu0 0
  %518 = vmatpush1.bf16.msra.mxu0 %v515
  %519 = vmatprep.subr.bf16.mxu0 0
  %520 = vmatpush1.bf16.msra.mxu0 0
  %521 = vmatprep.subr.bf16.mxu0 0
  %522 = vmatpush1.bf16.msra.mxu0 0
  %523 = vmatprep.subr.bf16.mxu0 0
  %524 = vmatpush1.bf16.msra.mxu0 0
  %525 = vmatprep.subr.bf16.mxu0 0
  %526 = vmatpush1.bf16.msra.mxu0 0
  %527 = vmatprep.subr.bf16.mxu0 0
  %528 = vmatpush1.bf16.msra.mxu0 0
  %529 = vmatprep.subr.bf16.mxu0 0
  %530 = vmatpush1.bf16.msra.mxu0 0
  %531 = vmatprep.subr.bf16.mxu0 0
  %532 = vmatpush1.bf16.msra.mxu0 0
  %533 = vmatprep.subr.bf16.mxu0 0
  %534 = vmatpush1.bf16.msra.mxu0 0
  %535 = vmatprep.subr.bf16.mxu0 0
  %536 = vmatpush1.bf16.msra.mxu0 0
  %537 = vmatprep.subr.bf16.mxu0 0
  %538 = vmatpush1.bf16.msra.mxu0 0
  %539 = vmatprep.subr.bf16.mxu0 0
  %540 = vmatpush1.bf16.msra.mxu0 0
  %541 = vmatprep.subr.bf16.mxu0 0
  %542 = vmatpush1.bf16.msra.mxu0 0
  %543 = vmatprep.subr.bf16.mxu0 0
  %544 = vmatpush1.bf16.msra.mxu0 0
  %545 = vmatprep.subr.bf16.mxu0 0
  %546 = vmatpush1.bf16.msra.mxu0 0
  %547 = vmatprep.subr.bf16.mxu0 0
  %548 = vmatpush1.bf16.msra.mxu0 0
  %549 = vmatprep.mubr.bf16.mxu0 0
  %550 = vmatmul.mubr.bf16.gmra.mrb[0].mxu0 %v512
  %v551 = vpop.f32.mrb[0].mxu0
  %v552 = vadd.f32 0.0, %v551
  %v553 = vpop.f32.mrb[0].mxu0
  %v554 = vpop.f32.mrb[0].mxu0
  %v555 = vpop.f32.mrb[0].mxu0
  %556 = vdwg.mxu0
  %558 = vrot.lane.b32.xlu0 %v328, 8
  %v559 = vpop.permute.xlu0 %558
  %562 = vrot.lane.b32.xlu0 %v440, 16
  %v563 = vpop.permute.xlu0 %562
  %566 = vrot.lane.b32.xlu0 %v552, 24
  %v567 = vpop.permute.xlu0 %566
  %v569 = vsel %vm111, %v216, %v559
  %vm570 = vcmask 130048
  %v571 = vsel %vm570, %v569, %v563
  %vm572 = vcmask 195584
  %v573 = vsel %vm572, %v571, %v567
  %v574 = vpack.c.bf16 %v573, %v573
  %v576 = vlaneseq
  %v577 = vshrl.u32 %v576, 7
  %v578 = vsub.s32 0, %v577
  %v579 = vrot.slane %v39, %v578
  %v585 = vunpack.c.l.b16 %v35
  %v586 = vunpack.c.l.b16 %v36
  %v587 = vunpack.c.l.b16 %v37
  %v588 = vunpack.c.l.b16 %v38
  %v589 = vpack.c.b16 %v586, %v585
  %v590 = vpack.c.b16 %v588, %v587
  %v594 = vsel %vm62, %v574, 0
  %596 = vmatprep.subr.bf16.mxu0 0
  %597 = vmatpush1.bf16.msra.mxu0 %v589
  %598 = vmatprep.subr.bf16.mxu0 0
  %599 = vmatpush1.bf16.msra.mxu0 %v590
  %600 = vmatprep.subr.bf16.mxu0 0
  %601 = vmatpush1.bf16.msra.mxu0 0
  %602 = vmatprep.subr.bf16.mxu0 0
  %603 = vmatpush1.bf16.msra.mxu0 0
  %604 = vmatprep.subr.bf16.mxu0 0
  %605 = vmatpush1.bf16.msra.mxu0 0
  %606 = vmatprep.subr.bf16.mxu0 0
  %607 = vmatpush1.bf16.msra.mxu0 0
  %608 = vmatprep.subr.bf16.mxu0 0
  %609 = vmatpush1.bf16.msra.mxu0 0
  %610 = vmatprep.subr.bf16.mxu0 0
  %611 = vmatpush1.bf16.msra.mxu0 0
  %612 = vmatprep.subr.bf16.mxu0 0
  %613 = vmatpush1.bf16.msra.mxu0 0
  %614 = vmatprep.subr.bf16.mxu0 0
  %615 = vmatpush1.bf16.msra.mxu0 0
  %616 = vmatprep.subr.bf16.mxu0 0
  %617 = vmatpush1.bf16.msra.mxu0 0
  %618 = vmatprep.subr.bf16.mxu0 0
  %619 = vmatpush1.bf16.msra.mxu0 0
  %620 = vmatprep.subr.bf16.mxu0 0
  %621 = vmatpush1.bf16.msra.mxu0 0
  %622 = vmatprep.subr.bf16.mxu0 0
  %623 = vmatpush1.bf16.msra.mxu0 0
  %624 = vmatprep.subr.bf16.mxu0 0
  %625 = vmatpush1.bf16.msra.mxu0 0
  %626 = vmatprep.subr.bf16.mxu0 0
  %627 = vmatpush1.bf16.msra.mxu0 0
  %628 = vmatprep.mubr.bf16.mxu0 0
  %629 = vmatmul.mubr.bf16.gmra.mrb[0].mxu0 %v594
  %v630 = vpop.f32.mrb[0].mxu0
  %v631 = vadd.f32 %v579, %v630
  %v632 = vpop.f32.mrb[0].mxu0
  %v633 = vpop.f32.mrb[0].mxu0
  %v634 = vpop.f32.mrb[0].mxu0
  %635 = vdwg.mxu0
  %v636 = vadd.f32 %v42, %v631
  %v637 = vsel %vm62, %v636, 0.0
  %638 = vadd.xlane.f32.xlu0 %v637
  %v639 = vpop.xlane.xlu0 %638
  %v640 = vrcp.pop 32.0
  %v641 = vmul.f32 %v639, %v640
  %v642 = vsub.f32 %v636, %v641
  %v643 = vmul.f32 %v642, %v642
  %v644 = vsel %vm62, %v643, 0.0
  %645 = vadd.xlane.f32.xlu0 %v644
  %v646 = vpop.xlane.xlu0 %645
  %v647 = vmul.f32 %v646, %v640
  %v648 = vadd.f32 %v647, 1e-05
  %v649 = vrsqrt.pop %v648
  %v650 = vmul.f32 %v642, %v649
  %v652 = vlaneseq
  %v653 = vshrl.u32 %v652, 7
  %v654 = vsub.s32 0, %v653
  %v655 = vrot.slane %v40, %v654
  %v657 = vmul.f32 %v650, %v655
  %v659 = vlaneseq
  %v660 = vshrl.u32 %v659, 7
  %v661 = vsub.s32 0, %v660
  %v662 = vrot.slane %v41, %v661
  %v664 = vadd.f32 %v657, %v662
  %665 = vst.msk [vmem:[%s8] sm:$0xff] %vm62, %v664
  %s666 = scalar_lea.vmem %s0, 8
  %v667 = vld [vmem:[%s666] sm:$0xff]
  %v668 = vpack.c.bf16 %v667, %v667
  %v670 = vsel %vm62, %v668, 0
  %672 = vmatprep.subr.bf16.mxu0 0
  %673 = vmatpush1.bf16.msra.mxu0 %v58
  %674 = vmatprep.subr.bf16.mxu0 0
  %675 = vmatpush1.bf16.msra.mxu0 %v59
  %676 = vmatprep.subr.bf16.mxu0 0
  %677 = vmatpush1.bf16.msra.mxu0 0
  %678 = vmatprep.subr.bf16.mxu0 0
  %679 = vmatpush1.bf16.msra.mxu0 0
  %680 = vmatprep.subr.bf16.mxu0 0
  %681 = vmatpush1.bf16.msra.mxu0 0
  %682 = vmatprep.subr.bf16.mxu0 0
  %683 = vmatpush1.bf16.msra.mxu0 0
  %684 = vmatprep.subr.bf16.mxu0 0
  %685 = vmatpush1.bf16.msra.mxu0 0
  %686 = vmatprep.subr.bf16.mxu0 0
  %687 = vmatpush1.bf16.msra.mxu0 0
  %688 = vmatprep.subr.bf16.mxu0 0
  %689 = vmatpush1.bf16.msra.mxu0 0
  %690 = vmatprep.subr.bf16.mxu0 0
  %691 = vmatpush1.bf16.msra.mxu0 0
  %692 = vmatprep.subr.bf16.mxu0 0
  %693 = vmatpush1.bf16.msra.mxu0 0
  %694 = vmatprep.subr.bf16.mxu0 0
  %695 = vmatpush1.bf16.msra.mxu0 0
  %696 = vmatprep.subr.bf16.mxu0 0
  %697 = vmatpush1.bf16.msra.mxu0 0
  %698 = vmatprep.subr.bf16.mxu0 0
  %699 = vmatpush1.bf16.msra.mxu0 0
  %700 = vmatprep.subr.bf16.mxu0 0
  %701 = vmatpush1.bf16.msra.mxu0 0
  %702 = vmatprep.subr.bf16.mxu0 0
  %703 = vmatpush1.bf16.msra.mxu0 0
  %704 = vmatprep.mubr.bf16.mxu0 0
  %705 = vmatmul.mubr.bf16.gmra.mrb[0].mxu0 %v670
  %v706 = vpop.f32.mrb[0].mxu0
  %v707 = vadd.f32 %v48, %v706
  %v708 = vpop.f32.mrb[0].mxu0
  %v709 = vpop.f32.mrb[0].mxu0
  %v710 = vpop.f32.mrb[0].mxu0
  %711 = vdwg.mxu0
  %s712 = scalar_lea.vmem %s1, 8
  %v713 = vld [vmem:[%s712] sm:$0xff]
  %v714 = vpack.c.bf16 %v707, %v707
  %716 = vrot.lane.b32.xlu0 %v714, 96
  %v717 = vpop.permute.xlu0 %716
  %v719 = vsel %vm111, %v714, 0
  %v722 = vsel %vm111, %v717, 0
  %724 = vmatprep.subr.bf16.mxu0 0
  %725 = vmatpush1.bf16.xpose.msra.mxu0 %v722
  %726 = vmatprep.subr.bf16.mxu0 0
  %727 = vmatpush1.bf16.xpose.msra.mxu0 0
  %728 = vmatprep.subr.bf16.mxu0 0
  %729 = vmatpush1.bf16.xpose.msra.mxu0 0
  %730 = vmatprep.subr.bf16.mxu0 0
  %731 = vmatpush1.bf16.xpose.msra.mxu0 0
  %732 = vmatprep.subr.bf16.mxu0 0
  %733 = vmatpush1.bf16.xpose.msra.mxu0 0
  %734 = vmatprep.subr.bf16.mxu0 0
  %735 = vmatpush1.bf16.xpose.msra.mxu0 0
  %736 = vmatprep.subr.bf16.mxu0 0
  %737 = vmatpush1.bf16.xpose.msra.mxu0 0
  %738 = vmatprep.subr.bf16.mxu0 0
  %739 = vmatpush1.bf16.xpose.msra.mxu0 0
  %740 = vmatprep.subr.bf16.mxu0 0
  %741 = vmatpush1.bf16.xpose.msra.mxu0 0
  %742 = vmatprep.subr.bf16.mxu0 0
  %743 = vmatpush1.bf16.xpose.msra.mxu0 0
  %744 = vmatprep.subr.bf16.mxu0 0
  %745 = vmatpush1.bf16.xpose.msra.mxu0 0
  %746 = vmatprep.subr.bf16.mxu0 0
  %747 = vmatpush1.bf16.xpose.msra.mxu0 0
  %748 = vmatprep.subr.bf16.mxu0 0
  %749 = vmatpush1.bf16.xpose.msra.mxu0 0
  %750 = vmatprep.subr.bf16.mxu0 0
  %751 = vmatpush1.bf16.xpose.msra.mxu0 0
  %752 = vmatprep.subr.bf16.mxu0 0
  %753 = vmatpush1.bf16.xpose.msra.mxu0 0
  %754 = vmatprep.subr.bf16.mxu0 0
  %755 = vmatpush1.bf16.xpose.msra.mxu0 0
  %756 = vmatprep.mubr.bf16.mxu0 0
  %757 = vmatmul.mubr.bf16.gmra.mrb[0].mxu0 %v719
  %v758 = vpop.f32.mrb[0].mxu0
  %v759 = vadd.f32 0.0, %v758
  %v760 = vpop.f32.mrb[0].mxu0
  %v761 = vpop.f32.mrb[0].mxu0
  %v762 = vpop.f32.mrb[0].mxu0
  %763 = vdwg.mxu0
  %v764 = vmul.f32 %v759, 0.35355338
  %v765 = vadd.f32 %v764, %v713
  %v766 = vsel %vm111, %v765, -inf
  %767 = vmax.xlane.f32.xlu0 %v766
  %v768 = vpop.xlane.xlu0 %767
  %v769 = vsub.f32 %v765, %v768
  %v770 = vmul.f32 %v769, 1.442695
  %v771 = vpow.pop %v770
  %v772 = vsel %vm111, %v771, 0.0
  %773 = vadd.xlane.f32.xlu0 %v772
  %v774 = vpop.xlane.xlu0 %773
  %v775 = vrcp.pop %v774
  %v776 = vmul.f32 %v771, %v775
  %v777 = vpack.c.bf16 %v776, %v776
  %778 = vrot.lane.b32.xlu0 %v714, 64
  %v779 = vpop.permute.xlu0 %778
  %v781 = vsel %vm111, %v777, 0
  %v784 = vsel %vm177, %v779, 0
  %786 = vmatprep.subr.bf16.mxu0 0
  %787 = vmatpush1.bf16.msra.mxu0 %v784
  %788 = vmatprep.subr.bf16.mxu0 0
  %789 = vmatpush1.bf16.msra.mxu0 0
  %790 = vmatprep.subr.bf16.mxu0 0
  %791 = vmatpush1.bf16.msra.mxu0 0
  %792 = vmatprep.subr.bf16.mxu0 0
  %793 = vmatpush1.bf16.msra.mxu0 0
  %794 = vmatprep.subr.bf16.mxu0 0
  %795 = vmatpush1.bf16.msra.mxu0 0
  %796 = vmatprep.subr.bf16.mxu0 0
  %797 = vmatpush1.bf16.msra.mxu0 0
  %798 = vmatprep.subr.bf16.mxu0 0
  %799 = vmatpush1.bf16.msra.mxu0 0
  %800 = vmatprep.subr.bf16.mxu0 0
  %801 = vmatpush1.bf16.msra.mxu0 0
  %802 = vmatprep.subr.bf16.mxu0 0
  %803 = vmatpush1.bf16.msra.mxu0 0
  %804 = vmatprep.subr.bf16.mxu0 0
  %805 = vmatpush1.bf16.msra.mxu0 0
  %806 = vmatprep.subr.bf16.mxu0 0
  %807 = vmatpush1.bf16.msra.mxu0 0
  %808 = vmatprep.subr.bf16.mxu0 0
  %809 = vmatpush1.bf16.msra.mxu0 0
  %810 = vmatprep.subr.bf16.mxu0 0
  %811 = vmatpush1.bf16.msra.mxu0 0
  %812 = vmatprep.subr.bf16.mxu0 0
  %813 = vmatpush1.bf16.msra.mxu0 0
  %814 = vmatprep.subr.bf16.mxu0 0
  %815 = vmatpush1.bf16.msra.mxu0 0
  %816 = vmatprep.subr.bf16.mxu0 0
  %817 = vmatpush1.bf16.msra.mxu0 0
  %818 = vmatprep.mubr.bf16.mxu0 0
  %819 = vmatmul.mubr.bf16.gmra.mrb[0].mxu0 %v781
  %v820 = vpop.f32.mrb[0].mxu0
  %v821 = vadd.f32 0.0, %v820
  %v822 = vpop.f32.mrb[0].mxu0
  %v823 = vpop.f32.mrb[0].mxu0
  %v824 = vpop.f32.mrb[0].mxu0
  %825 = vdwg.mxu0
  %826 = vrot.lane.b32.xlu0 %v714, 120
  %v827 = vpop.permute.xlu0 %826
  %828 = vrot.lane.b32.xlu0 %v714, 88
  %v829 = vpop.permute.xlu0 %828
  %v831 = vsel %vm111, %v827, 0
  %v834 = vsel %vm111, %v829, 0
  %836 = vmatprep.subr.bf16.mxu0 0
  %837 = vmatpush1.bf16.xpose.msra.mxu0 %v834
  %838 = vmatprep.subr.bf16.mxu0 0
  %839 = vmatpush1.bf16.xpose.msra.mxu0 0
  %840 = vmatprep.subr.bf16.mxu0 0
  %841 = vmatpush1.bf16.xpose.msra.mxu0 0
  %842 = vmatprep.subr.bf16.mxu0 0
  %843 = vmatpush1.bf16.xpose.msra.mxu0 0
  %844 = vmatprep.subr.bf16.mxu0 0
  %845 = vmatpush1.bf16.xpose.msra.mxu0 0
  %846 = vmatprep.subr.bf16.mxu0 0
  %847 = vmatpush1.bf16.xpose.msra.mxu0 0
  %848 = vmatprep.subr.bf16.mxu0 0
  %849 = vmatpush1.bf16.xpose.msra.mxu0 0
  %850 = vmatprep.subr.bf16.mxu0 0
  %851 = vmatpush1.bf16.xpose.msra.mxu0 0
  %852 = vmatprep.subr.bf16.mxu0 0
  %853 = vmatpush1.bf16.xpose.msra.mxu0 0
  %854 = vmatprep.subr.bf16.mxu0 0
  %855 = vmatpush1.bf16.xpose.msra.mxu0 0
  %856 = vmatprep.subr.bf16.mxu0 0
  %857 = vmatpush1.bf16.xpose.msra.mxu0 0
  %858 = vmatprep.subr.bf16.mxu0 0
  %859 = vmatpush1.bf16.xpose.msra.mxu0 0
  %860 = vmatprep.subr.bf16.mxu0 0
  %861 = vmatpush1.bf16.xpose.msra.mxu0 0
  %862 = vmatprep.subr.bf16.mxu0 0
  %863 = vmatpush1.bf16.xpose.msra.mxu0 0
  %864 = vmatprep.subr.bf16.mxu0 0
  %865 = vmatpush1.bf16.xpose.msra.mxu0 0
  %866 = vmatprep.subr.bf16.mxu0 0
  %867 = vmatpush1.bf16.xpose.msra.mxu0 0
  %868 = vmatprep.mubr.bf16.mxu0 0
  %869 = vmatmul.mubr.bf16.gmra.mrb[0].mxu0 %v831
  %v870 = vpop.f32.mrb[0].mxu0
  %v871 = vadd.f32 0.0, %v870
  %v872 = vpop.f32.mrb[0].mxu0
  %v873 = vpop.f32.mrb[0].mxu0
  %v874 = vpop.f32.mrb[0].mxu0
  %875 = vdwg.mxu0
  %v876 = vmul.f32 %v871, 0.35355338
  %v877 = vadd.f32 %v876, %v713
  %v878 = vsel %vm111, %v877, -inf
  %879 = vmax.xlane.f32.xlu0 %v878
  %v880 = vpop.xlane.xlu0 %879
  %v881 = vsub.f32 %v877, %v880
  %v882 = vmul.f32 %v881, 1.442695
  %v883 = vpow.pop %v882
  %v884 = vsel %vm111, %v883, 0.0
  %885 = vadd.xlane.f32.xlu0 %v884
  %v886 = vpop.xlane.xlu0 %885
  %v887 = vrcp.pop %v886
  %v888 = vmul.f32 %v883, %v887
  %v889 = vpack.c.bf16 %v888, %v888
  %890 = vrot.lane.b32.xlu0 %v714, 56
  %v891 = vpop.permute.xlu0 %890
  %v893 = vsel %vm111, %v889, 0
  %v896 = vsel %vm177, %v891, 0
  %898 = vmatprep.subr.bf16.mxu0 0
  %899 = vmatpush1.bf16.msra.mxu0 %v896
  %900 = vmatprep.subr.bf16.mxu0 0
  %901 = vmatpush1.bf16.msra.mxu0 0
  %902 = vmatprep.subr.bf16.mxu0 0
  %903 = vmatpush1.bf16.msra.mxu0 0
  %904 = vmatprep.subr.bf16.mxu0 0
  %905 = vmatpush1.bf16.msra.mxu0 0
  %906 = vmatprep.subr.bf16.mxu0 0
  %907 = vmatpush1.bf16.msra.mxu0 0
  %908 = vmatprep.subr.bf16.mxu0 0
  %909 = vmatpush1.bf16.msra.mxu0 0
  %910 = vmatprep.subr.bf16.mxu0 0
  %911 = vmatpush1.bf16.msra.mxu0 0
  %912 = vmatprep.subr.bf16.mxu0 0
  %913 = vmatpush1.bf16.msra.mxu0 0
  %914 = vmatprep.subr.bf16.mxu0 0
  %915 = vmatpush1.bf16.msra.mxu0 0
  %916 = vmatprep.subr.bf16.mxu0 0
  %917 = vmatpush1.bf16.msra.mxu0 0
  %918 = vmatprep.subr.bf16.mxu0 0
  %919 = vmatpush1.bf16.msra.mxu0 0
  %920 = vmatprep.subr.bf16.mxu0 0
  %921 = vmatpush1.bf16.msra.mxu0 0
  %922 = vmatprep.subr.bf16.mxu0 0
  %923 = vmatpush1.bf16.msra.mxu0 0
  %924 = vmatprep.subr.bf16.mxu0 0
  %925 = vmatpush1.bf16.msra.mxu0 0
  %926 = vmatprep.subr.bf16.mxu0 0
  %927 = vmatpush1.bf16.msra.mxu0 0
  %928 = vmatprep.subr.bf16.mxu0 0
  %929 = vmatpush1.bf16.msra.mxu0 0
  %930 = vmatprep.mubr.bf16.mxu0 0
  %931 = vmatmul.mubr.bf16.gmra.mrb[0].mxu0 %v893
  %v932 = vpop.f32.mrb[0].mxu0
  %v933 = vadd.f32 0.0, %v932
  %v934 = vpop.f32.mrb[0].mxu0
  %v935 = vpop.f32.mrb[0].mxu0
  %v936 = vpop.f32.mrb[0].mxu0
  %937 = vdwg.mxu0
  %938 = vrot.lane.b32.xlu0 %v714, 112
  %v939 = vpop.permute.xlu0 %938
  %940 = vrot.lane.b32.xlu0 %v714, 80
  %v941 = vpop.permute.xlu0 %940
  %v943 = vsel %vm111, %v939, 0
  %v946 = vsel %vm111, %v941, 0
  %948 = vmatprep.subr.bf16.mxu0 0
  %949 = vmatpush1.bf16.xpose.msra.mxu0 %v946
  %950 = vmatprep.subr.bf16.mxu0 0
  %951 = vmatpush1.bf16.xpose.msra.mxu0 0
  %952 = vmatprep.subr.bf16.mxu0 0
  %953 = vmatpush1.bf16.xpose.msra.mxu0 0
  %954 = vmatprep.subr.bf16.mxu0 0
  %955 = vmatpush1.bf16.xpose.msra.mxu0 0
  %956 = vmatprep.subr.bf16.mxu0 0
  %957 = vmatpush1.bf16.xpose.msra.mxu0 0
  %958 = vmatprep.subr.bf16.mxu0 0
  %959 = vmatpush1.bf16.xpose.msra.mxu0 0
  %960 = vmatprep.subr.bf16.mxu0 0
  %961 = vmatpush1.bf16.xpose.msra.mxu0 0
  %962 = vmatprep.subr.bf16.mxu0 0
  %963 = vmatpush1.bf16.xpose.msra.mxu0 0
  %964 = vmatprep.subr.bf16.mxu0 0
  %965 = vmatpush1.bf16.xpose.msra.mxu0 0
  %966 = vmatprep.subr.bf16.mxu0 0
  %967 = vmatpush1.bf16.xpose.msra.mxu0 0
  %968 = vmatprep.subr.bf16.mxu0 0
  %969 = vmatpush1.bf16.xpose.msra.mxu0 0
  %970 = vmatprep.subr.bf16.mxu0 0
  %971 = vmatpush1.bf16.xpose.msra.mxu0 0
  %972 = vmatprep.subr.bf16.mxu0 0
  %973 = vmatpush1.bf16.xpose.msra.mxu0 0
  %974 = vmatprep.subr.bf16.mxu0 0
  %975 = vmatpush1.bf16.xpose.msra.mxu0 0
  %976 = vmatprep.subr.bf16.mxu0 0
  %977 = vmatpush1.bf16.xpose.msra.mxu0 0
  %978 = vmatprep.subr.bf16.mxu0 0
  %979 = vmatpush1.bf16.xpose.msra.mxu0 0
  %980 = vmatprep.mubr.bf16.mxu0 0
  %981 = vmatmul.mubr.bf16.gmra.mrb[0].mxu0 %v943
  %v982 = vpop.f32.mrb[0].mxu0
  %v983 = vadd.f32 0.0, %v982
  %v984 = vpop.f32.mrb[0].mxu0
  %v985 = vpop.f32.mrb[0].mxu0
  %v986 = vpop.f32.mrb[0].mxu0
  %987 = vdwg.mxu0
  %v988 = vmul.f32 %v983, 0.35355338
  %v989 = vadd.f32 %v988, %v713
  %v990 = vsel %vm111, %v989, -inf
  %991 = vmax.xlane.f32.xlu0 %v990
  %v992 = vpop.xlane.xlu0 %991
  %v993 = vsub.f32 %v989, %v992
  %v994 = vmul.f32 %v993, 1.442695
  %v995 = vpow.pop %v994
  %v996 = vsel %vm111, %v995, 0.0
  %997 = vadd.xlane.f32.xlu0 %v996
  %v998 = vpop.xlane.xlu0 %997
  %v999 = vrcp.pop %v998
  %v1000 = vmul.f32 %v995, %v999
  %v1001 = vpack.c.bf16 %v1000, %v1000
  %1002 = vrot.lane.b32.xlu0 %v714, 48
  %v1003 = vpop.permute.xlu0 %1002
  %v1005 = vsel %vm111, %v1001, 0
  %v1008 = vsel %vm177, %v1003, 0
  %1010 = vmatprep.subr.bf16.mxu0 0
  %1011 = vmatpush1.bf16.msra.mxu0 %v1008
  %1012 = vmatprep.subr.bf16.mxu0 0
  %1013 = vmatpush1.bf16.msra.mxu0 0
  %1014 = vmatprep.subr.bf16.mxu0 0
  %1015 = vmatpush1.bf16.msra.mxu0 0
  %1016 = vmatprep.subr.bf16.mxu0 0
  %1017 = vmatpush1.bf16.msra.mxu0 0
  %1018 = vmatprep.subr.bf16.mxu0 0
  %1019 = vmatpush1.bf16.msra.mxu0 0
  %1020 = vmatprep.subr.bf16.mxu0 0
  %1021 = vmatpush1.bf16.msra.mxu0 0
  %1022 = vmatprep.subr.bf16.mxu0 0
  %1023 = vmatpush1.bf16.msra.mxu0 0
  %1024 = vmatprep.subr.bf16.mxu0 0
  %1025 = vmatpush1.bf16.msra.mxu0 0
  %1026 = vmatprep.subr.bf16.mxu0 0
  %1027 = vmatpush1.bf16.msra.mxu0 0
  %1028 = vmatprep.subr.bf16.mxu0 0
  %1029 = vmatpush1.bf16.msra.mxu0 0
  %1030 = vmatprep.subr.bf16.mxu0 0
  %1031 = vmatpush1.bf16.msra.mxu0 0
  %1032 = vmatprep.subr.bf16.mxu0 0
  %1033 = vmatpush1.bf16.msra.mxu0 0
  %1034 = vmatprep.subr.bf16.mxu0 0
  %1035 = vmatpush1.bf16.msra.mxu0 0
  %1036 = vmatprep.subr.bf16.mxu0 0
  %1037 = vmatpush1.bf16.msra.mxu0 0
  %1038 = vmatprep.subr.bf16.mxu0 0
  %1039 = vmatpush1.bf16.msra.mxu0 0
  %1040 = vmatprep.subr.bf16.mxu0 0
  %1041 = vmatpush1.bf16.msra.mxu0 0
  %1042 = vmatprep.mubr.bf16.mxu0 0
  %1043 = vmatmul.mubr.bf16.gmra.mrb[0].mxu0 %v1005
  %v1044 = vpop.f32.mrb[0].mxu0
  %v1045 = vadd.f32 0.0, %v1044
  %v1046 = vpop.f32.mrb[0].mxu0
  %v1047 = vpop.f32.mrb[0].mxu0
  %v1048 = vpop.f32.mrb[0].mxu0
  %1049 = vdwg.mxu0
  %1050 = vrot.lane.b32.xlu0 %v714, 104
  %v1051 = vpop.permute.xlu0 %1050
  %1052 = vrot.lane.b32.xlu0 %v714, 72
  %v1053 = vpop.permute.xlu0 %1052
  %v1055 = vsel %vm111, %v1051, 0
  %v1058 = vsel %vm111, %v1053, 0
  %1060 = vmatprep.subr.bf16.mxu0 0
  %1061 = vmatpush1.bf16.xpose.msra.mxu0 %v1058
  %1062 = vmatprep.subr.bf16.mxu0 0
  %1063 = vmatpush1.bf16.xpose.msra.mxu0 0
  %1064 = vmatprep.subr.bf16.mxu0 0
  %1065 = vmatpush1.bf16.xpose.msra.mxu0 0
  %1066 = vmatprep.subr.bf16.mxu0 0
  %1067 = vmatpush1.bf16.xpose.msra.mxu0 0
  %1068 = vmatprep.subr.bf16.mxu0 0
  %1069 = vmatpush1.bf16.xpose.msra.mxu0 0
  %1070 = vmatprep.subr.bf16.mxu0 0
  %1071 = vmatpush1.bf16.xpose.msra.mxu0 0
  %1072 = vmatprep.subr.bf16.mxu0 0
  %1073 = vmatpush1.bf16.xpose.msra.mxu0 0
  %1074 = vmatprep.subr.bf16.mxu0 0
  %1075 = vmatpush1.bf16.xpose.msra.mxu0 0
  %1076 = vmatprep.subr.bf16.mxu0 0
  %1077 = vmatpush1.bf16.xpose.msra.mxu0 0
  %1078 = vmatprep.subr.bf16.mxu0 0
  %1079 = vmatpush1.bf16.xpose.msra.mxu0 0
  %1080 = vmatprep.subr.bf16.mxu0 0
  %1081 = vmatpush1.bf16.xpose.msra.mxu0 0
  %1082 = vmatprep.subr.bf16.mxu0 0
  %1083 = vmatpush1.bf16.xpose.msra.mxu0 0
  %1084 = vmatprep.subr.bf16.mxu0 0
  %1085 = vmatpush1.bf16.xpose.msra.mxu0 0
  %1086 = vmatprep.subr.bf16.mxu0 0
  %1087 = vmatpush1.bf16.xpose.msra.mxu0 0
  %1088 = vmatprep.subr.bf16.mxu0 0
  %1089 = vmatpush1.bf16.xpose.msra.mxu0 0
  %1090 = vmatprep.subr.bf16.mxu0 0
  %1091 = vmatpush1.bf16.xpose.msra.mxu0 0
  %1092 = vmatprep.mubr.bf16.mxu0 0
  %1093 = vmatmul.mubr.bf16.gmra.mrb[0].mxu0 %v1055
  %v1094 = vpop.f32.mrb[0].mxu0
  %v1095 = vadd.f32 0.0, %v1094
  %v1096 = vpop.f32.mrb[0].mxu0
  %v1097 = vpop.f32.mrb[0].mxu0
  %v1098 = vpop.f32.mrb[0].mxu0
  %1099 = vdwg.mxu0
  %v1100 = vmul.f32 %v1095, 0.35355338
  %v1101 = vadd.f32 %v1100, %v713
  %v1102 = vsel %vm111, %v1101, -inf
  %1103 = vmax.xlane.f32.xlu0 %v1102
  %v1104 = vpop.xlane.xlu0 %1103
  %v1105 = vsub.f32 %v1101, %v1104
  %v1106 = vmul.f32 %v1105, 1.442695
  %v1107 = vpow.pop %v1106
  %v1108 = vsel %vm111, %v1107, 0.0
  %1109 = vadd.xlane.f32.xlu0 %v1108
  %v1110 = vpop.xlane.xlu0 %1109
  %v1111 = vrcp.pop %v1110
  %v1112 = vmul.f32 %v1107, %v1111
  %v1113 = vpack.c.bf16 %v1112, %v1112
  %1114 = vrot.lane.b32.xlu0 %v714, 40
  %v1115 = vpop.permute.xlu0 %1114
  %v1117 = vsel %vm111, %v1113, 0
  %v1120 = vsel %vm177, %v1115, 0
  %1122 = vmatprep.subr.bf16.mxu0 0
  %1123 = vmatpush1.bf16.msra.mxu0 %v1120
  %1124 = vmatprep.subr.bf16.mxu0 0
  %1125 = vmatpush1.bf16.msra.mxu0 0
  %1126 = vmatprep.subr.bf16.mxu0 0
  %1127 = vmatpush1.bf16.msra.mxu0 0
  %1128 = vmatprep.subr.bf16.mxu0 0
  %1129 = vmatpush1.bf16.msra.mxu0 0
  %1130 = vmatprep.subr.bf16.mxu0 0
  %1131 = vmatpush1.bf16.msra.mxu0 0
  %1132 = vmatprep.subr.bf16.mxu0 0
  %1133 = vmatpush1.bf16.msra.mxu0 0
  %1134 = vmatprep.subr.bf16.mxu0 0
  %1135 = vmatpush1.bf16.msra.mxu0 0
  %1136 = vmatprep.subr.bf16.mxu0 0
  %1137 = vmatpush1.bf16.msra.mxu0 0
  %1138 = vmatprep.subr.bf16.mxu0 0
  %1139 = vmatpush1.bf16.msra.mxu0 0
  %1140 = vmatprep.subr.bf16.mxu0 0
  %1141 = vmatpush1.bf16.msra.mxu0 0
  %1142 = vmatprep.subr.bf16.mxu0 0
  %1143 = vmatpush1.bf16.msra.mxu0 0
  %1144 = vmatprep.subr.bf16.mxu0 0
  %1145 = vmatpush1.bf16.msra.mxu0 0
  %1146 = vmatprep.subr.bf16.mxu0 0
  %1147 = vmatpush1.bf16.msra.mxu0 0
  %1148 = vmatprep.subr.bf16.mxu0 0
  %1149 = vmatpush1.bf16.msra.mxu0 0
  %1150 = vmatprep.subr.bf16.mxu0 0
  %1151 = vmatpush1.bf16.msra.mxu0 0
  %1152 = vmatprep.subr.bf16.mxu0 0
  %1153 = vmatpush1.bf16.msra.mxu0 0
  %1154 = vmatprep.mubr.bf16.mxu0 0
  %1155 = vmatmul.mubr.bf16.gmra.mrb[0].mxu0 %v1117
  %v1156 = vpop.f32.mrb[0].mxu0
  %v1157 = vadd.f32 0.0, %v1156
  %v1158 = vpop.f32.mrb[0].mxu0
  %v1159 = vpop.f32.mrb[0].mxu0
  %v1160 = vpop.f32.mrb[0].mxu0
  %1161 = vdwg.mxu0
  %1163 = vrot.lane.b32.xlu0 %v933, 8
  %v1164 = vpop.permute.xlu0 %1163
  %1167 = vrot.lane.b32.xlu0 %v1045, 16
  %v1168 = vpop.permute.xlu0 %1167
  %1171 = vrot.lane.b32.xlu0 %v1157, 24
  %v1172 = vpop.permute.xlu0 %1171
  %v1174 = vsel %vm111, %v821, %v1164
  %v1175 = vsel %vm570, %v1174, %v1168
  %v1176 = vsel %vm572, %v1175, %v1172
  %v1177 = vpack.c.bf16 %v1176, %v1176
  %v1179 = vsel %vm62, %v1177, 0
  %1181 = vmatprep.subr.bf16.mxu0 0
  %1182 = vmatpush1.bf16.msra.mxu0 %v589
  %1183 = vmatprep.subr.bf16.mxu0 0
  %1184 = vmatpush1.bf16.msra.mxu0 %v590
  %1185 = vmatprep.subr.bf16.mxu0 0
  %1186 = vmatpush1.bf16.msra.mxu0 0
  %1187 = vmatprep.subr.bf16.mxu0 0
  %1188 = vmatpush1.bf16.msra.mxu0 0
  %1189 = vmatprep.subr.bf16.mxu0 0
  %1190 = vmatpush1.bf16.msra.mxu0 0
  %1191 = vmatprep.subr.bf16.mxu0 0
  %1192 = vmatpush1.bf16.msra.mxu0 0
  %1193 = vmatprep.subr.bf16.mxu0 0
  %1194 = vmatpush1.bf16.msra.mxu0 0
  %1195 = vmatprep.subr.bf16.mxu0 0
  %1196 = vmatpush1.bf16.msra.mxu0 0
  %1197 = vmatprep.subr.bf16.mxu0 0
  %1198 = vmatpush1.bf16.msra.mxu0 0
  %1199 = vmatprep.subr.bf16.mxu0 0
  %1200 = vmatpush1.bf16.msra.mxu0 0
  %1201 = vmatprep.subr.bf16.mxu0 0
  %1202 = vmatpush1.bf16.msra.mxu0 0
  %1203 = vmatprep.subr.bf16.mxu0 0
  %1204 = vmatpush1.bf16.msra.mxu0 0
  %1205 = vmatprep.subr.bf16.mxu0 0
  %1206 = vmatpush1.bf16.msra.mxu0 0
  %1207 = vmatprep.subr.bf16.mxu0 0
  %1208 = vmatpush1.bf16.msra.mxu0 0
  %1209 = vmatprep.subr.bf16.mxu0 0
  %1210 = vmatpush1.bf16.msra.mxu0 0
  %1211 = vmatprep.subr.bf16.mxu0 0
  %1212 = vmatpush1.bf16.msra.mxu0 0
  %1213 = vmatprep.mubr.bf16.mxu0 0
  %1214 = vmatmul.mubr.bf16.gmra.mrb[0].mxu0 %v1179
  %v1215 = vpop.f32.mrb[0].mxu0
  %v1216 = vadd.f32 %v579, %v1215
  %v1217 = vpop.f32.mrb[0].mxu0
  %v1218 = vpop.f32.mrb[0].mxu0
  %v1219 = vpop.f32.mrb[0].mxu0
  %1220 = vdwg.mxu0
  %v1221 = vadd.f32 %v667, %v1216
  %v1222 = vsel %vm62, %v1221, 0.0
  %1223 = vadd.xlane.f32.xlu0 %v1222
  %v1224 = vpop.xlane.xlu0 %1223
  %v1225 = vmul.f32 %v1224, %v640
  %v1226 = vsub.f32 %v1221, %v1225
  %v1227 = vmul.f32 %v1226, %v1226
  %v1228 = vsel %vm62, %v1227, 0.0
  %1229 = vadd.xlane.f32.xlu0 %v1228
  %v1230 = vpop.xlane.xlu0 %1229
  %v1231 = vmul.f32 %v1230, %v640
  %v1232 = vadd.f32 %v1231, 1e-05
  %v1233 = vrsqrt.pop %v1232
  %v1234 = vmul.f32 %v1226, %v1233
  %v1235 = vmul.f32 %v1234, %v655
  %v1236 = vadd.f32 %v1235, %v662
  %s1237 = scalar_lea.vmem %s8, 8
  %1238 = vst.msk [vmem:[%s1237] sm:$0xff] %vm62, %v1236
  // Predicated region
  $region34: #{forward.17} parent=0 // pred_check
    _
  $region35: #{forward.17} parent=0 // pred_check_branch
    %1240 = sbr.rel (0) target = $region37
  $region36: #{forward.17} parent=0 // pred_region
    _
  $region37: #{forward.17} parent=0 // pred_fallthru
    _
  // Predicated region
  $region38: #{forward.17} parent=0 // pred_check
    _
  $region39: #{forward.17} parent=0 // pred_check_branch
    %1242 = sbr.rel (0) target = $region41
  $region40: #{forward.17} parent=0 // pred_region
    _
  $region41: #{forward.17} parent=0 // pred_fallthru
    _

// kernel: forward.29
$region0: #{forward.29}
  #allocation0 [shape = 'u32[]', space=smem, size = 0x4, offset = 0x4, fixed_abs, tag = 'smem constant byte address 0x4 - core index']
  #allocation1 [shape = 'u32[144,128]{1,0:T(1,128)}', space=vmem, size = 0x12000, scoped, tag = 'internal scratch']
  %s0 = inlined_call_operand.vmem [shape: f32[16,32], index: 0, kind: input, shape index: {}]
  %s1 = inlined_call_operand.vmem [shape: bf16[32,60], index: 1, kind: input, shape index: {}]
  %s2 = inlined_call_operand.vmem [shape: f32[1,60], index: 2, kind: input, shape index: {}]
  %s3 = inlined_call_operand.hbm [shape: f32[16,60], index: 3, kind: output, shape index: {}]
  %s4 = sld [smem:[#allocation0]]
  $region22: #{forward.29} parent=0
    _
  %s6 = ssub.s32 1, %s4
  %s7 = scalar_select 0, %s6, %s4
  $region1: #{forward.29} parent=0
    #allocation2 [shape = 'u8[8192]{0}', space=vmem, size = 0x2000, scoped, tag = 'output window, operand 0, single buffered']
    #allocation3 [shape = 's32[1]{0}', space=sflag, size = 0x4, scoped, tag = 'scoped memory for forward.29']
    %8 = vsyncpa [#allocation3], 0
    // Predicated region
    $region2: #{forward.29} parent=1 // pred_check
      _
    $region3: #{forward.29} parent=1 // pred_check_branch
      %10 = sbr.rel (0) target = $region5
    $region4: #{forward.29} parent=1 // pred_region
      _
    $region5: #{forward.29} parent=1 // pred_fallthru
      _
    // Predicated region
    $region6: #{forward.29} parent=1 // pred_check
      _
    $region7: #{forward.29} parent=1 // pred_check_branch
      %12 = sbr.rel (0) target = $region9
    $region8: #{forward.29} parent=1 // pred_region
      _
    $region9: #{forward.29} parent=1 // pred_fallthru
      _
    // Predicated region
    $region10: #{forward.29} parent=1 // pred_check
      _
    $region11: #{forward.29} parent=1 // pred_check_branch
      %14 = sbr.rel (0) target = $region13
    $region12: #{forward.29} parent=1 // pred_region
      _
    $region13: #{forward.29} parent=1 // pred_fallthru
      _
    %v16 = vld [vmem:[%s0] sm:$0xff]
    %v17 = vld [vmem:[%s0 + $0x8] sm:$0xff]
    %v18 = vld [vmem:[%s1] sm:$0xf]
    %v19 = vld [vmem:[%s1 + $0x4] sm:$0xf]
    %v20 = vld [vmem:[%s1 + $0x8] sm:$0xf]
    %v21 = vld [vmem:[%s1 + $0xc] sm:$0xf]
    %v22 = vld [vmem:[%s2] sm:$0x1]
    %v23 = vpack.c.bf16 %v17, %v16
    %v25 = vlaneseq
    %v26 = vshrl.u32 %v25, 7
    %v27 = vsub.s32 0, %v26
    %v28 = vrot.slane %v22, %v27
    %v34 = vunpack.c.l.b16 %v18
    %v35 = vunpack.c.l.b16 %v19
    %v36 = vunpack.c.l.b16 %v20
    %v37 = vunpack.c.l.b16 %v21
    %v38 = vpack.c.b16 %v35, %v34
    %v39 = vpack.c.b16 %v37, %v36
    %vm42 = vcmask 261120
    %v44 = vsel %vm42, %v23, 0
    %46 = vmatprep.subr.bf16.mxu0 0
    %47 = vmatpush1.bf16.msra.mxu0 %v38
    %48 = vmatprep.subr.bf16.mxu0 0
    %49 = vmatpush1.bf16.msra.mxu0 %v39
    %50 = vmatprep.subr.bf16.mxu0 0
    %51 = vmatpush1.bf16.msra.mxu0 0
    %52 = vmatprep.subr.bf16.mxu0 0
    %53 = vmatpush1.bf16.msra.mxu0 0
    %54 = vmatprep.subr.bf16.mxu0 0
    %55 = vmatpush1.bf16.msra.mxu0 0
    %56 = vmatprep.subr.bf16.mxu0 0
    %57 = vmatpush1.bf16.msra.mxu0 0
    %58 = vmatprep.subr.bf16.mxu0 0
    %59 = vmatpush1.bf16.msra.mxu0 0
    %60 = vmatprep.subr.bf16.mxu0 0
    %61 = vmatpush1.bf16.msra.mxu0 0
    %62 = vmatprep.subr.bf16.mxu0 0
    %63 = vmatpush1.bf16.msra.mxu0 0
    %64 = vmatprep.subr.bf16.mxu0 0
    %65 = vmatpush1.bf16.msra.mxu0 0
    %66 = vmatprep.subr.bf16.mxu0 0
    %67 = vmatpush1.bf16.msra.mxu0 0
    %68 = vmatprep.subr.bf16.mxu0 0
    %69 = vmatpush1.bf16.msra.mxu0 0
    %70 = vmatprep.subr.bf16.mxu0 0
    %71 = vmatpush1.bf16.msra.mxu0 0
    %72 = vmatprep.subr.bf16.mxu0 0
    %73 = vmatpush1.bf16.msra.mxu0 0
    %74 = vmatprep.subr.bf16.mxu0 0
    %75 = vmatpush1.bf16.msra.mxu0 0
    %76 = vmatprep.subr.bf16.mxu0 0
    %77 = vmatpush1.bf16.msra.mxu0 0
    %78 = vmatprep.mubr.bf16.mxu0 0
    %79 = vmatmul.mubr.bf16.gmra.mrb[0].mxu0 %v44
    %v80 = vpop.f32.mrb[0].mxu0
    %v81 = vadd.f32 %v28, %v80
    %v82 = vpop.f32.mrb[0].mxu0
    %v83 = vpop.f32.mrb[0].mxu0
    %v84 = vadd.f32 %v28, %v83
    %v85 = vpop.f32.mrb[0].mxu0
    %86 = vdwg.mxu0
    %vm87 = vcmask 490496
    %88 = vst.msk [vmem:[#allocation2] sm:$0xff] %vm87, %v81
    %89 = vst.msk [vmem:[#allocation2 + $0x8] sm:$0xff] %vm87, %v84
    // Predicated region
    $region14: #{forward.29} parent=1 // pred_check
      _
    $region15: #{forward.29} parent=1 // pred_check_branch
      %91 = sbr.rel (0) target = $region17
    $region16: #{forward.29} parent=1 // pred_region
      %s93 = ssub.s32 256, 256
      %94 = vsyncadd [#allocation3], %s93
      %s95 = sshll.u32 [#allocation2], 4
      %s96 = int_to_ptr.vmem [resolvable:$true] %s95
      %101 = dma.vmem_to_hbm [thread:$0]  %s96, 256, %s3, [#allocation3], 128, 128, 8
    $region17: #{forward.29} parent=1 // pred_fallthru
      _
    // Predicated region
    $region18: #{forward.29} parent=1 // pred_check
      _
    $region19: #{forward.29} parent=1 // pred_check_branch
      %103 = sbr.rel (0) target = $region21
    $region20: #{forward.29} parent=1 // pred_region
      %104 = dma.done [#allocation3], 256
    $region21: #{forward.29} parent=1 // pred_fallthru
      _
    %105 = vsyncpa [#allocation3], 1

// kernel: forward.23
$region0: #{forward.23}
  #allocation0 [shape = 'u32[]', space=smem, size = 0x4, offset = 0x4, fixed_abs, tag = 'smem constant byte address 0x4 - core index']
  #allocation1 [shape = 'u32[144,128]{1,0:T(1,128)}', space=vmem, size = 0x12000, scoped, tag = 'internal scratch']
  %s0 = inlined_call_operand.vmem [shape: f32[2,8,32], index: 0, kind: input, shape index: {}]
  %s1 = inlined_call_operand.vmem [shape: f32[2,8,32], index: 1, kind: input, shape index: {}]
  %s2 = inlined_call_operand.vmem [shape: f32[2,8,8], index: 2, kind: input, shape index: {}]
  %s3 = inlined_call_operand.vmem [shape: bf16[32,32], index: 3, kind: input, shape index: {}]
  %s4 = inlined_call_operand.vmem [shape: f32[1,32], index: 4, kind: input, shape index: {}]
  %s5 = inlined_call_operand.vmem [shape: bf16[32,64], index: 5, kind: input, shape index: {}]
  %s6 = inlined_call_operand.vmem [shape: f32[1,64], index: 6, kind: input, shape index: {}]
  %s7 = inlined_call_operand.vmem [shape: bf16[32,32], index: 7, kind: input, shape index: {}]
  %s8 = inlined_call_operand.vmem [shape: f32[1,32], index: 8, kind: input, shape index: {}]
  %s9 = inlined_call_operand.vmem [shape: f32[1,32], index: 9, kind: input, shape index: {}]
  %s10 = inlined_call_operand.vmem [shape: f32[1,32], index: 10, kind: input, shape index: {}]
  %s11 = inlined_call_operand.vmem [shape: f32[2,8,32], index: 11, kind: output, shape index: {}]
  %s12 = sld [smem:[#allocation0]]
  $region54: #{forward.23} parent=0
    _
  %s14 = ssub.s32 1, %s12
  %s15 = scalar_select 0, %s14, %s12
  // Predicated region
  $region2: #{forward.23} parent=0 // pred_check
    _
  $region3: #{forward.23} parent=0 // pred_check_branch
    %17 = sbr.rel (0) target = $region5
  $region4: #{forward.23} parent=0 // pred_region
    _
  $region5: #{forward.23} parent=0 // pred_fallthru
    _
  // Predicated region
  $region6: #{forward.23} parent=0 // pred_check
    _
  $region7: #{forward.23} parent=0 // pred_check_branch
    %19 = sbr.rel (0) target = $region9
  $region8: #{forward.23} parent=0 // pred_region
    _
  $region9: #{forward.23} parent=0 // pred_fallthru
    _
  // Predicated region
  $region10: #{forward.23} parent=0 // pred_check
    _
  $region11: #{forward.23} parent=0 // pred_check_branch
    %21 = sbr.rel (0) target = $region13
  $region12: #{forward.23} parent=0 // pred_region
    _
  $region13: #{forward.23} parent=0 // pred_fallthru
    _
  // Predicated region
  $region14: #{forward.23} parent=0 // pred_check
    _
  $region15: #{forward.23} parent=0 // pred_check_branch
    %23 = sbr.rel (0) target = $region17
  $region16: #{forward.23} parent=0 // pred_region
    _
  $region17: #{forward.23} parent=0 // pred_fallthru
    _
  // Predicated region
  $region18: #{forward.23} parent=0 // pred_check
    _
  $region19: #{forward.23} parent=0 // pred_check_branch
    %25 = sbr.rel (0) target = $region21
  $region20: #{forward.23} parent=0 // pred_region
    _
  $region21: #{forward.23} parent=0 // pred_fallthru
    _
  // Predicated region
  $region22: #{forward.23} parent=0 // pred_check
    _
  $region23: #{forward.23} parent=0 // pred_check_branch
    %27 = sbr.rel (0) target = $region25
  $region24: #{forward.23} parent=0 // pred_region
    _
  $region25: #{forward.23} parent=0 // pred_fallthru
    _
  // Predicated region
  $region26: #{forward.23} parent=0 // pred_check
    _
  $region27: #{forward.23} parent=0 // pred_check_branch
    %29 = sbr.rel (0) target = $region29
  $region28: #{forward.23} parent=0 // pred_region
    _
  $region29: #{forward.23} parent=0 // pred_fallthru
    _
  // Predicated region
  $region30: #{forward.23} parent=0 // pred_check
    _
  $region31: #{forward.23} parent=0 // pred_check_branch
    %31 = sbr.rel (0) target = $region33
  $region32: #{forward.23} parent=0 // pred_region
    _
  $region33: #{forward.23} parent=0 // pred_fallthru
    _
  // Predicated region
  $region34: #{forward.23} parent=0 // pred_check
    _
  $region35: #{forward.23} parent=0 // pred_check_branch
    %33 = sbr.rel (0) target = $region37
  $region36: #{forward.23} parent=0 // pred_region
    _
  $region37: #{forward.23} parent=0 // pred_fallthru
    _
  // Predicated region
  $region38: #{forward.23} parent=0 // pred_check
    _
  $region39: #{forward.23} parent=0 // pred_check_branch
    %35 = sbr.rel (0) target = $region41
  $region40: #{forward.23} parent=0 // pred_region
    _
  $region41: #{forward.23} parent=0 // pred_fallthru
    _
  // Predicated region
  $region42: #{forward.23} parent=0 // pred_check
    _
  $region43: #{forward.23} parent=0 // pred_check_branch
    %37 = sbr.rel (0) target = $region45
  $region44: #{forward.23} parent=0 // pred_region
    _
  $region45: #{forward.23} parent=0 // pred_fallthru
    _
  %v39 = vld [vmem:[%s3] sm:$0xf]
  %v40 = vld [vmem:[%s3 + $0x4] sm:$0xf]
  %v41 = vld [vmem:[%s3 + $0x8] sm:$0xf]
  %v42 = vld [vmem:[%s3 + $0xc] sm:$0xf]
  %v43 = vld [vmem:[%s4] sm:$0x1]
  %v44 = vld [vmem:[%s5] sm:$0xf]
  %v45 = vld [vmem:[%s5 + $0x4] sm:$0xf]
  %v46 = vld [vmem:[%s5 + $0x8] sm:$0xf]
  %v47 = vld [vmem:[%s5 + $0xc] sm:$0xf]
  %v48 = vld [vmem:[%s6] sm:$0x1]
  %v49 = vld [vmem:[%s7] sm:$0xf]
  %v50 = vld [vmem:[%s7 + $0x4] sm:$0xf]
  %v51 = vld [vmem:[%s7 + $0x8] sm:$0xf]
  %v52 = vld [vmem:[%s7 + $0xc] sm:$0xf]
  %v53 = vld [vmem:[%s8] sm:$0x1]
  %v54 = vld [vmem:[%s9] sm:$0x1]
  %v55 = vld [vmem:[%s10] sm:$0x1]
  %v56 = vld [vmem:[%s0] sm:$0xff]
  %v57 = vld [vmem:[%s1] sm:$0xff]
  %v58 = vpack.c.bf16 %v56, %v56
  %v60 = vlaneseq
  %v61 = vshrl.u32 %v60, 7
  %v62 = vsub.s32 0, %v61
  %v63 = vrot.slane %v43, %v62
  %v69 = vunpack.c.l.b16 %v39
  %v70 = vunpack.c.l.b16 %v40
  %v71 = vunpack.c.l.b16 %v41
  %v72 = vunpack.c.l.b16 %v42
  %v73 = vpack.c.b16 %v70, %v69
  %v74 = vpack.c.b16 %v72, %v71
  %vm77 = vcmask 261120
  %v79 = vsel %vm77, %v58, 0
  %81 = vmatprep.subr.bf16.mxu0 0
  %82 = vmatpush1.bf16.msra.mxu0 %v73
  %83 = vmatprep.subr.bf16.mxu0 0
  %84 = vmatpush1.bf16.msra.mxu0 %v74
  %85 = vmatprep.subr.bf16.mxu0 0
  %86 = vmatpush1.bf16.msra.mxu0 0
  %87 = vmatprep.subr.bf16.mxu0 0
  %88 = vmatpush1.bf16.msra.mxu0 0
  %89 = vmatprep.subr.bf16.mxu0 0
  %90 = vmatpush1.bf16.msra.mxu0 0
  %91 = vmatprep.subr.bf16.mxu0 0
  %92 = vmatpush1.bf16.msra.mxu0 0
  %93 = vmatprep.subr.bf16.mxu0 0
  %94 = vmatpush1.bf16.msra.mxu0 0
  %95 = vmatprep.subr.bf16.mxu0 0
  %96 = vmatpush1.bf16.msra.mxu0 0
  %97 = vmatprep.subr.bf16.mxu0 0
  %98 = vmatpush1.bf16.msra.mxu0 0
  %99 = vmatprep.subr.bf16.mxu0 0
  %100 = vmatpush1.bf16.msra.mxu0 0
  %101 = vmatprep.subr.bf16.mxu0 0
  %102 = vmatpush1.bf16.msra.mxu0 0
  %103 = vmatprep.subr.bf16.mxu0 0
  %104 = vmatpush1.bf16.msra.mxu0 0
  %105 = vmatprep.subr.bf16.mxu0 0
  %106 = vmatpush1.bf16.msra.mxu0 0
  %107 = vmatprep.subr.bf16.mxu0 0
  %108 = vmatpush1.bf16.msra.mxu0 0
  %109 = vmatprep.subr.bf16.mxu0 0
  %110 = vmatpush1.bf16.msra.mxu0 0
  %111 = vmatprep.subr.bf16.mxu0 0
  %112 = vmatpush1.bf16.msra.mxu0 0
  %113 = vmatprep.mubr.bf16.mxu0 0
  %114 = vmatmul.mubr.bf16.gmra.mrb[0].mxu0 %v79
  %v115 = vpop.f32.mrb[0].mxu0
  %v116 = vadd.f32 %v63, %v115
  %v117 = vpop.f32.mrb[0].mxu0
  %v118 = vpop.f32.mrb[0].mxu0
  %v119 = vpop.f32.mrb[0].mxu0
  %120 = vdwg.mxu0
  %v121 = vpack.c.bf16 %v57, %v57
  %v123 = vlaneseq
  %v124 = vshrl.u32 %v123, 7
  %v125 = vsub.s32 0, %v124
  %v126 = vrot.slane %v48, %v125
  %v132 = vunpack.c.l.b16 %v44
  %v133 = vunpack.c.l.b16 %v45
  %v134 = vunpack.c.l.b16 %v46
  %v135 = vunpack.c.l.b16 %v47
  %v136 = vpack.c.b16 %v133, %v132
  %v137 = vpack.c.b16 %v135, %v134
  %v141 = vsel %vm77, %v121, 0
  %143 = vmatprep.subr.bf16.mxu0 0
  %144 = vmatpush1.bf16.msra.mxu0 %v136
  %145 = vmatprep.subr.bf16.mxu0 0
  %146 = vmatpush1.bf16.msra.mxu0 %v137
  %147 = vmatprep.subr.bf16.mxu0 0
  %148 = vmatpush1.bf16.msra.mxu0 0
  %149 = vmatprep.subr.bf16.mxu0 0
  %150 = vmatpush1.bf16.msra.mxu0 0
  %151 = vmatprep.subr.bf16.mxu0 0
  %152 = vmatpush1.bf16.msra.mxu0 0
  %153 = vmatprep.subr.bf16.mxu0 0
  %154 = vmatpush1.bf16.msra.mxu0 0
  %155 = vmatprep.subr.bf16.mxu0 0
  %156 = vmatpush1.bf16.msra.mxu0 0
  %157 = vmatprep.subr.bf16.mxu0 0
  %158 = vmatpush1.bf16.msra.mxu0 0
  %159 = vmatprep.subr.bf16.mxu0 0
  %160 = vmatpush1.bf16.msra.mxu0 0
  %161 = vmatprep.subr.bf16.mxu0 0
  %162 = vmatpush1.bf16.msra.mxu0 0
  %163 = vmatprep.subr.bf16.mxu0 0
  %164 = vmatpush1.bf16.msra.mxu0 0
  %165 = vmatprep.subr.bf16.mxu0 0
  %166 = vmatpush1.bf16.msra.mxu0 0
  %167 = vmatprep.subr.bf16.mxu0 0
  %168 = vmatpush1.bf16.msra.mxu0 0
  %169 = vmatprep.subr.bf16.mxu0 0
  %170 = vmatpush1.bf16.msra.mxu0 0
  %171 = vmatprep.subr.bf16.mxu0 0
  %172 = vmatpush1.bf16.msra.mxu0 0
  %173 = vmatprep.subr.bf16.mxu0 0
  %174 = vmatpush1.bf16.msra.mxu0 0
  %175 = vmatprep.mubr.bf16.mxu0 0
  %176 = vmatmul.mubr.bf16.gmra.mrb[0].mxu0 %v141
  %v177 = vpop.f32.mrb[0].mxu0
  %v178 = vadd.f32 %v126, %v177
  %v179 = vpop.f32.mrb[0].mxu0
  %v180 = vpop.f32.mrb[0].mxu0
  %v181 = vpop.f32.mrb[0].mxu0
  %182 = vdwg.mxu0
  %v183 = vld [vmem:[%s2] sm:$0xff]
  %v184 = vpack.c.bf16 %v116, %v116
  %v185 = vpack.c.bf16 %v178, %v178
  %vm186 = vcmask 64512
  %v188 = vsel %vm186, %v184, 0
  %v191 = vsel %vm186, %v185, 0
  %193 = vmatprep.subr.bf16.mxu0 0
  %194 = vmatpush1.bf16.xpose.msra.mxu0 %v191
  %195 = vmatprep.subr.bf16.mxu0 0
  %196 = vmatpush1.bf16.xpose.msra.mxu0 0
  %197 = vmatprep.subr.bf16.mxu0 0
  %198 = vmatpush1.bf16.xpose.msra.mxu0 0
  %199 = vmatprep.subr.bf16.mxu0 0
  %200 = vmatpush1.bf16.xpose.msra.mxu0 0
  %201 = vmatprep.subr.bf16.mxu0 0
  %202 = vmatpush1.bf16.xpose.msra.mxu0 0
  %203 = vmatprep.subr.bf16.mxu0 0
  %204 = vmatpush1.bf16.xpose.msra.mxu0 0
  %205 = vmatprep.subr.bf16.mxu0 0
  %206 = vmatpush1.bf16.xpose.msra.mxu0 0
  %207 = vmatprep.subr.bf16.mxu0 0
  %208 = vmatpush1.bf16.xpose.msra.mxu0 0
  %209 = vmatprep.subr.bf16.mxu0 0
  %210 = vmatpush1.bf16.xpose.msra.mxu0 0
  %211 = vmatprep.subr.bf16.mxu0 0
  %212 = vmatpush1.bf16.xpose.msra.mxu0 0
  %213 = vmatprep.subr.bf16.mxu0 0
  %214 = vmatpush1.bf16.xpose.msra.mxu0 0
  %215 = vmatprep.subr.bf16.mxu0 0
  %216 = vmatpush1.bf16.xpose.msra.mxu0 0
  %217 = vmatprep.subr.bf16.mxu0 0
  %218 = vmatpush1.bf16.xpose.msra.mxu0 0
  %219 = vmatprep.subr.bf16.mxu0 0
  %220 = vmatpush1.bf16.xpose.msra.mxu0 0
  %221 = vmatprep.subr.bf16.mxu0 0
  %222 = vmatpush1.bf16.xpose.msra.mxu0 0
  %223 = vmatprep.subr.bf16.mxu0 0
  %224 = vmatpush1.bf16.xpose.msra.mxu0 0
  %225 = vmatprep.mubr.bf16.mxu0 0
  %226 = vmatmul.mubr.bf16.gmra.mrb[0].mxu0 %v188
  %v227 = vpop.f32.mrb[0].mxu0
  %v228 = vadd.f32 0.0, %v227
  %v229 = vpop.f32.mrb[0].mxu0
  %v230 = vpop.f32.mrb[0].mxu0
  %v231 = vpop.f32.mrb[0].mxu0
  %232 = vdwg.mxu0
  %v233 = vmul.f32 %v228, 0.35355338
  %v234 = vadd.f32 %v233, %v183
  %v235 = vsel %vm186, %v234, -inf
  %236 = vmax.xlane.f32.xlu0 %v235
  %v237 = vpop.xlane.xlu0 %236
  %v238 = vsub.f32 %v234, %v237
  %v239 = vmul.f32 %v238, 1.442695
  %v240 = vpow.pop %v239
  %v241 = vsel %vm186, %v240, 0.0
  %242 = vadd.xlane.f32.xlu0 %v241
  %v243 = vpop.xlane.xlu0 %242
  %v244 = vrcp.pop %v243
  %v245 = vmul.f32 %v240, %v244
  %v246 = vpack.c.bf16 %v245, %v245
  %248 = vrot.lane.b32.xlu0 %v185, 96
  %v249 = vpop.permute.xlu0 %248
  %v251 = vsel %vm186, %v246, 0
  %vm253 = vcmask 1043456
  %v255 = vsel %vm253, %v249, 0
  %257 = vmatprep.subr.bf16.mxu0 0
  %258 = vmatpush1.bf16.msra.mxu0 %v255
  %259 = vmatprep.subr.bf16.mxu0 0
  %260 = vmatpush1.bf16.msra.mxu0 0
  %261 = vmatprep.subr.bf16.mxu0 0
  %262 = vmatpush1.bf16.msra.mxu0 0
  %263 = vmatprep.subr.bf16.mxu0 0
  %264 = vmatpush1.bf16.msra.mxu0 0
  %265 = vmatprep.subr.bf16.mxu0 0
  %266 = vmatpush1.bf16.msra.mxu0 0
  %267 = vmatprep.subr.bf16.mxu0 0
  %268 = vmatpush1.bf16.msra.mxu0 0
  %269 = vmatprep.subr.bf16.mxu0 0
  %270 = vmatpush1.bf16.msra.mxu0 0
  %271 = vmatprep.subr.bf16.mxu0 0
  %272 = vmatpush1.bf16.msra.mxu0 0
  %273 = vmatprep.subr.bf16.mxu0 0
  %274 = vmatpush1.bf16.msra.mxu0 0
  %275 = vmatprep.subr.bf16.mxu0 0
  %276 = vmatpush1.bf16.msra.mxu0 0
  %277 = vmatprep.subr.bf16.mxu0 0
  %278 = vmatpush1.bf16.msra.mxu0 0
  %279 = vmatprep.subr.bf16.mxu0 0
  %280 = vmatpush1.bf16.msra.mxu0 0
  %281 = vmatprep.subr.bf16.mxu0 0
  %282 = vmatpush1.bf16.msra.mxu0 0
  %283 = vmatprep.subr.bf16.mxu0 0
  %284 = vmatpush1.bf16.msra.mxu0 0
  %285 = vmatprep.subr.bf16.mxu0 0
  %286 = vmatpush1.bf16.msra.mxu0 0
  %287 = vmatprep.subr.bf16.mxu0 0
  %288 = vmatpush1.bf16.msra.mxu0 0
  %289 = vmatprep.mubr.bf16.mxu0 0
  %290 = vmatmul.mubr.bf16.gmra.mrb[0].mxu0 %v251
  %v291 = vpop.f32.mrb[0].mxu0
  %v292 = vadd.f32 0.0, %v291
  %v293 = vpop.f32.mrb[0].mxu0
  %v294 = vpop.f32.mrb[0].mxu0
  %v295 = vpop.f32.mrb[0].mxu0
  %296 = vdwg.mxu0
  %298 = vrot.lane.b32.xlu0 %v184, 120
  %v299 = vpop.permute.xlu0 %298
  %300 = vrot.lane.b32.xlu0 %v185, 120
  %v301 = vpop.permute.xlu0 %300
  %v303 = vsel %vm186, %v299, 0
  %v306 = vsel %vm186, %v301, 0
  %308 = vmatprep.subr.bf16.mxu0 0
  %309 = vmatpush1.bf16.xpose.msra.mxu0 %v306
  %310 = vmatprep.subr.bf16.mxu0 0
  %311 = vmatpush1.bf16.xpose.msra.mxu0 0
  %312 = vmatprep.subr.bf16.mxu0 0
  %313 = vmatpush1.bf16.xpose.msra.mxu0 0
  %314 = vmatprep.subr.bf16.mxu0 0
  %315 = vmatpush1.bf16.xpose.msra.mxu0 0
  %316 = vmatprep.subr.bf16.mxu0 0
  %317 = vmatpush1.bf16.xpose.msra.mxu0 0
  %318 = vmatprep.subr.bf16.mxu0 0
  %319 = vmatpush1.bf16.xpose.msra.mxu0 0
  %320 = vmatprep.subr.bf16.mxu0 0
  %321 = vmatpush1.bf16.xpose.msra.mxu0 0
  %322 = vmatprep.subr.bf16.mxu0 0
  %323 = vmatpush1.bf16.xpose.msra.mxu0 0
  %324 = vmatprep.subr.bf16.mxu0 0
  %325 = vmatpush1.bf16.xpose.msra.mxu0 0
  %326 = vmatprep.subr.bf16.mxu0 0
  %327 = vmatpush1.bf16.xpose.msra.mxu0 0
  %328 = vmatprep.subr.bf16.mxu0 0
  %329 = vmatpush1.bf16.xpose.msra.mxu0 0
  %330 = vmatprep.subr.bf16.mxu0 0
  %331 = vmatpush1.bf16.xpose.msra.mxu0 0
  %332 = vmatprep.subr.bf16.mxu0 0
  %333 = vmatpush1.bf16.xpose.msra.mxu0 0
  %334 = vmatprep.subr.bf16.mxu0 0
  %335 = vmatpush1.bf16.xpose.msra.mxu0 0
  %336 = vmatprep.subr.bf16.mxu0 0
  %337 = vmatpush1.bf16.xpose.msra.mxu0 0
  %338 = vmatprep.subr.bf16.mxu0 0
  %339 = vmatpush1.bf16.xpose.msra.mxu0 0
  %340 = vmatprep.mubr.bf16.mxu0 0
  %341 = vmatmul.mubr.bf16.gmra.mrb[0].mxu0 %v303
  %v342 = vpop.f32.mrb[0].mxu0
  %v343 = vadd.f32 0.0, %v342
  %v344 = vpop.f32.mrb[0].mxu0
  %v345 = vpop.f32.mrb[0].mxu0
  %v346 = vpop.f32.mrb[0].mxu0
  %347 = vdwg.mxu0
  %v348 = vmul.f32 %v343, 0.35355338
  %v349 = vadd.f32 %v348, %v183
  %v350 = vsel %vm186, %v349, -inf
  %351 = vmax.xlane.f32.xlu0 %v350
  %v352 = vpop.xlane.xlu0 %351
  %v353 = vsub.f32 %v349, %v352
  %v354 = vmul.f32 %v353, 1.442695
  %v355 = vpow.pop %v354
  %v356 = vsel %vm186, %v355, 0.0
  %357 = vadd.xlane.f32.xlu0 %v356
  %v358 = vpop.xlane.xlu0 %357
  %v359 = vrcp.pop %v358
  %v360 = vmul.f32 %v355, %v359
  %v361 = vpack.c.bf16 %v360, %v360
  %362 = vrot.lane.b32.xlu0 %v185, 88
  %v363 = vpop.permute.xlu0 %362
  %v365 = vsel %vm186, %v361, 0
  %v368 = vsel %vm253, %v363, 0
  %370 = vmatprep.subr.bf16.mxu0 0
  %371 = vmatpush1.bf16.msra.mxu0 %v368
  %372 = vmatprep.subr.bf16.mxu0 0
  %373 = vmatpush1.bf16.msra.mxu0 0
  %374 = vmatprep.subr.bf16.mxu0 0
  %375 = vmatpush1.bf16.msra.mxu0 0
  %376 = vmatprep.subr.bf16.mxu0 0
  %377 = vmatpush1.bf16.msra.mxu0 0
  %378 = vmatprep.subr.bf16.mxu0 0
  %379 = vmatpush1.bf16.msra.mxu0 0
  %380 = vmatprep.subr.bf16.mxu0 0
  %381 = vmatpush1.bf16.msra.mxu0 0
  %382 = vmatprep.subr.bf16.mxu0 0
  %383 = vmatpush1.bf16.msra.mxu0 0
  %384 = vmatprep.subr.bf16.mxu0 0
  %385 = vmatpush1.bf16.msra.mxu0 0
  %386 = vmatprep.subr.bf16.mxu0 0
  %387 = vmatpush1.bf16.msra.mxu0 0
  %388 = vmatprep.subr.bf16.mxu0 0
  %389 = vmatpush1.bf16.msra.mxu0 0
  %390 = vmatprep.subr.bf16.mxu0 0
  %391 = vmatpush1.bf16.msra.mxu0 0
  %392 = vmatprep.subr.bf16.mxu0 0
  %393 = vmatpush1.bf16.msra.mxu0 0
  %394 = vmatprep.subr.bf16.mxu0 0
  %395 = vmatpush1.bf16.msra.mxu0 0
  %396 = vmatprep.subr.bf16.mxu0 0
  %397 = vmatpush1.bf16.msra.mxu0 0
  %398 = vmatprep.subr.bf16.mxu0 0
  %399 = vmatpush1.bf16.msra.mxu0 0
  %400 = vmatprep.subr.bf16.mxu0 0
  %401 = vmatpush1.bf16.msra.mxu0 0
  %402 = vmatprep.mubr.bf16.mxu0 0
  %403 = vmatmul.mubr.bf16.gmra.mrb[0].mxu0 %v365
  %v404 = vpop.f32.mrb[0].mxu0
  %v405 = vadd.f32 0.0, %v404
  %v406 = vpop.f32.mrb[0].mxu0
  %v407 = vpop.f32.mrb[0].mxu0
  %v408 = vpop.f32.mrb[0].mxu0
  %409 = vdwg.mxu0
  %410 = vrot.lane.b32.xlu0 %v184, 112
  %v411 = vpop.permute.xlu0 %410
  %412 = vrot.lane.b32.xlu0 %v185, 112
  %v413 = vpop.permute.xlu0 %412
  %v415 = vsel %vm186, %v411, 0
  %v418 = vsel %vm186, %v413, 0
  %420 = vmatprep.subr.bf16.mxu0 0
  %421 = vmatpush1.bf16.xpose.msra.mxu0 %v418
  %422 = vmatprep.subr.bf16.mxu0 0
  %423 = vmatpush1.bf16.xpose.msra.mxu0 0
  %424 = vmatprep.subr.bf16.mxu0 0
  %425 = vmatpush1.bf16.xpose.msra.mxu0 0
  %426 = vmatprep.subr.bf16.mxu0 0
  %427 = vmatpush1.bf16.xpose.msra.mxu0 0
  %428 = vmatprep.subr.bf16.mxu0 0
  %429 = vmatpush1.bf16.xpose.msra.mxu0 0
  %430 = vmatprep.subr.bf16.mxu0 0
  %431 = vmatpush1.bf16.xpose.msra.mxu0 0
  %432 = vmatprep.subr.bf16.mxu0 0
  %433 = vmatpush1.bf16.xpose.msra.mxu0 0
  %434 = vmatprep.subr.bf16.mxu0 0
  %435 = vmatpush1.bf16.xpose.msra.mxu0 0
  %436 = vmatprep.subr.bf16.mxu0 0
  %437 = vmatpush1.bf16.xpose.msra.mxu0 0
  %438 = vmatprep.subr.bf16.mxu0 0
  %439 = vmatpush1.bf16.xpose.msra.mxu0 0
  %440 = vmatprep.subr.bf16.mxu0 0
  %441 = vmatpush1.bf16.xpose.msra.mxu0 0
  %442 = vmatprep.subr.bf16.mxu0 0
  %443 = vmatpush1.bf16.xpose.msra.mxu0 0
  %444 = vmatprep.subr.bf16.mxu0 0
  %445 = vmatpush1.bf16.xpose.msra.mxu0 0
  %446 = vmatprep.subr.bf16.mxu0 0
  %447 = vmatpush1.bf16.xpose.msra.mxu0 0
  %448 = vmatprep.subr.bf16.mxu0 0
  %449 = vmatpush1.bf16.xpose.msra.mxu0 0
  %450 = vmatprep.subr.bf16.mxu0 0
  %451 = vmatpush1.bf16.xpose.msra.mxu0 0
  %452 = vmatprep.mubr.bf16.mxu0 0
  %453 = vmatmul.mubr.bf16.gmra.mrb[0].mxu0 %v415
  %v454 = vpop.f32.mrb[0].mxu0
  %v455 = vadd.f32 0.0, %v454
  %v456 = vpop.f32.mrb[0].mxu0
  %v457 = vpop.f32.mrb[0].mxu0
  %v458 = vpop.f32.mrb[0].mxu0
  %459 = vdwg.mxu0
  %v460 = vmul.f32 %v455, 0.35355338
  %v461 = vadd.f32 %v460, %v183
  %v462 = vsel %vm186, %v461, -inf
  %463 = vmax.xlane.f32.xlu0 %v462
  %v464 = vpop.xlane.xlu0 %463
  %v465 = vsub.f32 %v461, %v464
  %v466 = vmul.f32 %v465, 1.442695
  %v467 = vpow.pop %v466
  %v468 = vsel %vm186, %v467, 0.0
  %469 = vadd.xlane.f32.xlu0 %v468
  %v470 = vpop.xlane.xlu0 %469
  %v471 = vrcp.pop %v470
  %v472 = vmul.f32 %v467, %v471
  %v473 = vpack.c.bf16 %v472, %v472
  %474 = vrot.lane.b32.xlu0 %v185, 80
  %v475 = vpop.permute.xlu0 %474
  %v477 = vsel %vm186, %v473, 0
  %v480 = vsel %vm253, %v475, 0
  %482 = vmatprep.subr.bf16.mxu0 0
  %483 = vmatpush1.bf16.msra.mxu0 %v480
  %484 = vmatprep.subr.bf16.mxu0 0
  %485 = vmatpush1.bf16.msra.mxu0 0
  %486 = vmatprep.subr.bf16.mxu0 0
  %487 = vmatpush1.bf16.msra.mxu0 0
  %488 = vmatprep.subr.bf16.mxu0 0
  %489 = vmatpush1.bf16.msra.mxu0 0
  %490 = vmatprep.subr.bf16.mxu0 0
  %491 = vmatpush1.bf16.msra.mxu0 0
  %492 = vmatprep.subr.bf16.mxu0 0
  %493 = vmatpush1.bf16.msra.mxu0 0
  %494 = vmatprep.subr.bf16.mxu0 0
  %495 = vmatpush1.bf16.msra.mxu0 0
  %496 = vmatprep.subr.bf16.mxu0 0
  %497 = vmatpush1.bf16.msra.mxu0 0
  %498 = vmatprep.subr.bf16.mxu0 0
  %499 = vmatpush1.bf16.msra.mxu0 0
  %500 = vmatprep.subr.bf16.mxu0 0
  %501 = vmatpush1.bf16.msra.mxu0 0
  %502 = vmatprep.subr.bf16.mxu0 0
  %503 = vmatpush1.bf16.msra.mxu0 0
  %504 = vmatprep.subr.bf16.mxu0 0
  %505 = vmatpush1.bf16.msra.mxu0 0
  %506 = vmatprep.subr.bf16.mxu0 0
  %507 = vmatpush1.bf16.msra.mxu0 0
  %508 = vmatprep.subr.bf16.mxu0 0
  %509 = vmatpush1.bf16.msra.mxu0 0
  %510 = vmatprep.subr.bf16.mxu0 0
  %511 = vmatpush1.bf16.msra.mxu0 0
  %512 = vmatprep.subr.bf16.mxu0 0
  %513 = vmatpush1.bf16.msra.mxu0 0
  %514 = vmatprep.mubr.bf16.mxu0 0
  %515 = vmatmul.mubr.bf16.gmra.mrb[0].mxu0 %v477
  %v516 = vpop.f32.mrb[0].mxu0
  %v517 = vadd.f32 0.0, %v516
  %v518 = vpop.f32.mrb[0].mxu0
  %v519 = vpop.f32.mrb[0].mxu0
  %v520 = vpop.f32.mrb[0].mxu0
  %521 = vdwg.mxu0
  %522 = vrot.lane.b32.xlu0 %v184, 104
  %v523 = vpop.permute.xlu0 %522
  %524 = vrot.lane.b32.xlu0 %v185, 104
  %v525 = vpop.permute.xlu0 %524
  %v527 = vsel %vm186, %v523, 0
  %v530 = vsel %vm186, %v525, 0
  %532 = vmatprep.subr.bf16.mxu0 0
  %533 = vmatpush1.bf16.xpose.msra.mxu0 %v530
  %534 = vmatprep.subr.bf16.mxu0 0
  %535 = vmatpush1.bf16.xpose.msra.mxu0 0
  %536 = vmatprep.subr.bf16.mxu0 0
  %537 = vmatpush1.bf16.xpose.msra.mxu0 0
  %538 = vmatprep.subr.bf16.mxu0 0
  %539 = vmatpush1.bf16.xpose.msra.mxu0 0
  %540 = vmatprep.subr.bf16.mxu0 0
  %541 = vmatpush1.bf16.xpose.msra.mxu0 0
  %542 = vmatprep.subr.bf16.mxu0 0
  %543 = vmatpush1.bf16.xpose.msra.mxu0 0
  %544 = vmatprep.subr.bf16.mxu0 0
  %545 = vmatpush1.bf16.xpose.msra.mxu0 0
  %546 = vmatprep.subr.bf16.mxu0 0
  %547 = vmatpush1.bf16.xpose.msra.mxu0 0
  %548 = vmatprep.subr.bf16.mxu0 0
  %549 = vmatpush1.bf16.xpose.msra.mxu0 0
  %550 = vmatprep.subr.bf16.mxu0 0
  %551 = vmatpush1.bf16.xpose.msra.mxu0 0
  %552 = vmatprep.subr.bf16.mxu0 0
  %553 = vmatpush1.bf16.xpose.msra.mxu0 0
  %554 = vmatprep.subr.bf16.mxu0 0
  %555 = vmatpush1.bf16.xpose.msra.mxu0 0
  %556 = vmatprep.subr.bf16.mxu0 0
  %557 = vmatpush1.bf16.xpose.msra.mxu0 0
  %558 = vmatprep.subr.bf16.mxu0 0
  %559 = vmatpush1.bf16.xpose.msra.mxu0 0
  %560 = vmatprep.subr.bf16.mxu0 0
  %561 = vmatpush1.bf16.xpose.msra.mxu0 0
  %562 = vmatprep.subr.bf16.mxu0 0
  %563 = vmatpush1.bf16.xpose.msra.mxu0 0
  %564 = vmatprep.mubr.bf16.mxu0 0
  %565 = vmatmul.mubr.bf16.gmra.mrb[0].mxu0 %v527
  %v566 = vpop.f32.mrb[0].mxu0
  %v567 = vadd.f32 0.0, %v566
  %v568 = vpop.f32.mrb[0].mxu0
  %v569 = vpop.f32.mrb[0].mxu0
  %v570 = vpop.f32.mrb[0].mxu0
  %571 = vdwg.mxu0
  %v572 = vmul.f32 %v567, 0.35355338
  %v573 = vadd.f32 %v572, %v183
  %v574 = vsel %vm186, %v573, -inf
  %575 = vmax.xlane.f32.xlu0 %v574
  %v576 = vpop.xlane.xlu0 %575
  %v577 = vsub.f32 %v573, %v576
  %v578 = vmul.f32 %v577, 1.442695
  %v579 = vpow.pop %v578
  %v580 = vsel %vm186, %v579, 0.0
  %581 = vadd.xlane.f32.xlu0 %v580
  %v582 = vpop.xlane.xlu0 %581
  %v583 = vrcp.pop %v582
  %v584 = vmul.f32 %v579, %v583
  %v585 = vpack.c.bf16 %v584, %v584
  %586 = vrot.lane.b32.xlu0 %v185, 72
  %v587 = vpop.permute.xlu0 %586
  %v589 = vsel %vm186, %v585, 0
  %v592 = vsel %vm253, %v587, 0
  %594 = vmatprep.subr.bf16.mxu0 0
  %595 = vmatpush1.bf16.msra.mxu0 %v592
  %596 = vmatprep.subr.bf16.mxu0 0
  %597 = vmatpush1.bf16.msra.mxu0 0
  %598 = vmatprep.subr.bf16.mxu0 0
  %599 = vmatpush1.bf16.msra.mxu0 0
  %600 = vmatprep.subr.bf16.mxu0 0
  %601 = vmatpush1.bf16.msra.mxu0 0
  %602 = vmatprep.subr.bf16.mxu0 0
  %603 = vmatpush1.bf16.msra.mxu0 0
  %604 = vmatprep.subr.bf16.mxu0 0
  %605 = vmatpush1.bf16.msra.mxu0 0
  %606 = vmatprep.subr.bf16.mxu0 0
  %607 = vmatpush1.bf16.msra.mxu0 0
  %608 = vmatprep.subr.bf16.mxu0 0
  %609 = vmatpush1.bf16.msra.mxu0 0
  %610 = vmatprep.subr.bf16.mxu0 0
  %611 = vmatpush1.bf16.msra.mxu0 0
  %612 = vmatprep.subr.bf16.mxu0 0
  %613 = vmatpush1.bf16.msra.mxu0 0
  %614 = vmatprep.subr.bf16.mxu0 0
  %615 = vmatpush1.bf16.msra.mxu0 0
  %616 = vmatprep.subr.bf16.mxu0 0
  %617 = vmatpush1.bf16.msra.mxu0 0
  %618 = vmatprep.subr.bf16.mxu0 0
  %619 = vmatpush1.bf16.msra.mxu0 0
  %620 = vmatprep.subr.bf16.mxu0 0
  %621 = vmatpush1.bf16.msra.mxu0 0
  %622 = vmatprep.subr.bf16.mxu0 0
  %623 = vmatpush1.bf16.msra.mxu0 0
  %624 = vmatprep.subr.bf16.mxu0 0
  %625 = vmatpush1.bf16.msra.mxu0 0
  %626 = vmatprep.mubr.bf16.mxu0 0
  %627 = vmatmul.mubr.bf16.gmra.mrb[0].mxu0 %v589
  %v628 = vpop.f32.mrb[0].mxu0
  %v629 = vadd.f32 0.0, %v628
  %v630 = vpop.f32.mrb[0].mxu0
  %v631 = vpop.f32.mrb[0].mxu0
  %v632 = vpop.f32.mrb[0].mxu0
  %633 = vdwg.mxu0
  %635 = vrot.lane.b32.xlu0 %v405, 8
  %v636 = vpop.permute.xlu0 %635
  %639 = vrot.lane.b32.xlu0 %v517, 16
  %v640 = vpop.permute.xlu0 %639
  %643 = vrot.lane.b32.xlu0 %v629, 24
  %v644 = vpop.permute.xlu0 %643
  %v646 = vsel %vm186, %v292, %v636
  %vm647 = vcmask 130048
  %v648 = vsel %vm647, %v646, %v640
  %vm649 = vcmask 195584
  %v650 = vsel %vm649, %v648, %v644
  %v651 = vpack.c.bf16 %v650, %v650
  %v653 = vlaneseq
  %v654 = vshrl.u32 %v653, 7
  %v655 = vsub.s32 0, %v654
  %v656 = vrot.slane %v53, %v655
  %v662 = vunpack.c.l.b16 %v49
  %v663 = vunpack.c.l.b16 %v50
  %v664 = vunpack.c.l.b16 %v51
  %v665 = vunpack.c.l.b16 %v52
  %v666 = vpack.c.b16 %v663, %v662
  %v667 = vpack.c.b16 %v665, %v664
  %v671 = vsel %vm77, %v651, 0
  %673 = vmatprep.subr.bf16.mxu0 0
  %674 = vmatpush1.bf16.msra.mxu0 %v666
  %675 = vmatprep.subr.bf16.mxu0 0
  %676 = vmatpush1.bf16.msra.mxu0 %v667
  %677 = vmatprep.subr.bf16.mxu0 0
  %678 = vmatpush1.bf16.msra.mxu0 0
  %679 = vmatprep.subr.bf16.mxu0 0
  %680 = vmatpush1.bf16.msra.mxu0 0
  %681 = vmatprep.subr.bf16.mxu0 0
  %682 = vmatpush1.bf16.msra.mxu0 0
  %683 = vmatprep.subr.bf16.mxu0 0
  %684 = vmatpush1.bf16.msra.mxu0 0
  %685 = vmatprep.subr.bf16.mxu0 0
  %686 = vmatpush1.bf16.msra.mxu0 0
  %687 = vmatprep.subr.bf16.mxu0 0
  %688 = vmatpush1.bf16.msra.mxu0 0
  %689 = vmatprep.subr.bf16.mxu0 0
  %690 = vmatpush1.bf16.msra.mxu0 0
  %691 = vmatprep.subr.bf16.mxu0 0
  %692 = vmatpush1.bf16.msra.mxu0 0
  %693 = vmatprep.subr.bf16.mxu0 0
  %694 = vmatpush1.bf16.msra.mxu0 0
  %695 = vmatprep.subr.bf16.mxu0 0
  %696 = vmatpush1.bf16.msra.mxu0 0
  %697 = vmatprep.subr.bf16.mxu0 0
  %698 = vmatpush1.bf16.msra.mxu0 0
  %699 = vmatprep.subr.bf16.mxu0 0
  %700 = vmatpush1.bf16.msra.mxu0 0
  %701 = vmatprep.subr.bf16.mxu0 0
  %702 = vmatpush1.bf16.msra.mxu0 0
  %703 = vmatprep.subr.bf16.mxu0 0
  %704 = vmatpush1.bf16.msra.mxu0 0
  %705 = vmatprep.mubr.bf16.mxu0 0
  %706 = vmatmul.mubr.bf16.gmra.mrb[0].mxu0 %v671
  %v707 = vpop.f32.mrb[0].mxu0
  %v708 = vadd.f32 %v656, %v707
  %v709 = vpop.f32.mrb[0].mxu0
  %v710 = vpop.f32.mrb[0].mxu0
  %v711 = vpop.f32.mrb[0].mxu0
  %712 = vdwg.mxu0
  %v713 = vadd.f32 %v56, %v708
  %v714 = vsel %vm77, %v713, 0.0
  %715 = vadd.xlane.f32.xlu0 %v714
  %v716 = vpop.xlane.xlu0 %715
  %v717 = vrcp.pop 32.0
  %v718 = vmul.f32 %v716, %v717
  %v719 = vsub.f32 %v713, %v718
  %v720 = vmul.f32 %v719, %v719
  %v721 = vsel %vm77, %v720, 0.0
  %722 = vadd.xlane.f32.xlu0 %v721
  %v723 = vpop.xlane.xlu0 %722
  %v724 = vmul.f32 %v723, %v717
  %v725 = vadd.f32 %v724, 1e-05
  %v726 = vrsqrt.pop %v725
  %v727 = vmul.f32 %v719, %v726
  %v729 = vlaneseq
  %v730 = vshrl.u32 %v729, 7
  %v731 = vsub.s32 0, %v730
  %v732 = vrot.slane %v54, %v731
  %v734 = vmul.f32 %v727, %v732
  %v736 = vlaneseq
  %v737 = vshrl.u32 %v736, 7
  %v738 = vsub.s32 0, %v737
  %v739 = vrot.slane %v55, %v738
  %v741 = vadd.f32 %v734, %v739
  %742 = vst.msk [vmem:[%s11] sm:$0xff] %vm77, %v741
  %s743 = scalar_lea.vmem %s0, 8
  %v744 = vld [vmem:[%s743] sm:$0xff]
  %s745 = scalar_lea.vmem %s1, 8
  %v746 = vld [vmem:[%s745] sm:$0xff]
  %v747 = vpack.c.bf16 %v744, %v744
  %v749 = vsel %vm77, %v747, 0
  %751 = vmatprep.subr.bf16.mxu0 0
  %752 = vmatpush1.bf16.msra.mxu0 %v73
  %753 = vmatprep.subr.bf16.mxu0 0
  %754 = vmatpush1.bf16.msra.mxu0 %v74
  %755 = vmatprep.subr.bf16.mxu0 0
  %756 = vmatpush1.bf16.msra.mxu0 0
  %757 = vmatprep.subr.bf16.mxu0 0
  %758 = vmatpush1.bf16.msra.mxu0 0
  %759 = vmatprep.subr.bf16.mxu0 0
  %760 = vmatpush1.bf16.msra.mxu0 0
  %761 = vmatprep.subr.bf16.mxu0 0
  %762 = vmatpush1.bf16.msra.mxu0 0
  %763 = vmatprep.subr.bf16.mxu0 0
  %764 = vmatpush1.bf16.msra.mxu0 0
  %765 = vmatprep.subr.bf16.mxu0 0
  %766 = vmatpush1.bf16.msra.mxu0 0
  %767 = vmatprep.subr.bf16.mxu0 0
  %768 = vmatpush1.bf16.msra.mxu0 0
  %769 = vmatprep.subr.bf16.mxu0 0
  %770 = vmatpush1.bf16.msra.mxu0 0
  %771 = vmatprep.subr.bf16.mxu0 0
  %772 = vmatpush1.bf16.msra.mxu0 0
  %773 = vmatprep.subr.bf16.mxu0 0
  %774 = vmatpush1.bf16.msra.mxu0 0
  %775 = vmatprep.subr.bf16.mxu0 0
  %776 = vmatpush1.bf16.msra.mxu0 0
  %777 = vmatprep.subr.bf16.mxu0 0
  %778 = vmatpush1.bf16.msra.mxu0 0
  %779 = vmatprep.subr.bf16.mxu0 0
  %780 = vmatpush1.bf16.msra.mxu0 0
  %781 = vmatprep.subr.bf16.mxu0 0
  %782 = vmatpush1.bf16.msra.mxu0 0
  %783 = vmatprep.mubr.bf16.mxu0 0
  %784 = vmatmul.mubr.bf16.gmra.mrb[0].mxu0 %v749
  %v785 = vpop.f32.mrb[0].mxu0
  %v786 = vadd.f32 %v63, %v785
  %v787 = vpop.f32.mrb[0].mxu0
  %v788 = vpop.f32.mrb[0].mxu0
  %v789 = vpop.f32.mrb[0].mxu0
  %790 = vdwg.mxu0
  %v791 = vpack.c.bf16 %v746, %v746
  %v793 = vsel %vm77, %v791, 0
  %795 = vmatprep.subr.bf16.mxu0 0
  %796 = vmatpush1.bf16.msra.mxu0 %v136
  %797 = vmatprep.subr.bf16.mxu0 0
  %798 = vmatpush1.bf16.msra.mxu0 %v137
  %799 = vmatprep.subr.bf16.mxu0 0
  %800 = vmatpush1.bf16.msra.mxu0 0
  %801 = vmatprep.subr.bf16.mxu0 0
  %802 = vmatpush1.bf16.msra.mxu0 0
  %803 = vmatprep.subr.bf16.mxu0 0
  %804 = vmatpush1.bf16.msra.mxu0 0
  %805 = vmatprep.subr.bf16.mxu0 0
  %806 = vmatpush1.bf16.msra.mxu0 0
  %807 = vmatprep.subr.bf16.mxu0 0
  %808 = vmatpush1.bf16.msra.mxu0 0
  %809 = vmatprep.subr.bf16.mxu0 0
  %810 = vmatpush1.bf16.msra.mxu0 0
  %811 = vmatprep.subr.bf16.mxu0 0
  %812 = vmatpush1.bf16.msra.mxu0 0
  %813 = vmatprep.subr.bf16.mxu0 0
  %814 = vmatpush1.bf16.msra.mxu0 0
  %815 = vmatprep.subr.bf16.mxu0 0
  %816 = vmatpush1.bf16.msra.mxu0 0
  %817 = vmatprep.subr.bf16.mxu0 0
  %818 = vmatpush1.bf16.msra.mxu0 0
  %819 = vmatprep.subr.bf16.mxu0 0
  %820 = vmatpush1.bf16.msra.mxu0 0
  %821 = vmatprep.subr.bf16.mxu0 0
  %822 = vmatpush1.bf16.msra.mxu0 0
  %823 = vmatprep.subr.bf16.mxu0 0
  %824 = vmatpush1.bf16.msra.mxu0 0
  %825 = vmatprep.subr.bf16.mxu0 0
  %826 = vmatpush1.bf16.msra.mxu0 0
  %827 = vmatprep.mubr.bf16.mxu0 0
  %828 = vmatmul.mubr.bf16.gmra.mrb[0].mxu0 %v793
  %v829 = vpop.f32.mrb[0].mxu0
  %v830 = vadd.f32 %v126, %v829
  %v831 = vpop.f32.mrb[0].mxu0
  %v832 = vpop.f32.mrb[0].mxu0
  %v833 = vpop.f32.mrb[0].mxu0
  %834 = vdwg.mxu0
  %s835 = scalar_lea.vmem %s2, 8
  %v836 = vld [vmem:[%s835] sm:$0xff]
  %v837 = vpack.c.bf16 %v786, %v786
  %v838 = vpack.c.bf16 %v830, %v830
  %v840 = vsel %vm186, %v837, 0
  %v843 = vsel %vm186, %v838, 0
  %845 = vmatprep.subr.bf16.mxu0 0
  %846 = vmatpush1.bf16.xpose.msra.mxu0 %v843
  %847 = vmatprep.subr.bf16.mxu0 0
  %848 = vmatpush1.bf16.xpose.msra.mxu0 0
  %849 = vmatprep.subr.bf16.mxu0 0
  %850 = vmatpush1.bf16.xpose.msra.mxu0 0
  %851 = vmatprep.subr.bf16.mxu0 0
  %852 = vmatpush1.bf16.xpose.msra.mxu0 0
  %853 = vmatprep.subr.bf16.mxu0 0
  %854 = vmatpush1.bf16.xpose.msra.mxu0 0
  %855 = vmatprep.subr.bf16.mxu0 0
  %856 = vmatpush1.bf16.xpose.msra.mxu0 0
  %857 = vmatprep.subr.bf16.mxu0 0
  %858 = vmatpush1.bf16.xpose.msra.mxu0 0
  %859 = vmatprep.subr.bf16.mxu0 0
  %860 = vmatpush1.bf16.xpose.msra.mxu0 0
  %861 = vmatprep.subr.bf16.mxu0 0
  %862 = vmatpush1.bf16.xpose.msra.mxu0 0
  %863 = vmatprep.subr.bf16.mxu0 0
  %864 = vmatpush1.bf16.xpose.msra.mxu0 0
  %865 = vmatprep.subr.bf16.mxu0 0
  %866 = vmatpush1.bf16.xpose.msra.mxu0 0
  %867 = vmatprep.subr.bf16.mxu0 0
  %868 = vmatpush1.bf16.xpose.msra.mxu0 0
  %869 = vmatprep.subr.bf16.mxu0 0
  %870 = vmatpush1.bf16.xpose.msra.mxu0 0
  %871 = vmatprep.subr.bf16.mxu0 0
  %872 = vmatpush1.bf16.xpose.msra.mxu0 0
  %873 = vmatprep.subr.bf16.mxu0 0
  %874 = vmatpush1.bf16.xpose.msra.mxu0 0
  %875 = vmatprep.subr.bf16.mxu0 0
  %876 = vmatpush1.bf16.xpose.msra.mxu0 0
  %877 = vmatprep.mubr.bf16.mxu0 0
  %878 = vmatmul.mubr.bf16.gmra.mrb[0].mxu0 %v840
  %v879 = vpop.f32.mrb[0].mxu0
  %v880 = vadd.f32 0.0, %v879
  %v881 = vpop.f32.mrb[0].mxu0
  %v882 = vpop.f32.mrb[0].mxu0
  %v883 = vpop.f32.mrb[0].mxu0
  %884 = vdwg.mxu0
  %v885 = vmul.f32 %v880, 0.35355338
  %v886 = vadd.f32 %v885, %v836
  %v887 = vsel %vm186, %v886, -inf
  %888 = vmax.xlane.f32.xlu0 %v887
  %v889 = vpop.xlane.xlu0 %888
  %v890 = vsub.f32 %v886, %v889
  %v891 = vmul.f32 %v890, 1.442695
  %v892 = vpow.pop %v891
  %v893 = vsel %vm186, %v892, 0.0
  %894 = vadd.xlane.f32.xlu0 %v893
  %v895 = vpop.xlane.xlu0 %894
  %v896 = vrcp.pop %v895
  %v897 = vmul.f32 %v892, %v896
  %v898 = vpack.c.bf16 %v897, %v897
  %900 = vrot.lane.b32.xlu0 %v838, 96
  %v901 = vpop.permute.xlu0 %900
  %v903 = vsel %vm186, %v898, 0
  %v906 = vsel %vm253, %v901, 0
  %908 = vmatprep.subr.bf16.mxu0 0
  %909 = vmatpush1.bf16.msra.mxu0 %v906
  %910 = vmatprep.subr.bf16.mxu0 0
  %911 = vmatpush1.bf16.msra.mxu0 0
  %912 = vmatprep.subr.bf16.mxu0 0
  %913 = vmatpush1.bf16.msra.mxu0 0
  %914 = vmatprep.subr.bf16.mxu0 0
  %915 = vmatpush1.bf16.msra.mxu0 0
  %916 = vmatprep.subr.bf16.mxu0 0
  %917 = vmatpush1.bf16.msra.mxu0 0
  %918 = vmatprep.subr.bf16.mxu0 0
  %919 = vmatpush1.bf16.msra.mxu0 0
  %920 = vmatprep.subr.bf16.mxu0 0
  %921 = vmatpush1.bf16.msra.mxu0 0
  %922 = vmatprep.subr.bf16.mxu0 0
  %923 = vmatpush1.bf16.msra.mxu0 0
  %924 = vmatprep.subr.bf16.mxu0 0
  %925 = vmatpush1.bf16.msra.mxu0 0
  %926 = vmatprep.subr.bf16.mxu0 0
  %927 = vmatpush1.bf16.msra.mxu0 0
  %928 = vmatprep.subr.bf16.mxu0 0
  %929 = vmatpush1.bf16.msra.mxu0 0
  %930 = vmatprep.subr.bf16.mxu0 0
  %931 = vmatpush1.bf16.msra.mxu0 0
  %932 = vmatprep.subr.bf16.mxu0 0
  %933 = vmatpush1.bf16.msra.mxu0 0
  %934 = vmatprep.subr.bf16.mxu0 0
  %935 = vmatpush1.bf16.msra.mxu0 0
  %936 = vmatprep.subr.bf16.mxu0 0
  %937 = vmatpush1.bf16.msra.mxu0 0
  %938 = vmatprep.subr.bf16.mxu0 0
  %939 = vmatpush1.bf16.msra.mxu0 0
  %940 = vmatprep.mubr.bf16.mxu0 0
  %941 = vmatmul.mubr.bf16.gmra.mrb[0].mxu0 %v903
  %v942 = vpop.f32.mrb[0].mxu0
  %v943 = vadd.f32 0.0, %v942
  %v944 = vpop.f32.mrb[0].mxu0
  %v945 = vpop.f32.mrb[0].mxu0
  %v946 = vpop.f32.mrb[0].mxu0
  %947 = vdwg.mxu0
  %949 = vrot.lane.b32.xlu0 %v837, 120
  %v950 = vpop.permute.xlu0 %949
  %951 = vrot.lane.b32.xlu0 %v838, 120
  %v952 = vpop.permute.xlu0 %951
  %v954 = vsel %vm186, %v950, 0
  %v957 = vsel %vm186, %v952, 0
  %959 = vmatprep.subr.bf16.mxu0 0
  %960 = vmatpush1.bf16.xpose.msra.mxu0 %v957
  %961 = vmatprep.subr.bf16.mxu0 0
  %962 = vmatpush1.bf16.xpose.msra.mxu0 0
  %963 = vmatprep.subr.bf16.mxu0 0
  %964 = vmatpush1.bf16.xpose.msra.mxu0 0
  %965 = vmatprep.subr.bf16.mxu0 0
  %966 = vmatpush1.bf16.xpose.msra.mxu0 0
  %967 = vmatprep.subr.bf16.mxu0 0
  %968 = vmatpush1.bf16.xpose.msra.mxu0 0
  %969 = vmatprep.subr.bf16.mxu0 0
  %970 = vmatpush1.bf16.xpose.msra.mxu0 0
  %971 = vmatprep.subr.bf16.mxu0 0
  %972 = vmatpush1.bf16.xpose.msra.mxu0 0
  %973 = vmatprep.subr.bf16.mxu0 0
  %974 = vmatpush1.bf16.xpose.msra.mxu0 0
  %975 = vmatprep.subr.bf16.mxu0 0
  %976 = vmatpush1.bf16.xpose.msra.mxu0 0
  %977 = vmatprep.subr.bf16.mxu0 0
  %978 = vmatpush1.bf16.xpose.msra.mxu0 0
  %979 = vmatprep.subr.bf16.mxu0 0
  %980 = vmatpush1.bf16.xpose.msra.mxu0 0
  %981 = vmatprep.subr.bf16.mxu0 0
  %982 = vmatpush1.bf16.xpose.msra.mxu0 0
  %983 = vmatprep.subr.bf16.mxu0 0
  %984 = vmatpush1.bf16.xpose.msra.mxu0 0
  %985 = vmatprep.subr.bf16.mxu0 0
  %986 = vmatpush1.bf16.xpose.msra.mxu0 0
  %987 = vmatprep.subr.bf16.mxu0 0
  %988 = vmatpush1.bf16.xpose.msra.mxu0 0
  %989 = vmatprep.subr.bf16.mxu0 0
  %990 = vmatpush1.bf16.xpose.msra.mxu0 0
  %991 = vmatprep.mubr.bf16.mxu0 0
  %992 = vmatmul.mubr.bf16.gmra.mrb[0].mxu0 %v954
  %v993 = vpop.f32.mrb[0].mxu0
  %v994 = vadd.f32 0.0, %v993
  %v995 = vpop.f32.mrb[0].mxu0
  %v996 = vpop.f32.mrb[0].mxu0
  %v997 = vpop.f32.mrb[0].mxu0
  %998 = vdwg.mxu0
  %v999 = vmul.f32 %v994, 0.35355338
  %v1000 = vadd.f32 %v999, %v836
  %v1001 = vsel %vm186, %v1000, -inf
  %1002 = vmax.xlane.f32.xlu0 %v1001
  %v1003 = vpop.xlane.xlu0 %1002
  %v1004 = vsub.f32 %v1000, %v1003
  %v1005 = vmul.f32 %v1004, 1.442695
  %v1006 = vpow.pop %v1005
  %v1007 = vsel %vm186, %v1006, 0.0
  %1008 = vadd.xlane.f32.xlu0 %v1007
  %v1009 = vpop.xlane.xlu0 %1008
  %v1010 = vrcp.pop %v1009
  %v1011 = vmul.f32 %v1006, %v1010
  %v1012 = vpack.c.bf16 %v1011, %v1011
  %1013 = vrot.lane.b32.xlu0 %v838, 88
  %v1014 = vpop.permute.xlu0 %1013
  %v1016 = vsel %vm186, %v1012, 0
  %v1019 = vsel %vm253, %v1014, 0
  %1021 = vmatprep.subr.bf16.mxu0 0
  %1022 = vmatpush1.bf16.msra.mxu0 %v1019
  %1023 = vmatprep.subr.bf16.mxu0 0
  %1024 = vmatpush1.bf16.msra.mxu0 0
  %1025 = vmatprep.subr.bf16.mxu0 0
  %1026 = vmatpush1.bf16.msra.mxu0 0
  %1027 = vmatprep.subr.bf16.mxu0 0
  %1028 = vmatpush1.bf16.msra.mxu0 0
  %1029 = vmatprep.subr.bf16.mxu0 0
  %1030 = vmatpush1.bf16.msra.mxu0 0
  %1031 = vmatprep.subr.bf16.mxu0 0
  %1032 = vmatpush1.bf16.msra.mxu0 0
  %1033 = vmatprep.subr.bf16.mxu0 0
  %1034 = vmatpush1.bf16.msra.mxu0 0
  %1035 = vmatprep.subr.bf16.mxu0 0
  %1036 = vmatpush1.bf16.msra.mxu0 0
  %1037 = vmatprep.subr.bf16.mxu0 0
  %1038 = vmatpush1.bf16.msra.mxu0 0
  %1039 = vmatprep.subr.bf16.mxu0 0
  %1040 = vmatpush1.bf16.msra.mxu0 0
  %1041 = vmatprep.subr.bf16.mxu0 0
  %1042 = vmatpush1.bf16.msra.mxu0 0
  %1043 = vmatprep.subr.bf16.mxu0 0
  %1044 = vmatpush1.bf16.msra.mxu0 0
  %1045 = vmatprep.subr.bf16.mxu0 0
  %1046 = vmatpush1.bf16.msra.mxu0 0
  %1047 = vmatprep.subr.bf16.mxu0 0
  %1048 = vmatpush1.bf16.msra.mxu0 0
  %1049 = vmatprep.subr.bf16.mxu0 0
  %1050 = vmatpush1.bf16.msra.mxu0 0
  %1051 = vmatprep.subr.bf16.mxu0 0
  %1052 = vmatpush1.bf16.msra.mxu0 0
  %1053 = vmatprep.mubr.bf16.mxu0 0
  %1054 = vmatmul.mubr.bf16.gmra.mrb[0].mxu0 %v1016
  %v1055 = vpop.f32.mrb[0].mxu0
  %v1056 = vadd.f32 0.0, %v1055
  %v1057 = vpop.f32.mrb[0].mxu0
  %v1058 = vpop.f32.mrb[0].mxu0
  %v1059 = vpop.f32.mrb[0].mxu0
  %1060 = vdwg.mxu0
  %1061 = vrot.lane.b32.xlu0 %v837, 112
  %v1062 = vpop.permute.xlu0 %1061
  %1063 = vrot.lane.b32.xlu0 %v838, 112
  %v1064 = vpop.permute.xlu0 %1063
  %v1066 = vsel %vm186, %v1062, 0
  %v1069 = vsel %vm186, %v1064, 0
  %1071 = vmatprep.subr.bf16.mxu0 0
  %1072 = vmatpush1.bf16.xpose.msra.mxu0 %v1069
  %1073 = vmatprep.subr.bf16.mxu0 0
  %1074 = vmatpush1.bf16.xpose.msra.mxu0 0
  %1075 = vmatprep.subr.bf16.mxu0 0
  %1076 = vmatpush1.bf16.xpose.msra.mxu0 0
  %1077 = vmatprep.subr.bf16.mxu0 0
  %1078 = vmatpush1.bf16.xpose.msra.mxu0 0
  %1079 = vmatprep.subr.bf16.mxu0 0
  %1080 = vmatpush1.bf16.xpose.msra.mxu0 0
  %1081 = vmatprep.subr.bf16.mxu0 0
  %1082 = vmatpush1.bf16.xpose.msra.mxu0 0
  %1083 = vmatprep.subr.bf16.mxu0 0
  %1084 = vmatpush1.bf16.xpose.msra.mxu0 0
  %1085 = vmatprep.subr.bf16.mxu0 0
  %1086 = vmatpush1.bf16.xpose.msra.mxu0 0
  %1087 = vmatprep.subr.bf16.mxu0 0
  %1088 = vmatpush1.bf16.xpose.msra.mxu0 0
  %1089 = vmatprep.subr.bf16.mxu0 0
  %1090 = vmatpush1.bf16.xpose.msra.mxu0 0
  %1091 = vmatprep.subr.bf16.mxu0 0
  %1092 = vmatpush1.bf16.xpose.msra.mxu0 0
  %1093 = vmatprep.subr.bf16.mxu0 0
  %1094 = vmatpush1.bf16.xpose.msra.mxu0 0
  %1095 = vmatprep.subr.bf16.mxu0 0
  %1096 = vmatpush1.bf16.xpose.msra.mxu0 0
  %1097 = vmatprep.subr.bf16.mxu0 0
  %1098 = vmatpush1.bf16.xpose.msra.mxu0 0
  %1099 = vmatprep.subr.bf16.mxu0 0
  %1100 = vmatpush1.bf16.xpose.msra.mxu0 0
  %1101 = vmatprep.subr.bf16.mxu0 0
  %1102 = vmatpush1.bf16.xpose.msra.mxu0 0
  %1103 = vmatprep.mubr.bf16.mxu0 0
  %1104 = vmatmul.mubr.bf16.gmra.mrb[0].mxu0 %v1066
  %v1105 = vpop.f32.mrb[0].mxu0
  %v1106 = vadd.f32 0.0, %v1105
  %v1107 = vpop.f32.mrb[0].mxu0
  %v1108 = vpop.f32.mrb[0].mxu0
  %v1109 = vpop.f32.mrb[0].mxu0
  %1110 = vdwg.mxu0
  %v1111 = vmul.f32 %v1106, 0.35355338
  %v1112 = vadd.f32 %v1111, %v836
  %v1113 = vsel %vm186, %v1112, -inf
  %1114 = vmax.xlane.f32.xlu0 %v1113
  %v1115 = vpop.xlane.xlu0 %1114
  %v1116 = vsub.f32 %v1112, %v1115
  %v1117 = vmul.f32 %v1116, 1.442695
  %v1118 = vpow.pop %v1117
  %v1119 = vsel %vm186, %v1118, 0.0
  %1120 = vadd.xlane.f32.xlu0 %v1119
  %v1121 = vpop.xlane.xlu0 %1120
  %v1122 = vrcp.pop %v1121
  %v1123 = vmul.f32 %v1118, %v1122
  %v1124 = vpack.c.bf16 %v1123, %v1123
  %1125 = vrot.lane.b32.xlu0 %v838, 80
  %v1126 = vpop.permute.xlu0 %1125
  %v1128 = vsel %vm186, %v1124, 0
  %v1131 = vsel %vm253, %v1126, 0
  %1133 = vmatprep.subr.bf16.mxu0 0
  %1134 = vmatpush1.bf16.msra.mxu0 %v1131
  %1135 = vmatprep.subr.bf16.mxu0 0
  %1136 = vmatpush1.bf16.msra.mxu0 0
  %1137 = vmatprep.subr.bf16.mxu0 0
  %1138 = vmatpush1.bf16.msra.mxu0 0
  %1139 = vmatprep.subr.bf16.mxu0 0
  %1140 = vmatpush1.bf16.msra.mxu0 0
  %1141 = vmatprep.subr.bf16.mxu0 0
  %1142 = vmatpush1.bf16.msra.mxu0 0
  %1143 = vmatprep.subr.bf16.mxu0 0
  %1144 = vmatpush1.bf16.msra.mxu0 0
  %1145 = vmatprep.subr.bf16.mxu0 0
  %1146 = vmatpush1.bf16.msra.mxu0 0
  %1147 = vmatprep.subr.bf16.mxu0 0
  %1148 = vmatpush1.bf16.msra.mxu0 0
  %1149 = vmatprep.subr.bf16.mxu0 0
  %1150 = vmatpush1.bf16.msra.mxu0 0
  %1151 = vmatprep.subr.bf16.mxu0 0
  %1152 = vmatpush1.bf16.msra.mxu0 0
  %1153 = vmatprep.subr.bf16.mxu0 0
  %1154 = vmatpush1.bf16.msra.mxu0 0
  %1155 = vmatprep.subr.bf16.mxu0 0
  %1156 = vmatpush1.bf16.msra.mxu0 0
  %1157 = vmatprep.subr.bf16.mxu0 0
  %1158 = vmatpush1.bf16.msra.mxu0 0
  %1159 = vmatprep.subr.bf16.mxu0 0
  %1160 = vmatpush1.bf16.msra.mxu0 0
  %1161 = vmatprep.subr.bf16.mxu0 0
  %1162 = vmatpush1.bf16.msra.mxu0 0
  %1163 = vmatprep.subr.bf16.mxu0 0
  %1164 = vmatpush1.bf16.msra.mxu0 0
  %1165 = vmatprep.mubr.bf16.mxu0 0
  %1166 = vmatmul.mubr.bf16.gmra.mrb[0].mxu0 %v1128
  %v1167 = vpop.f32.mrb[0].mxu0
  %v1168 = vadd.f32 0.0, %v1167
  %v1169 = vpop.f32.mrb[0].mxu0
  %v1170 = vpop.f32.mrb[0].mxu0
  %v1171 = vpop.f32.mrb[0].mxu0
  %1172 = vdwg.mxu0
  %1173 = vrot.lane.b32.xlu0 %v837, 104
  %v1174 = vpop.permute.xlu0 %1173
  %1175 = vrot.lane.b32.xlu0 %v838, 104
  %v1176 = vpop.permute.xlu0 %1175
  %v1178 = vsel %vm186, %v1174, 0
  %v1181 = vsel %vm186, %v1176, 0
  %1183 = vmatprep.subr.bf16.mxu0 0
  %1184 = vmatpush1.bf16.xpose.msra.mxu0 %v1181
  %1185 = vmatprep.subr.bf16.mxu0 0
  %1186 = vmatpush1.bf16.xpose.msra.mxu0 0
  %1187 = vmatprep.subr.bf16.mxu0 0
  %1188 = vmatpush1.bf16.xpose.msra.mxu0 0
  %1189 = vmatprep.subr.bf16.mxu0 0
  %1190 = vmatpush1.bf16.xpose.msra.mxu0 0
  %1191 = vmatprep.subr.bf16.mxu0 0
  %1192 = vmatpush1.bf16.xpose.msra.mxu0 0
  %1193 = vmatprep.subr.bf16.mxu0 0
  %1194 = vmatpush1.bf16.xpose.msra.mxu0 0
  %1195 = vmatprep.subr.bf16.mxu0 0
  %1196 = vmatpush1.bf16.xpose.msra.mxu0 0
  %1197 = vmatprep.subr.bf16.mxu0 0
  %1198 = vmatpush1.bf16.xpose.msra.mxu0 0
  %1199 = vmatprep.subr.bf16.mxu0 0
  %1200 = vmatpush1.bf16.xpose.msra.mxu0 0
  %1201 = vmatprep.subr.bf16.mxu0 0
  %1202 = vmatpush1.bf16.xpose.msra.mxu0 0
  %1203 = vmatprep.subr.bf16.mxu0 0
  %1204 = vmatpush1.bf16.xpose.msra.mxu0 0
  %1205 = vmatprep.subr.bf16.mxu0 0
  %1206 = vmatpush1.bf16.xpose.msra.mxu0 0
  %1207 = vmatprep.subr.bf16.mxu0 0
  %1208 = vmatpush1.bf16.xpose.msra.mxu0 0
  %1209 = vmatprep.subr.bf16.mxu0 0
  %1210 = vmatpush1.bf16.xpose.msra.mxu0 0
  %1211 = vmatprep.subr.bf16.mxu0 0
  %1212 = vmatpush1.bf16.xpose.msra.mxu0 0
  %1213 = vmatprep.subr.bf16.mxu0 0
  %1214 = vmatpush1.bf16.xpose.msra.mxu0 0
  %1215 = vmatprep.mubr.bf16.mxu0 0
  %1216 = vmatmul.mubr.bf16.gmra.mrb[0].mxu0 %v1178
  %v1217 = vpop.f32.mrb[0].mxu0
  %v1218 = vadd.f32 0.0, %v1217
  %v1219 = vpop.f32.mrb[0].mxu0
  %v1220 = vpop.f32.mrb[0].mxu0
  %v1221 = vpop.f32.mrb[0].mxu0
  %1222 = vdwg.mxu0
  %v1223 = vmul.f32 %v1218, 0.35355338
  %v1224 = vadd.f32 %v1223, %v836
  %v1225 = vsel %vm186, %v1224, -inf
  %1226 = vmax.xlane.f32.xlu0 %v1225
  %v1227 = vpop.xlane.xlu0 %1226
  %v1228 = vsub.f32 %v1224, %v1227
  %v1229 = vmul.f32 %v1228, 1.442695
  %v1230 = vpow.pop %v1229
  %v1231 = vsel %vm186, %v1230, 0.0
  %1232 = vadd.xlane.f32.xlu0 %v1231
  %v1233 = vpop.xlane.xlu0 %1232
  %v1234 = vrcp.pop %v1233
  %v1235 = vmul.f32 %v1230, %v1234
  %v1236 = vpack.c.bf16 %v1235, %v1235
  %1237 = vrot.lane.b32.xlu0 %v838, 72
  %v1238 = vpop.permute.xlu0 %1237
  %v1240 = vsel %vm186, %v1236, 0
  %v1243 = vsel %vm253, %v1238, 0
  %1245 = vmatprep.subr.bf16.mxu0 0
  %1246 = vmatpush1.bf16.msra.mxu0 %v1243
  %1247 = vmatprep.subr.bf16.mxu0 0
  %1248 = vmatpush1.bf16.msra.mxu0 0
  %1249 = vmatprep.subr.bf16.mxu0 0
  %1250 = vmatpush1.bf16.msra.mxu0 0
  %1251 = vmatprep.subr.bf16.mxu0 0
  %1252 = vmatpush1.bf16.msra.mxu0 0
  %1253 = vmatprep.subr.bf16.mxu0 0
  %1254 = vmatpush1.bf16.msra.mxu0 0
  %1255 = vmatprep.subr.bf16.mxu0 0
  %1256 = vmatpush1.bf16.msra.mxu0 0
  %1257 = vmatprep.subr.bf16.mxu0 0
  %1258 = vmatpush1.bf16.msra.mxu0 0
  %1259 = vmatprep.subr.bf16.mxu0 0
  %1260 = vmatpush1.bf16.msra.mxu0 0
  %1261 = vmatprep.subr.bf16.mxu0 0
  %1262 = vmatpush1.bf16.msra.mxu0 0
  %1263 = vmatprep.subr.bf16.mxu0 0
  %1264 = vmatpush1.bf16.msra.mxu0 0
  %1265 = vmatprep.subr.bf16.mxu0 0
  %1266 = vmatpush1.bf16.msra.mxu0 0
  %1267 = vmatprep.subr.bf16.mxu0 0
  %1268 = vmatpush1.bf16.msra.mxu0 0
  %1269 = vmatprep.subr.bf16.mxu0 0
  %1270 = vmatpush1.bf16.msra.mxu0 0
  %1271 = vmatprep.subr.bf16.mxu0 0
  %1272 = vmatpush1.bf16.msra.mxu0 0
  %1273 = vmatprep.subr.bf16.mxu0 0
  %1274 = vmatpush1.bf16.msra.mxu0 0
  %1275 = vmatprep.subr.bf16.mxu0 0
  %1276 = vmatpush1.bf16.msra.mxu0 0
  %1277 = vmatprep.mubr.bf16.mxu0 0
  %1278 = vmatmul.mubr.bf16.gmra.mrb[0].mxu0 %v1240
  %v1279 = vpop.f32.mrb[0].mxu0
  %v1280 = vadd.f32 0.0, %v1279
  %v1281 = vpop.f32.mrb[0].mxu0
  %v1282 = vpop.f32.mrb[0].mxu0
  %v1283 = vpop.f32.mrb[0].mxu0
  %1284 = vdwg.mxu0
  %1286 = vrot.lane.b32.xlu0 %v1056, 8
  %v1287 = vpop.permute.xlu0 %1286
  %1290 = vrot.lane.b32.xlu0 %v1168, 16
  %v1291 = vpop.permute.xlu0 %1290
  %1294 = vrot.lane.b32.xlu0 %v1280, 24
  %v1295 = vpop.permute.xlu0 %1294
  %v1297 = vsel %vm186, %v943, %v1287
  %v1298 = vsel %vm647, %v1297, %v1291
  %v1299 = vsel %vm649, %v1298, %v1295
  %v1300 = vpack.c.bf16 %v1299, %v1299
  %v1302 = vsel %vm77, %v1300, 0
  %1304 = vmatprep.subr.bf16.mxu0 0
  %1305 = vmatpush1.bf16.msra.mxu0 %v666
  %1306 = vmatprep.subr.bf16.mxu0 0
  %1307 = vmatpush1.bf16.msra.mxu0 %v667
  %1308 = vmatprep.subr.bf16.mxu0 0
  %1309 = vmatpush1.bf16.msra.mxu0 0
  %1310 = vmatprep.subr.bf16.mxu0 0
  %1311 = vmatpush1.bf16.msra.mxu0 0
  %1312 = vmatprep.subr.bf16.mxu0 0
  %1313 = vmatpush1.bf16.msra.mxu0 0
  %1314 = vmatprep.subr.bf16.mxu0 0
  %1315 = vmatpush1.bf16.msra.mxu0 0
  %1316 = vmatprep.subr.bf16.mxu0 0
  %1317 = vmatpush1.bf16.msra.mxu0 0
  %1318 = vmatprep.subr.bf16.mxu0 0
  %1319 = vmatpush1.bf16.msra.mxu0 0
  %1320 = vmatprep.subr.bf16.mxu0 0
  %1321 = vmatpush1.bf16.msra.mxu0 0
  %1322 = vmatprep.subr.bf16.mxu0 0
  %1323 = vmatpush1.bf16.msra.mxu0 0
  %1324 = vmatprep.subr.bf16.mxu0 0
  %1325 = vmatpush1.bf16.msra.mxu0 0
  %1326 = vmatprep.subr.bf16.mxu0 0
  %1327 = vmatpush1.bf16.msra.mxu0 0
  %1328 = vmatprep.subr.bf16.mxu0 0
  %1329 = vmatpush1.bf16.msra.mxu0 0
  %1330 = vmatprep.subr.bf16.mxu0 0
  %1331 = vmatpush1.bf16.msra.mxu0 0
  %1332 = vmatprep.subr.bf16.mxu0 0
  %1333 = vmatpush1.bf16.msra.mxu0 0
  %1334 = vmatprep.subr.bf16.mxu0 0
  %1335 = vmatpush1.bf16.msra.mxu0 0
  %1336 = vmatprep.mubr.bf16.mxu0 0
  %1337 = vmatmul.mubr.bf16.gmra.mrb[0].mxu0 %v1302
  %v1338 = vpop.f32.mrb[0].mxu0
  %v1339 = vadd.f32 %v656, %v1338
  %v1340 = vpop.f32.mrb[0].mxu0
  %v1341 = vpop.f32.mrb[0].mxu0
  %v1342 = vpop.f32.mrb[0].mxu0
  %1343 = vdwg.mxu0
  %v1344 = vadd.f32 %v744, %v1339
  %v1345 = vsel %vm77, %v1344, 0.0
  %1346 = vadd.xlane.f32.xlu0 %v1345
  %v1347 = vpop.xlane.xlu0 %1346
  %v1348 = vmul.f32 %v1347, %v717
  %v1349 = vsub.f32 %v1344, %v1348
  %v1350 = vmul.f32 %v1349, %v1349
  %v1351 = vsel %vm77, %v1350, 0.0
  %1352 = vadd.xlane.f32.xlu0 %v1351
  %v1353 = vpop.xlane.xlu0 %1352
  %v1354 = vmul.f32 %v1353, %v717
  %v1355 = vadd.f32 %v1354, 1e-05
  %v1356 = vrsqrt.pop %v1355
  %v1357 = vmul.f32 %v1349, %v1356
  %v1358 = vmul.f32 %v1357, %v732
  %v1359 = vadd.f32 %v1358, %v739
  %s1360 = scalar_lea.vmem %s11, 8
  %1361 = vst.msk [vmem:[%s1360] sm:$0xff] %vm77, %v1359
  // Predicated region
  $region46: #{forward.23} parent=0 // pred_check
    _
  $region47: #{forward.23} parent=0 // pred_check_branch
    %1363 = sbr.rel (0) target = $region49
  $region48: #{forward.23} parent=0 // pred_region
    _
  $region49: #{forward.23} parent=0 // pred_fallthru
    _
  // Predicated region
  $region50: #{forward.23} parent=0 // pred_check
    _
  $region51: #{forward.23} parent=0 // pred_check_branch
    %1365 = sbr.rel (0) target = $region53
  $region52: #{forward.23} parent=0 // pred_region
    _
  $region53: #{forward.23} parent=0 // pred_fallthru
    _

</llo_original>
